<compile_context>
chip_gen: v7x
topology: tpu7x:2x2x1
jax: 0.10.0
libtpu: 0.0.40
codegen_flags: <defaults>
</compile_context>

<pallas_src>
import functools

import jax
import jax.numpy as jnp
from jax import lax
from jax.experimental import pallas as pl
from jax.experimental.pallas import tpu as pltpu


_VMEM_LIMIT = 32 * 1024 * 1024  # Safe on v5e/v6e/v7x; tiles below use ~2 MiB.


# ----------------------------------------------------------------------------
# Trace-time tiling helpers
# ----------------------------------------------------------------------------
def _pick_rows_tile(mr, cap=512):
    """Row tile for the packed-row dim.

    Single full-extent block when small (no pointless grid steps on 1-TC
    chips); otherwise the largest divisor of `mr` that is <= cap and a
    multiple of 8 (keeps blocks (8,128)-aligned, gives v7x >= 2 'parallel'
    steps, and bounds per-step VMEM).  Falls back to a full-extent block if
    mr has no such divisor (still correct, just untiled).
    """
    if mr <= cap:
        return mr, 1
    start = cap - (cap % 8)
    for tm in range(start, 7, -8):
        if mr % tm == 0:
            return tm, mr // tm
    return mr, 1


def _pick_group_tile(ng, cap=8):
    """Mode-group tile: full extent when small, else a divisor <= cap."""
    if ng <= cap:
        return ng, 1
    for tg in range(cap, 0, -1):
        if ng % tg == 0:
            return tg, ng // tg
    return ng, 1


def _mode_group(modes1, modes2):
    nm = 2 * modes1 * modes2
    for g in (4, 2, 1):
        if nm % g == 0:
            return g
    return 1


# ----------------------------------------------------------------------------
# Pallas kernels
# ----------------------------------------------------------------------------
def _fused_mlp_kernel(x_ref, w1_ref, b1_ref, w2_ref, b2_ref, o_ref):
    """o = relu(x @ w1 + b1) @ w2 + b2 — intermediate stays in vregs/VMEM."""
    h = jnp.dot(x_ref[...], w1_ref[...], preferred_element_type=jnp.float32)
    h = jnp.maximum(h + b1_ref[...], 0.0)
    y = jnp.dot(h, w2_ref[...], preferred_element_type=jnp.float32)
    o_ref[...] = (y + b2_ref[...]).astype(o_ref.dtype)


def _conv_res_kernel(x_ref, w_ref, b_ref, r_ref, o_ref, *, apply_act):
    """o = act(x @ w + b + r): fused 1x1 conv + spectral residual (+ ReLU)."""
    y = jnp.dot(x_ref[...], w_ref[...], preferred_element_type=jnp.float32)
    y = y + b_ref[...] + r_ref[...]
    if apply_act:
        y = jnp.maximum(y, 0.0)
    o_ref[...] = y.astype(o_ref.dtype)


# Batched over mode groups: contract the packed channel dim, batch over dim 0.
_DN_GROUP = (((2,), (1,)), ((0,), (0,)))


def _specmix_kernel(x_ref, w_ref, or_ref, oi_ref):
    """Complex channel mixing over block-diagonal mode groups.

    x_ref: (tg, 2B, K) f32 — real rows stacked over imag rows.
    w_ref: (2, tg, K, N) f32 — [0]=real, [1]=imag block-diag group weights.
    Two batched matmuls give all four real/imag cross terms:
      a = [xr;xi] @ wr = [rr; ir],  c = [xr;xi] @ wi = [ri; ii]
      out_r = rr - ii,  out_i = ri + ir.
    """
    xs = x_ref[...]
    b = or_ref.shape[1]
    a = lax.dot_general(xs, w_ref[0], _DN_GROUP,
                        preferred_element_type=jnp.float32)
    c = lax.dot_general(xs, w_ref[1], _DN_GROUP,
                        preferred_element_type=jnp.float32)
    or_ref[...] = (a[:, :b, :] - c[:, b:, :]).astype(or_ref.dtype)
    oi_ref[...] = (c[:, :b, :] + a[:, b:, :]).astype(oi_ref.dtype)


# ----------------------------------------------------------------------------
# Wrappers around pallas_call
# ----------------------------------------------------------------------------
def fused_mlp(x2d, pp):
    """relu(x2d @ w1 + b1) @ w2 + b2 in a single pallas_call.  x2d: (M, Cin)."""
    m, cin = x2d.shape
    cout = pp["w2"].shape[1]
    if m % 4 == 0:
        # Lane packing: 4 rows folded into the lane dim; weights are the
        # pre-built block-diag kron(eye(4), w) versions from init_params.
        xk = x2d.reshape(m // 4, 4 * cin)               # contiguous, free
        w1, b1, w2, b2 = pp["w1p"], pp["b1p"], pp["w2p"], pp["b2p"]
    else:                                               # lane-sparse fallback
        xk = x2d
        w1, b1 = pp["w1"], pp["b1"].reshape(1, -1)
        w2, b2 = pp["w2"], pp["b2"].reshape(1, -1)

    mr, kin = xk.shape
    hdim, nout = w1.shape[1], w2.shape[1]
    tm, gr = _pick_rows_tile(mr)

    out = pl.pallas_call(
        _fused_mlp_kernel,
        out_shape=jax.ShapeDtypeStruct((mr, nout), jnp.float32),
        grid=(gr,),
        in_specs=[
            pl.BlockSpec((tm, kin), lambda i: (i, 0)),
            pl.BlockSpec((kin, hdim), lambda i: (0, 0)),
            pl.BlockSpec((1, hdim), lambda i: (0, 0)),
            pl.BlockSpec((hdim, nout), lambda i: (0, 0)),
            pl.BlockSpec((1, nout), lambda i: (0, 0)),
        ],
        out_specs=pl.BlockSpec((tm, nout), lambda i: (i, 0)),
        compiler_params=pltpu.CompilerParams(
            dimension_semantics=("parallel",),
            vmem_limit_bytes=_VMEM_LIMIT),
    )(xk, w1, b1, w2, b2)
    return out.reshape(m, cout)


def conv_plus_residual(x2d, r2d, lp, *, apply_act):
    """act(x2d @ conv_w + conv_b + r2d) in one pallas_call.  x2d, r2d: (M, C)."""
    m, c = x2d.shape
    if m % 4 == 0:
        xk = x2d.reshape(m // 4, 4 * c)
        rk = r2d.reshape(m // 4, 4 * c)
        w, b = lp["conv_wp"], lp["conv_bp"]
    else:
        xk, rk = x2d, r2d
        w, b = lp["conv_w"], lp["conv_b"].reshape(1, -1)

    mr, kin = xk.shape
    nout = w.shape[1]
    tm, gr = _pick_rows_tile(mr)
    kernel = functools.partial(_conv_res_kernel, apply_act=apply_act)

    out = pl.pallas_call(
        kernel,
        out_shape=jax.ShapeDtypeStruct((mr, nout), jnp.float32),
        grid=(gr,),
        in_specs=[
            pl.BlockSpec((tm, kin), lambda i: (i, 0)),
            pl.BlockSpec((kin, nout), lambda i: (0, 0)),
            pl.BlockSpec((1, nout), lambda i: (0, 0)),
            pl.BlockSpec((tm, nout), lambda i: (i, 0)),
        ],
        out_specs=pl.BlockSpec((tm, nout), lambda i: (i, 0)),
        compiler_params=pltpu.CompilerParams(
            dimension_semantics=("parallel",),
            vmem_limit_bytes=_VMEM_LIMIT),
    )(xk, w, b, rk)
    return out.reshape(m, c)


def pallas_spec_mix(xs, w_spec):
    """Grouped complex mode mixing.

    xs: (ng, 2B, K) f32 with [real; imag] stacked along the row axis.
    w_spec: (2, ng, K, N) f32 block-diagonal group weights (real, imag).
    Returns (out_r, out_i), each (ng, B, N) f32.
    """
    ng, twob, k = xs.shape
    n = w_spec.shape[3]
    b = twob // 2
    tg, gg = _pick_group_tile(ng)

    return pl.pallas_call(
        _specmix_kernel,
        out_shape=(jax.ShapeDtypeStruct((ng, b, n), jnp.float32),
                   jax.ShapeDtypeStruct((ng, b, n), jnp.float32)),
        grid=(gg,),
        in_specs=[
            pl.BlockSpec((tg, twob, k), lambda i: (i, 0, 0)),
            pl.BlockSpec((2, tg, k, n), lambda i: (0, i, 0, 0)),
        ],
        out_specs=(pl.BlockSpec((tg, b, n), lambda i: (i, 0, 0)),
                   pl.BlockSpec((tg, b, n), lambda i: (i, 0, 0))),
        compiler_params=pltpu.CompilerParams(
            dimension_semantics=("parallel",),
            vmem_limit_bytes=_VMEM_LIMIT),
    )(xs, w_spec)


def spectral_conv2d(x, w_spec, modes1, modes2):
    """SpectralConv2d.forward on NHWC input x: (B, H, W, Cin)."""
    bsz, h, w_sp, cin = x.shape
    group = w_spec.shape[2] // cin
    cout = w_spec.shape[3] // group
    wf = w_sp // 2 + 1
    nm = 2 * modes1 * modes2
    ng = nm // group
    # The two frequency bands must not overlap (would double-write out_ft).
    assert h >= 2 * modes1 and wf >= modes2, (h, wf, modes1, modes2)

    x_ft = jnp.fft.rfft2(x, axes=(1, 2))
    lo = x_ft[:, :modes1, :modes2, :]
    hi = x_ft[:, h - modes1:, :modes2, :]
    xm = jnp.concatenate([lo, hi], axis=1)          # (B, 2m1, m2, Cin) complex

    # -> (ng, B, group*Cin): mode-major, `group` modes packed along lanes.
    # One combined complex transpose path, then real/imag stacked on rows.
    xm = xm.reshape(bsz, nm, cin).transpose(1, 0, 2)
    xm = (xm.reshape(ng, group, bsz, cin)
            .transpose(0, 2, 1, 3)
            .reshape(ng, bsz, group * cin))
    xs = jnp.concatenate([jnp.real(xm), jnp.imag(xm)], axis=1).astype(jnp.float32)

    out_r, out_i = pallas_spec_mix(xs, w_spec)
    oc = (out_r + 1j * out_i).astype(jnp.complex64)      # (ng, B, group*Cout)
    oc = (oc.reshape(ng, bsz, group, cout)
            .transpose(0, 2, 1, 3)
            .reshape(nm, bsz, cout)
            .transpose(1, 0, 2)
            .reshape(bsz, 2 * modes1, modes2, cout))

    # out_ft assembled with a single concatenate + zero-pad (no scatter sets).
    mid = jnp.zeros((bsz, h - 2 * modes1, modes2, cout), jnp.complex64)
    band = jnp.concatenate([oc[:, :modes1], mid, oc[:, modes1:]], axis=1)
    out_ft = jnp.pad(band, ((0, 0), (0, 0), (0, wf - modes2), (0, 0)))
    return jnp.fft.irfft2(out_ft, s=(h, w_sp), axes=(1, 2)).astype(jnp.float32)


# ----------------------------------------------------------------------------
# Parameters (all layout work hoisted here) and FNO2d forward
# ----------------------------------------------------------------------------
def init_params(key, cfg, in_channels, out_channels):
    width, proj = cfg["width"], cfg["proj_scale"]
    m1, m2 = cfg["modes1"], cfg["modes2"]
    nl = cfg["n_layers"]
    group = _mode_group(m1, m2)
    pack = 4
    eye_p = jnp.eye(pack, dtype=jnp.float32)
    eye_g = jnp.eye(group, dtype=jnp.float32)

    def linear(kw, kb, cin, cout):
        w = 0.1 * jax.random.normal(kw, (cin, cout), jnp.float32)
        b = 0.1 * jax.random.normal(kb, (cout,), jnp.float32)
        return w, b

    def mlp(kw1, kb1, kw2, kb2, cin, hidden, cout):
        w1, b1 = linear(kw1, kb1, cin, hidden)
        w2, b2 = linear(kw2, kb2, hidden, cout)
        return {
            "w1": w1, "b1": b1, "w2": w2, "b2": b2,
            # Pre-packed block-diagonal weights / tiled biases (4 rows per
            # lane block) — hoisted out of the forward pass.
            "w1p": jnp.kron(eye_p, w1),
            "b1p": jnp.tile(b1, pack).reshape(1, -1),
            "w2p": jnp.kron(eye_p, w2),
            "b2p": jnp.tile(b2, pack).reshape(1, -1),
        }

    ks = jax.random.split(key, 8 + nl)
    params = {
        "p": mlp(ks[0], ks[1], ks[2], ks[3], in_channels, proj, width),
        "q": mlp(ks[4], ks[5], ks[6], ks[7], width, proj, out_channels),
        "layers": [],
    }

    scale = 1.0 / (width * width)

    def spec_band(kk):
        kr, ki = jax.random.split(kk)
        wr = scale * jax.random.uniform(kr, (width, width, m1, m2), jnp.float32)
        wi = scale * jax.random.uniform(ki, (width, width, m1, m2), jnp.float32)
        # (I, O, m1, m2) -> (m1*m2, I, O)
        wr = wr.transpose(2, 3, 0, 1).reshape(m1 * m2, width, width)
        wi = wi.transpose(2, 3, 0, 1).reshape(m1 * m2, width, width)
        return wr, wi

    def block_diag_groups(w_nm):
        # (nm, I, O) -> (ng, group*I, group*O): block-diag over `group`
        # consecutive modes so one 128x128 matmul handles 4 modes at once.
        nm = w_nm.shape[0]
        ng = nm // group
        wg = w_nm.reshape(ng, group, width, width)
        bd = wg[:, :, None, :, :] * eye_g[None, :, :, None, None]
        return bd.transpose(0, 1, 3, 2, 4).reshape(ng, group * width,
                                                   group * width)

    for k in range(nl):
        k_spec, k_cw, k_cb = jax.random.split(ks[8 + k], 3)
        k_lo, k_hi = jax.random.split(k_spec)
        wr_lo, wi_lo = spec_band(k_lo)   # weights1: low-frequency band
        wr_hi, wi_hi = spec_band(k_hi)   # weights2: high-frequency band
        wr = jnp.concatenate([wr_lo, wr_hi], axis=0)
        wi = jnp.concatenate([wi_lo, wi_hi], axis=0)
        spec_w = jnp.stack([block_diag_groups(wr), block_diag_groups(wi)],
                           axis=0)      # (2, ng, group*I, group*O)

        conv_w = 0.1 * jax.random.normal(k_cw, (width, width), jnp.float32)
        conv_b = 0.1 * jax.random.normal(k_cb, (width,), jnp.float32)
        params["layers"].append({
            "conv_w": conv_w, "conv_b": conv_b,
            "conv_wp": jnp.kron(eye_p, conv_w),
            "conv_bp": jnp.tile(conv_b, pack).reshape(1, -1),
            "spec_w": spec_w,
        })
    return params


def fno2d_forward(x, params, cfg):
    """x: (B, Sx, Sy, in_channels) -> (B, Sx, Sy, out_channels)."""
    bsz, sx, sy, cin = x.shape
    width = cfg["width"]
    pad = cfg["padding"]
    nl = cfg["n_layers"]

    # p: Linear -> ReLU -> Linear, one fused kernel.
    h = fused_mlp(x.reshape(-1, cin), params["p"]).reshape(bsz, sx, sy, width)

    if pad > 0:
        h = jnp.pad(h, ((0, 0), (0, pad), (0, pad), (0, 0)))

    for k in range(nl):
        lp = params["layers"][k]
        x1 = spectral_conv2d(h, lp["spec_w"], cfg["modes1"], cfg["modes2"])
        bb, hh, ww, cc = h.shape
        # 1x1 conv (channel matmul) + spectral residual + activation, fused.
        y = conv_plus_residual(h.reshape(-1, cc), x1.reshape(-1, cc), lp,
                               apply_act=(k != nl - 1))
        h = y.reshape(bb, hh, ww, cc)

    if pad > 0:
        h = h[:, :-pad, :-pad, :]

    # q: Linear -> ReLU -> Linear(out_channels), one fused kernel.
    out_ch = params["q"]["w2"].shape[1]
    o = fused_mlp(h.reshape(-1, width), params["q"])
    return o.reshape(bsz, sx, sy, out_ch)


if __name__ == "__main__":
    cfg = dict(modes1=4, modes2=4, width=32, n_layers=2, proj_scale=32,
               padding=2, include_grid=True, activation="relu")
    in_channels, out_channels = 3, 1
    B, Sx, Sy = 2, 16, 16

    key = jax.random.PRNGKey(0)
    kx, kp = jax.random.split(key)
    x = jax.random.normal(kx, (B, Sx, Sy, in_channels), jnp.float32)
    params = init_params(kp, cfg, in_channels, out_channels)

    fwd = jax.jit(lambda xx: fno2d_forward(xx, params, cfg))
    out = fwd(x)
    jax.block_until_ready(out)
    assert out.shape == (B, Sx, Sy, out_channels), out.shape
    assert bool(jnp.all(jnp.isfinite(out)))
    print("KERNEL_OK")
</pallas_src>

<mosaic_0001>
module attributes {stable_mosaic.version = 11 : i64} {
  func.func @_fused_mlp_kernel(%arg0: i32, %arg1: memref<128x12xf32, #tpu.memory_space<vmem>>, %arg2: memref<12x128xf32, #tpu.memory_space<vmem>>, %arg3: memref<1x128xf32, #tpu.memory_space<vmem>>, %arg4: memref<128x128xf32, #tpu.memory_space<vmem>>, %arg5: memref<1x128xf32, #tpu.memory_space<vmem>>, %arg6: memref<128x128xf32, #tpu.memory_space<vmem>>) attributes {dimension_semantics = [#tpu.dimension_semantics<parallel>], iteration_bounds = array<i64: 1>, scalar_prefetch = 0 : i64, scratch_operands = 0 : i64, tpu.core_type = #tpu.core_type<tc>, window_params = [{transform_indices = @transform_0, window_bounds = array<i64: 128, 12>}, {pipeline_mode = #tpu.pipeline_mode<synchronous>, transform_indices = @transform_1, window_bounds = array<i64: 12, 128>}, {pipeline_mode = #tpu.pipeline_mode<synchronous>, transform_indices = @transform_2, window_bounds = array<i64: 1, 128>}, {pipeline_mode = #tpu.pipeline_mode<synchronous>, transform_indices = @transform_3, window_bounds = array<i64: 128, 128>}, {pipeline_mode = #tpu.pipeline_mode<synchronous>, transform_indices = @transform_4, window_bounds = array<i64: 1, 128>}, {transform_indices = @transform_5, window_bounds = array<i64: 128, 128>}]} {
    %c0 = arith.constant 0 : index
    %c0_0 = arith.constant 0 : index
    %0 = vector.load %arg1[%c0, %c0_0] : memref<128x12xf32, #tpu.memory_space<vmem>>, vector<128x12xf32>
    %c0_1 = arith.constant 0 : index
    %c0_2 = arith.constant 0 : index
    %1 = vector.load %arg2[%c0_1, %c0_2] : memref<12x128xf32, #tpu.memory_space<vmem>>, vector<12x128xf32>
    %cst = arith.constant dense<0.000000e+00> : vector<128x128xf32>
    %2 = tpu.matmul %0, %1, %cst {dimension_numbers = #tpu.dot_dimension_numbers<[1], [0], [0], [1], [0, 0, 1, 1], [], []>} : vector<128x12xf32>, vector<12x128xf32>, vector<128x128xf32> -> vector<128x128xf32>
    %c0_3 = arith.constant 0 : index
    %c0_4 = arith.constant 0 : index
    %3 = vector.load %arg3[%c0_3, %c0_4] : memref<1x128xf32, #tpu.memory_space<vmem>>, vector<1x128xf32>
    %4 = vector.broadcast %3 : vector<1x128xf32> to vector<128x128xf32>
    %5 = arith.addf %2, %4 : vector<128x128xf32>
    %cst_5 = arith.constant 0.000000e+00 : f32
    %6 = vector.broadcast %cst_5 : f32 to vector<128x128xf32>
    %7 = arith.maximumf %5, %6 : vector<128x128xf32>
    %c0_6 = arith.constant 0 : index
    %c0_7 = arith.constant 0 : index
    %8 = vector.load %arg4[%c0_6, %c0_7] : memref<128x128xf32, #tpu.memory_space<vmem>>, vector<128x128xf32>
    %cst_8 = arith.constant dense<0.000000e+00> : vector<128x128xf32>
    %9 = tpu.matmul %7, %8, %cst_8 {dimension_numbers = #tpu.dot_dimension_numbers<[1], [0], [0], [1], [0, 0, 1, 1], [], []>} : vector<128x128xf32>, vector<128x128xf32>, vector<128x128xf32> -> vector<128x128xf32>
    %c0_9 = arith.constant 0 : index
    %c0_10 = arith.constant 0 : index
    %10 = vector.load %arg5[%c0_9, %c0_10] : memref<1x128xf32, #tpu.memory_space<vmem>>, vector<1x128xf32>
    %11 = vector.broadcast %10 : vector<1x128xf32> to vector<128x128xf32>
    %12 = arith.addf %9, %11 : vector<128x128xf32>
    %c0_11 = arith.constant 0 : index
    %c0_12 = arith.constant 0 : index
    %13 = vector.load %arg6[%c0_11, %c0_12] : memref<128x128xf32, #tpu.memory_space<vmem>>, vector<128x128xf32>
    tpu.vector_store %arg6[%c0_11, %c0_12], %12 {strides = array<i32>} : memref<128x128xf32, #tpu.memory_space<vmem>>, vector<128x128xf32>,
    return
  }
  func.func @transform_0(%arg0: i32) -> (i32, i32) {
    %c0_i32 = arith.constant 0 : i32
    %c0_i32_0 = arith.constant 0 : i32
    return %arg0, %c0_i32 : i32, i32
  }
  func.func @transform_1(%arg0: i32) -> (i32, i32) {
    %c0_i32 = arith.constant 0 : i32
    %c0_i32_0 = arith.constant 0 : i32
    %c0_i32_1 = arith.constant 0 : i32
    return %c0_i32, %c0_i32_0 : i32, i32
  }
  func.func @transform_2(%arg0: i32) -> (i32, i32) {
    %c0_i32 = arith.constant 0 : i32
    %c0_i32_0 = arith.constant 0 : i32
    %c0_i32_1 = arith.constant 0 : i32
    return %c0_i32, %c0_i32_0 : i32, i32
  }
  func.func @transform_3(%arg0: i32) -> (i32, i32) {
    %c0_i32 = arith.constant 0 : i32
    %c0_i32_0 = arith.constant 0 : i32
    %c0_i32_1 = arith.constant 0 : i32
    return %c0_i32, %c0_i32_0 : i32, i32
  }
  func.func @transform_4(%arg0: i32) -> (i32, i32) {
    %c0_i32 = arith.constant 0 : i32
    %c0_i32_0 = arith.constant 0 : i32
    %c0_i32_1 = arith.constant 0 : i32
    return %c0_i32, %c0_i32_0 : i32, i32
  }
  func.func @transform_5(%arg0: i32) -> (i32, i32) {
    %c0_i32 = arith.constant 0 : i32
    %c0_i32_0 = arith.constant 0 : i32
    return %arg0, %c0_i32 : i32, i32
  }
}

module attributes {stable_mosaic.version = 11 : i64} {
  func.func @_specmix_kernel(%arg0: i32, %arg1: memref<8x4x128xf32, #tpu.memory_space<vmem>>, %arg2: memref<2x8x128x128xf32, #tpu.memory_space<vmem>>, %arg3: memref<8x2x128xf32, #tpu.memory_space<vmem>>, %arg4: memref<8x2x128xf32, #tpu.memory_space<vmem>>) attributes {dimension_semantics = [#tpu.dimension_semantics<parallel>], iteration_bounds = array<i64: 1>, scalar_prefetch = 0 : i64, scratch_operands = 0 : i64, tpu.core_type = #tpu.core_type<tc>, window_params = [{transform_indices = @transform_0, window_bounds = array<i64: 8, 4, 128>}, {transform_indices = @transform_1, window_bounds = array<i64: 2, 8, 128, 128>}, {transform_indices = @transform_2, window_bounds = array<i64: 8, 2, 128>}, {transform_indices = @transform_3, window_bounds = array<i64: 8, 2, 128>}]} {
    %c0 = arith.constant 0 : index
    %c0_0 = arith.constant 0 : index
    %c0_1 = arith.constant 0 : index
    %0 = vector.load %arg1[%c0, %c0_0, %c0_1] : memref<8x4x128xf32, #tpu.memory_space<vmem>>, vector<8x4x128xf32>
    %c0_2 = arith.constant 0 : index
    %c0_3 = arith.constant 0 : index
    %c0_4 = arith.constant 0 : index
    %c0_5 = arith.constant 0 : index
    %1 = vector.load %arg2[%c0_2, %c0_3, %c0_4, %c0_5] : memref<2x8x128x128xf32, #tpu.memory_space<vmem>>, vector<1x8x128x128xf32>
    %2 = vector.shape_cast %1 : vector<1x8x128x128xf32> to vector<8x128x128xf32>
    %cst = arith.constant dense<0.000000e+00> : vector<8x4x128xf32>
    %3 = tpu.matmul %0, %2, %cst {dimension_numbers = #tpu.dot_dimension_numbers<[2], [1], [1], [2], [0, 0, 0, 1, 1, 2], [0], [0]>} : vector<8x4x128xf32>, vector<8x128x128xf32>, vector<8x4x128xf32> -> vector<8x4x128xf32>
    %c1 = arith.constant 1 : index
    %c0_6 = arith.constant 0 : index
    %c0_7 = arith.constant 0 : index
    %c0_8 = arith.constant 0 : index
    %4 = vector.load %arg2[%c1, %c0_6, %c0_7, %c0_8] : memref<2x8x128x128xf32, #tpu.memory_space<vmem>>, vector<1x8x128x128xf32>
    %5 = vector.shape_cast %4 : vector<1x8x128x128xf32> to vector<8x128x128xf32>
    %cst_9 = arith.constant dense<0.000000e+00> : vector<8x4x128xf32>
    %6 = tpu.matmul %0, %5, %cst_9 {dimension_numbers = #tpu.dot_dimension_numbers<[2], [1], [1], [2], [0, 0, 0, 1, 1, 2], [0], [0]>} : vector<8x4x128xf32>, vector<8x128x128xf32>, vector<8x4x128xf32> -> vector<8x4x128xf32>
    %7 = vector.extract_strided_slice %3 {offsets = [0, 0, 0], sizes = [8, 2, 128], strides = [1, 1, 1]} : vector<8x4x128xf32> to vector<8x2x128xf32>
    %8 = vector.extract_strided_slice %6 {offsets = [0, 2, 0], sizes = [8, 2, 128], strides = [1, 1, 1]} : vector<8x4x128xf32> to vector<8x2x128xf32>
    %9 = arith.subf %7, %8 : vector<8x2x128xf32>
    %c0_10 = arith.constant 0 : index
    %c0_11 = arith.constant 0 : index
    %c0_12 = arith.constant 0 : index
    %10 = vector.load %arg3[%c0_10, %c0_11, %c0_12] : memref<8x2x128xf32, #tpu.memory_space<vmem>>, vector<8x2x128xf32>
    tpu.vector_store %arg3[%c0_10, %c0_11, %c0_12], %9 {strides = array<i32>} : memref<8x2x128xf32, #tpu.memory_space<vmem>>, vector<8x2x128xf32>,
    %11 = vector.extract_strided_slice %6 {offsets = [0, 0, 0], sizes = [8, 2, 128], strides = [1, 1, 1]} : vector<8x4x128xf32> to vector<8x2x128xf32>
    %12 = vector.extract_strided_slice %3 {offsets = [0, 2, 0], sizes = [8, 2, 128], strides = [1, 1, 1]} : vector<8x4x128xf32> to vector<8x2x128xf32>
    %13 = arith.addf %11, %12 : vector<8x2x128xf32>
    %c0_13 = arith.constant 0 : index
    %c0_14 = arith.constant 0 : index
    %c0_15 = arith.constant 0 : index
    %14 = vector.load %arg4[%c0_13, %c0_14, %c0_15] : memref<8x2x128xf32, #tpu.memory_space<vmem>>, vector<8x2x128xf32>
    tpu.vector_store %arg4[%c0_13, %c0_14, %c0_15], %13 {strides = array<i32>} : memref<8x2x128xf32, #tpu.memory_space<vmem>>, vector<8x2x128xf32>,
    return
  }
  func.func @transform_0(%arg0: i32) -> (i32, i32, i32) {
    %c0_i32 = arith.constant 0 : i32
    %c0_i32_0 = arith.constant 0 : i32
    %c0_i32_1 = arith.constant 0 : i32
    return %arg0, %c0_i32, %c0_i32_0 : i32, i32, i32
  }
  func.func @transform_1(%arg0: i32) -> (i32, i32, i32, i32) {
    %c0_i32 = arith.constant 0 : i32
    %c0_i32_0 = arith.constant 0 : i32
    %c0_i32_1 = arith.constant 0 : i32
    %c0_i32_2 = arith.constant 0 : i32
    return %c0_i32, %arg0, %c0_i32_0, %c0_i32_1 : i32, i32, i32, i32
  }
  func.func @transform_2(%arg0: i32) -> (i32, i32, i32) {
    %c0_i32 = arith.constant 0 : i32
    %c0_i32_0 = arith.constant 0 : i32
    %c0_i32_1 = arith.constant 0 : i32
    return %arg0, %c0_i32, %c0_i32_0 : i32, i32, i32
  }
  func.func @transform_3(%arg0: i32) -> (i32, i32, i32) {
    %c0_i32 = arith.constant 0 : i32
    %c0_i32_0 = arith.constant 0 : i32
    %c0_i32_1 = arith.constant 0 : i32
    return %arg0, %c0_i32, %c0_i32_0 : i32, i32, i32
  }
}

module attributes {stable_mosaic.version = 11 : i64} {
  func.func @_conv_res_kernel(%arg0: i32, %arg1: memref<162x128xf32, #tpu.memory_space<vmem>>, %arg2: memref<128x128xf32, #tpu.memory_space<vmem>>, %arg3: memref<1x128xf32, #tpu.memory_space<vmem>>, %arg4: memref<162x128xf32, #tpu.memory_space<vmem>>, %arg5: memref<162x128xf32, #tpu.memory_space<vmem>>) attributes {dimension_semantics = [#tpu.dimension_semantics<parallel>], iteration_bounds = array<i64: 1>, scalar_prefetch = 0 : i64, scratch_operands = 0 : i64, tpu.core_type = #tpu.core_type<tc>, window_params = [{transform_indices = @transform_0, window_bounds = array<i64: 162, 128>}, {pipeline_mode = #tpu.pipeline_mode<synchronous>, transform_indices = @transform_1, window_bounds = array<i64: 128, 128>}, {pipeline_mode = #tpu.pipeline_mode<synchronous>, transform_indices = @transform_2, window_bounds = array<i64: 1, 128>}, {transform_indices = @transform_3, window_bounds = array<i64: 162, 128>}, {transform_indices = @transform_4, window_bounds = array<i64: 162, 128>}]} {
    %c0 = arith.constant 0 : index
    %c0_0 = arith.constant 0 : index
    %0 = vector.load %arg1[%c0, %c0_0] : memref<162x128xf32, #tpu.memory_space<vmem>>, vector<162x128xf32>
    %c0_1 = arith.constant 0 : index
    %c0_2 = arith.constant 0 : index
    %1 = vector.load %arg2[%c0_1, %c0_2] : memref<128x128xf32, #tpu.memory_space<vmem>>, vector<128x128xf32>
    %cst = arith.constant dense<0.000000e+00> : vector<162x128xf32>
    %2 = tpu.matmul %0, %1, %cst {dimension_numbers = #tpu.dot_dimension_numbers<[1], [0], [0], [1], [0, 0, 1, 1], [], []>} : vector<162x128xf32>, vector<128x128xf32>, vector<162x128xf32> -> vector<162x128xf32>
    %c0_3 = arith.constant 0 : index
    %c0_4 = arith.constant 0 : index
    %3 = vector.load %arg3[%c0_3, %c0_4] : memref<1x128xf32, #tpu.memory_space<vmem>>, vector<1x128xf32>
    %4 = vector.broadcast %3 : vector<1x128xf32> to vector<162x128xf32>
    %5 = arith.addf %2, %4 : vector<162x128xf32>
    %c0_5 = arith.constant 0 : index
    %c0_6 = arith.constant 0 : index
    %6 = vector.load %arg4[%c0_5, %c0_6] : memref<162x128xf32, #tpu.memory_space<vmem>>, vector<162x128xf32>
    %7 = arith.addf %5, %6 : vector<162x128xf32>
    %cst_7 = arith.constant 0.000000e+00 : f32
    %8 = vector.broadcast %cst_7 : f32 to vector<162x128xf32>
    %9 = arith.maximumf %7, %8 : vector<162x128xf32>
    %c0_8 = arith.constant 0 : index
    %c0_9 = arith.constant 0 : index
    %10 = vector.load %arg5[%c0_8, %c0_9] : memref<162x128xf32, #tpu.memory_space<vmem>>, vector<162x128xf32>
    tpu.vector_store %arg5[%c0_8, %c0_9], %9 {strides = array<i32>} : memref<162x128xf32, #tpu.memory_space<vmem>>, vector<162x128xf32>,
    return
  }
  func.func @transform_0(%arg0: i32) -> (i32, i32) {
    %c0_i32 = arith.constant 0 : i32
    %c0_i32_0 = arith.constant 0 : i32
    return %arg0, %c0_i32 : i32, i32
  }
  func.func @transform_1(%arg0: i32) -> (i32, i32) {
    %c0_i32 = arith.constant 0 : i32
    %c0_i32_0 = arith.constant 0 : i32
    %c0_i32_1 = arith.constant 0 : i32
    return %c0_i32, %c0_i32_0 : i32, i32
  }
  func.func @transform_2(%arg0: i32) -> (i32, i32) {
    %c0_i32 = arith.constant 0 : i32
    %c0_i32_0 = arith.constant 0 : i32
    %c0_i32_1 = arith.constant 0 : i32
    return %c0_i32, %c0_i32_0 : i32, i32
  }
  func.func @transform_3(%arg0: i32) -> (i32, i32) {
    %c0_i32 = arith.constant 0 : i32
    %c0_i32_0 = arith.constant 0 : i32
    return %arg0, %c0_i32 : i32, i32
  }
  func.func @transform_4(%arg0: i32) -> (i32, i32) {
    %c0_i32 = arith.constant 0 : i32
    %c0_i32_0 = arith.constant 0 : i32
    return %arg0, %c0_i32 : i32, i32
  }
}

module attributes {stable_mosaic.version = 11 : i64} {
  func.func @_conv_res_kernel(%arg0: i32, %arg1: memref<162x128xf32, #tpu.memory_space<vmem>>, %arg2: memref<128x128xf32, #tpu.memory_space<vmem>>, %arg3: memref<1x128xf32, #tpu.memory_space<vmem>>, %arg4: memref<162x128xf32, #tpu.memory_space<vmem>>, %arg5: memref<162x128xf32, #tpu.memory_space<vmem>>) attributes {dimension_semantics = [#tpu.dimension_semantics<parallel>], iteration_bounds = array<i64: 1>, scalar_prefetch = 0 : i64, scratch_operands = 0 : i64, tpu.core_type = #tpu.core_type<tc>, window_params = [{transform_indices = @transform_0, window_bounds = array<i64: 162, 128>}, {pipeline_mode = #tpu.pipeline_mode<synchronous>, transform_indices = @transform_1, window_bounds = array<i64: 128, 128>}, {pipeline_mode = #tpu.pipeline_mode<synchronous>, transform_indices = @transform_2, window_bounds = array<i64: 1, 128>}, {transform_indices = @transform_3, window_bounds = array<i64: 162, 128>}, {transform_indices = @transform_4, window_bounds = array<i64: 162, 128>}]} {
    %c0 = arith.constant 0 : index
    %c0_0 = arith.constant 0 : index
    %0 = vector.load %arg1[%c0, %c0_0] : memref<162x128xf32, #tpu.memory_space<vmem>>, vector<162x128xf32>
    %c0_1 = arith.constant 0 : index
    %c0_2 = arith.constant 0 : index
    %1 = vector.load %arg2[%c0_1, %c0_2] : memref<128x128xf32, #tpu.memory_space<vmem>>, vector<128x128xf32>
    %cst = arith.constant dense<0.000000e+00> : vector<162x128xf32>
    %2 = tpu.matmul %0, %1, %cst {dimension_numbers = #tpu.dot_dimension_numbers<[1], [0], [0], [1], [0, 0, 1, 1], [], []>} : vector<162x128xf32>, vector<128x128xf32>, vector<162x128xf32> -> vector<162x128xf32>
    %c0_3 = arith.constant 0 : index
    %c0_4 = arith.constant 0 : index
    %3 = vector.load %arg3[%c0_3, %c0_4] : memref<1x128xf32, #tpu.memory_space<vmem>>, vector<1x128xf32>
    %4 = vector.broadcast %3 : vector<1x128xf32> to vector<162x128xf32>
    %5 = arith.addf %2, %4 : vector<162x128xf32>
    %c0_5 = arith.constant 0 : index
    %c0_6 = arith.constant 0 : index
    %6 = vector.load %arg4[%c0_5, %c0_6] : memref<162x128xf32, #tpu.memory_space<vmem>>, vector<162x128xf32>
    %7 = arith.addf %5, %6 : vector<162x128xf32>
    %c0_7 = arith.constant 0 : index
    %c0_8 = arith.constant 0 : index
    %8 = vector.load %arg5[%c0_7, %c0_8] : memref<162x128xf32, #tpu.memory_space<vmem>>, vector<162x128xf32>
    tpu.vector_store %arg5[%c0_7, %c0_8], %7 {strides = array<i32>} : memref<162x128xf32, #tpu.memory_space<vmem>>, vector<162x128xf32>,
    return
  }
  func.func @transform_0(%arg0: i32) -> (i32, i32) {
    %c0_i32 = arith.constant 0 : i32
    %c0_i32_0 = arith.constant 0 : i32
    return %arg0, %c0_i32 : i32, i32
  }
  func.func @transform_1(%arg0: i32) -> (i32, i32) {
    %c0_i32 = arith.constant 0 : i32
    %c0_i32_0 = arith.constant 0 : i32
    %c0_i32_1 = arith.constant 0 : i32
    return %c0_i32, %c0_i32_0 : i32, i32
  }
  func.func @transform_2(%arg0: i32) -> (i32, i32) {
    %c0_i32 = arith.constant 0 : i32
    %c0_i32_0 = arith.constant 0 : i32
    %c0_i32_1 = arith.constant 0 : i32
    return %c0_i32, %c0_i32_0 : i32, i32
  }
  func.func @transform_3(%arg0: i32) -> (i32, i32) {
    %c0_i32 = arith.constant 0 : i32
    %c0_i32_0 = arith.constant 0 : i32
    return %arg0, %c0_i32 : i32, i32
  }
  func.func @transform_4(%arg0: i32) -> (i32, i32) {
    %c0_i32 = arith.constant 0 : i32
    %c0_i32_0 = arith.constant 0 : i32
    return %arg0, %c0_i32 : i32, i32
  }
}

module attributes {stable_mosaic.version = 11 : i64} {
  func.func @_fused_mlp_kernel(%arg0: i32, %arg1: memref<128x128xf32, #tpu.memory_space<vmem>>, %arg2: memref<128x128xf32, #tpu.memory_space<vmem>>, %arg3: memref<1x128xf32, #tpu.memory_space<vmem>>, %arg4: memref<128x4xf32, #tpu.memory_space<vmem>>, %arg5: memref<1x4xf32, #tpu.memory_space<vmem>>, %arg6: memref<128x4xf32, #tpu.memory_space<vmem>>) attributes {dimension_semantics = [#tpu.dimension_semantics<parallel>], iteration_bounds = array<i64: 1>, scalar_prefetch = 0 : i64, scratch_operands = 0 : i64, tpu.core_type = #tpu.core_type<tc>, window_params = [{transform_indices = @transform_0, window_bounds = array<i64: 128, 128>}, {pipeline_mode = #tpu.pipeline_mode<synchronous>, transform_indices = @transform_1, window_bounds = array<i64: 128, 128>}, {pipeline_mode = #tpu.pipeline_mode<synchronous>, transform_indices = @transform_2, window_bounds = array<i64: 1, 128>}, {pipeline_mode = #tpu.pipeline_mode<synchronous>, transform_indices = @transform_3, window_bounds = array<i64: 128, 4>}, {pipeline_mode = #tpu.pipeline_mode<synchronous>, transform_indices = @transform_4, window_bounds = array<i64: 1, 4>}, {transform_indices = @transform_5, window_bounds = array<i64: 128, 4>}]} {
    %c0 = arith.constant 0 : index
    %c0_0 = arith.constant 0 : index
    %0 = vector.load %arg1[%c0, %c0_0] : memref<128x128xf32, #tpu.memory_space<vmem>>, vector<128x128xf32>
    %c0_1 = arith.constant 0 : index
    %c0_2 = arith.constant 0 : index
    %1 = vector.load %arg2[%c0_1, %c0_2] : memref<128x128xf32, #tpu.memory_space<vmem>>, vector<128x128xf32>
    %cst = arith.constant dense<0.000000e+00> : vector<128x128xf32>
    %2 = tpu.matmul %0, %1, %cst {dimension_numbers = #tpu.dot_dimension_numbers<[1], [0], [0], [1], [0, 0, 1, 1], [], []>} : vector<128x128xf32>, vector<128x128xf32>, vector<128x128xf32> -> vector<128x128xf32>
    %c0_3 = arith.constant 0 : index
    %c0_4 = arith.constant 0 : index
    %3 = vector.load %arg3[%c0_3, %c0_4] : memref<1x128xf32, #tpu.memory_space<vmem>>, vector<1x128xf32>
    %4 = vector.broadcast %3 : vector<1x128xf32> to vector<128x128xf32>
    %5 = arith.addf %2, %4 : vector<128x128xf32>
    %cst_5 = arith.constant 0.000000e+00 : f32
    %6 = vector.broadcast %cst_5 : f32 to vector<128x128xf32>
    %7 = arith.maximumf %5, %6 : vector<128x128xf32>
    %c0_6 = arith.constant 0 : index
    %c0_7 = arith.constant 0 : index
    %8 = vector.load %arg4[%c0_6, %c0_7] : memref<128x4xf32, #tpu.memory_space<vmem>>, vector<128x4xf32>
    %cst_8 = arith.constant dense<0.000000e+00> : vector<128x4xf32>
    %9 = tpu.matmul %7, %8, %cst_8 {dimension_numbers = #tpu.dot_dimension_numbers<[1], [0], [0], [1], [0, 0, 1, 1], [], []>} : vector<128x128xf32>, vector<128x4xf32>, vector<128x4xf32> -> vector<128x4xf32>
    %c0_9 = arith.constant 0 : index
    %c0_10 = arith.constant 0 : index
    %10 = vector.load %arg5[%c0_9, %c0_10] : memref<1x4xf32, #tpu.memory_space<vmem>>, vector<1x4xf32>
    %11 = vector.broadcast %10 : vector<1x4xf32> to vector<128x4xf32>
    %12 = arith.addf %9, %11 : vector<128x4xf32>
    %c0_11 = arith.constant 0 : index
    %c0_12 = arith.constant 0 : index
    %13 = vector.load %arg6[%c0_11, %c0_12] : memref<128x4xf32, #tpu.memory_space<vmem>>, vector<128x4xf32>
    tpu.vector_store %arg6[%c0_11, %c0_12], %12 {strides = array<i32>} : memref<128x4xf32, #tpu.memory_space<vmem>>, vector<128x4xf32>,
    return
  }
  func.func @transform_0(%arg0: i32) -> (i32, i32) {
    %c0_i32 = arith.constant 0 : i32
    %c0_i32_0 = arith.constant 0 : i32
    return %arg0, %c0_i32 : i32, i32
  }
  func.func @transform_1(%arg0: i32) -> (i32, i32) {
    %c0_i32 = arith.constant 0 : i32
    %c0_i32_0 = arith.constant 0 : i32
    %c0_i32_1 = arith.constant 0 : i32
    return %c0_i32, %c0_i32_0 : i32, i32
  }
  func.func @transform_2(%arg0: i32) -> (i32, i32) {
    %c0_i32 = arith.constant 0 : i32
    %c0_i32_0 = arith.constant 0 : i32
    %c0_i32_1 = arith.constant 0 : i32
    return %c0_i32, %c0_i32_0 : i32, i32
  }
  func.func @transform_3(%arg0: i32) -> (i32, i32) {
    %c0_i32 = arith.constant 0 : i32
    %c0_i32_0 = arith.constant 0 : i32
    %c0_i32_1 = arith.constant 0 : i32
    return %c0_i32, %c0_i32_0 : i32, i32
  }
  func.func @transform_4(%arg0: i32) -> (i32, i32) {
    %c0_i32 = arith.constant 0 : i32
    %c0_i32_0 = arith.constant 0 : i32
    %c0_i32_1 = arith.constant 0 : i32
    return %c0_i32, %c0_i32_0 : i32, i32
  }
  func.func @transform_5(%arg0: i32) -> (i32, i32) {
    %c0_i32 = arith.constant 0 : i32
    %c0_i32_0 = arith.constant 0 : i32
    return %arg0, %c0_i32 : i32, i32
  }
}

</mosaic_0001>

<llo_original>
// kernel: _lambda_.6
$region0: #{_lambda_.6}
  #allocation0 [shape = 'u32[]', space=smem, size = 0x4, offset = 0x4, fixed_abs, tag = 'smem constant byte address 0x4 - core index']
  #allocation1 [shape = 'u32[144,128]{1,0:T(1,128)}', space=vmem, size = 0x12000, scoped, tag = 'internal scratch']
  %s0 = inlined_call_operand.vmem [shape: f32[128,12], index: 0, kind: input, shape index: {}]
  %s1 = inlined_call_operand.vmem [shape: f32[12,128], index: 1, kind: input, shape index: {}]
  %s2 = inlined_call_operand.vmem [shape: f32[1,128], index: 2, kind: input, shape index: {}]
  %s3 = inlined_call_operand.vmem [shape: f32[128,128], index: 3, kind: input, shape index: {}]
  %s4 = inlined_call_operand.vmem [shape: f32[1,128], index: 4, kind: input, shape index: {}]
  %s5 = inlined_call_operand.vmem [shape: f32[128,128], index: 5, kind: output, shape index: {}]
  %s6 = sld [smem:[#allocation0]]
  $region30: #{_lambda_.6} parent=0
    _
  %s8 = ssub.s32 1, %s6
  %s9 = scalar_select 0, %s8, %s6
  // Predicated region
  $region2: #{_lambda_.6} parent=0 // pred_check
    _
  $region3: #{_lambda_.6} parent=0 // pred_check_branch
    %11 = sbr.rel (0) target = $region5
  $region4: #{_lambda_.6} parent=0 // pred_region
    _
  $region5: #{_lambda_.6} parent=0 // pred_fallthru
    _
  // Predicated region
  $region6: #{_lambda_.6} parent=0 // pred_check
    _
  $region7: #{_lambda_.6} parent=0 // pred_check_branch
    %13 = sbr.rel (0) target = $region9
  $region8: #{_lambda_.6} parent=0 // pred_region
    _
  $region9: #{_lambda_.6} parent=0 // pred_fallthru
    _
  // Predicated region
  $region10: #{_lambda_.6} parent=0 // pred_check
    _
  $region11: #{_lambda_.6} parent=0 // pred_check_branch
    %15 = sbr.rel (0) target = $region13
  $region12: #{_lambda_.6} parent=0 // pred_region
    _
  $region13: #{_lambda_.6} parent=0 // pred_fallthru
    _
  // Predicated region
  $region14: #{_lambda_.6} parent=0 // pred_check
    _
  $region15: #{_lambda_.6} parent=0 // pred_check_branch
    %17 = sbr.rel (0) target = $region17
  $region16: #{_lambda_.6} parent=0 // pred_region
    _
  $region17: #{_lambda_.6} parent=0 // pred_fallthru
    _
  // Predicated region
  $region18: #{_lambda_.6} parent=0 // pred_check
    _
  $region19: #{_lambda_.6} parent=0 // pred_check_branch
    %19 = sbr.rel (0) target = $region21
  $region20: #{_lambda_.6} parent=0 // pred_region
    _
  $region21: #{_lambda_.6} parent=0 // pred_fallthru
    _
  %v20 = vld [vmem:[%s0] sm:$0xff]
  %v21 = vld [vmem:[%s0 + $0x8] sm:$0xff]
  %v22 = vld [vmem:[%s0 + $0x10] sm:$0xff]
  %v23 = vld [vmem:[%s0 + $0x18] sm:$0xff]
  %v24 = vld [vmem:[%s0 + $0x20] sm:$0xff]
  %v25 = vld [vmem:[%s0 + $0x28] sm:$0xff]
  %v26 = vld [vmem:[%s0 + $0x30] sm:$0xff]
  %v27 = vld [vmem:[%s0 + $0x38] sm:$0xff]
  %v28 = vld [vmem:[%s0 + $0x40] sm:$0xff]
  %v29 = vld [vmem:[%s0 + $0x48] sm:$0xff]
  %v30 = vld [vmem:[%s0 + $0x50] sm:$0xff]
  %v31 = vld [vmem:[%s0 + $0x58] sm:$0xff]
  %v32 = vld [vmem:[%s0 + $0x60] sm:$0xff]
  %v33 = vld [vmem:[%s0 + $0x68] sm:$0xff]
  %v34 = vld [vmem:[%s0 + $0x70] sm:$0xff]
  %v35 = vld [vmem:[%s0 + $0x78] sm:$0xff]
  %v36 = vld [vmem:[%s1] sm:$0xff]
  %v37 = vld [vmem:[%s1 + $0x8] sm:$0xf]
  %v38 = vld [vmem:[%s2] sm:$0x1]
  %v40 = vlaneseq
  %v41 = vshrl.u32 %v40, 7
  %v42 = vsub.s32 0, %v41
  %v43 = vrot.slane %v38, %v42
  %vm45 = vcmask 97280
  %v47 = vsel %vm45, %v20, 0
  %v50 = vsel %vm45, %v21, 0
  %v53 = vsel %vm45, %v22, 0
  %v56 = vsel %vm45, %v23, 0
  %v59 = vsel %vm45, %v24, 0
  %v62 = vsel %vm45, %v25, 0
  %v65 = vsel %vm45, %v26, 0
  %v68 = vsel %vm45, %v27, 0
  %v71 = vsel %vm45, %v28, 0
  %v74 = vsel %vm45, %v29, 0
  %v77 = vsel %vm45, %v30, 0
  %v80 = vsel %vm45, %v31, 0
  %v83 = vsel %vm45, %v32, 0
  %v86 = vsel %vm45, %v33, 0
  %v89 = vsel %vm45, %v34, 0
  %v92 = vsel %vm45, %v35, 0
  %vm94 = vcmask 1043456
  %v96 = vsel %vm94, %v37, 0
  %98 = vmatprep.subr.mxu0 0.0
  %99 = vmatpush1.msra.mxu0 %v36
  %100 = vmatprep.subr.mxu0 0.0
  %101 = vmatpush1.msra.mxu0 %v96
  %102 = vmatprep.subr.mxu0 0.0
  %103 = vmatpush1.msra.mxu0 0.0
  %104 = vmatprep.subr.mxu0 0.0
  %105 = vmatpush1.msra.mxu0 0.0
  %106 = vmatprep.subr.mxu0 0.0
  %107 = vmatpush1.msra.mxu0 0.0
  %108 = vmatprep.subr.mxu0 0.0
  %109 = vmatpush1.msra.mxu0 0.0
  %110 = vmatprep.subr.mxu0 0.0
  %111 = vmatpush1.msra.mxu0 0.0
  %112 = vmatprep.subr.mxu0 0.0
  %113 = vmatpush1.msra.mxu0 0.0
  %114 = vmatprep.subr.mxu0 0.0
  %115 = vmatpush1.msra.mxu0 0.0
  %116 = vmatprep.subr.mxu0 0.0
  %117 = vmatpush1.msra.mxu0 0.0
  %118 = vmatprep.subr.mxu0 0.0
  %119 = vmatpush1.msra.mxu0 0.0
  %120 = vmatprep.subr.mxu0 0.0
  %121 = vmatpush1.msra.mxu0 0.0
  %122 = vmatprep.subr.mxu0 0.0
  %123 = vmatpush1.msra.mxu0 0.0
  %124 = vmatprep.subr.mxu0 0.0
  %125 = vmatpush1.msra.mxu0 0.0
  %126 = vmatprep.subr.mxu0 0.0
  %127 = vmatpush1.msra.mxu0 0.0
  %128 = vmatprep.subr.mxu0 0.0
  %129 = vmatpush1.msra.mxu0 0.0
  %130 = vmatprep.subr.mxu0 0.0
  %131 = vmatpush1.msra.mxu0 0.0
  %132 = vmatprep.subr.mxu0 0.0
  %133 = vmatpush1.msra.mxu0 0.0
  %134 = vmatprep.subr.mxu0 0.0
  %135 = vmatpush1.msra.mxu0 0.0
  %136 = vmatprep.subr.mxu0 0.0
  %137 = vmatpush1.msra.mxu0 0.0
  %138 = vmatprep.subr.mxu0 0.0
  %139 = vmatpush1.msra.mxu0 0.0
  %140 = vmatprep.subr.mxu0 0.0
  %141 = vmatpush1.msra.mxu0 0.0
  %142 = vmatprep.subr.mxu0 0.0
  %143 = vmatpush1.msra.mxu0 0.0
  %144 = vmatprep.subr.mxu0 0.0
  %145 = vmatpush1.msra.mxu0 0.0
  %146 = vmatprep.subr.mxu0 0.0
  %147 = vmatpush1.msra.mxu0 0.0
  %148 = vmatprep.subr.mxu0 0.0
  %149 = vmatpush1.msra.mxu0 0.0
  %150 = vmatprep.subr.mxu0 0.0
  %151 = vmatpush1.msra.mxu0 0.0
  %152 = vmatprep.subr.mxu0 0.0
  %153 = vmatpush1.msra.mxu0 0.0
  %154 = vmatprep.subr.mxu0 0.0
  %155 = vmatpush1.msra.mxu0 0.0
  %156 = vmatprep.subr.mxu0 0.0
  %157 = vmatpush1.msra.mxu0 0.0
  %158 = vmatprep.subr.mxu0 0.0
  %159 = vmatpush1.msra.mxu0 0.0
  %160 = vmatprep.subr.mxu0 0.0
  %161 = vmatpush1.msra.mxu0 0.0
  %162 = vmatprep.mubr.f32.mxu0 0.0
  %163 = vmatmul.mubr.f32.gmra.mrb[0].mxu0 %v47
  %v164 = vpop.f32.mrb[0].mxu0
  %v165 = vadd.f32 %v43, %v164
  %v166 = vpop.f32.mrb[0].mxu0
  %167 = vmatprep.mubr.f32.mxu0 0.0
  %168 = vmatmul.mubr.f32.gmra.mrb[0].mxu0 %v50
  %v169 = vpop.f32.mrb[0].mxu0
  %v170 = vadd.f32 %v43, %v169
  %v171 = vpop.f32.mrb[0].mxu0
  %172 = vmatprep.mubr.f32.mxu0 0.0
  %173 = vmatmul.mubr.f32.gmra.mrb[0].mxu0 %v53
  %v174 = vpop.f32.mrb[0].mxu0
  %v175 = vadd.f32 %v43, %v174
  %v176 = vpop.f32.mrb[0].mxu0
  %177 = vmatprep.mubr.f32.mxu0 0.0
  %178 = vmatmul.mubr.f32.gmra.mrb[0].mxu0 %v56
  %v179 = vpop.f32.mrb[0].mxu0
  %v180 = vadd.f32 %v43, %v179
  %v181 = vpop.f32.mrb[0].mxu0
  %182 = vmatprep.mubr.f32.mxu0 0.0
  %183 = vmatmul.mubr.f32.gmra.mrb[0].mxu0 %v59
  %v184 = vpop.f32.mrb[0].mxu0
  %v185 = vadd.f32 %v43, %v184
  %v186 = vpop.f32.mrb[0].mxu0
  %187 = vmatprep.mubr.f32.mxu0 0.0
  %188 = vmatmul.mubr.f32.gmra.mrb[0].mxu0 %v62
  %v189 = vpop.f32.mrb[0].mxu0
  %v190 = vadd.f32 %v43, %v189
  %v191 = vpop.f32.mrb[0].mxu0
  %192 = vmatprep.mubr.f32.mxu0 0.0
  %193 = vmatmul.mubr.f32.gmra.mrb[0].mxu0 %v65
  %v194 = vpop.f32.mrb[0].mxu0
  %v195 = vadd.f32 %v43, %v194
  %v196 = vpop.f32.mrb[0].mxu0
  %197 = vmatprep.mubr.f32.mxu0 0.0
  %198 = vmatmul.mubr.f32.gmra.mrb[0].mxu0 %v68
  %v199 = vpop.f32.mrb[0].mxu0
  %v200 = vadd.f32 %v43, %v199
  %v201 = vpop.f32.mrb[0].mxu0
  %202 = vmatprep.mubr.f32.mxu0 0.0
  %203 = vmatmul.mubr.f32.gmra.mrb[0].mxu0 %v71
  %v204 = vpop.f32.mrb[0].mxu0
  %v205 = vadd.f32 %v43, %v204
  %v206 = vpop.f32.mrb[0].mxu0
  %207 = vmatprep.mubr.f32.mxu0 0.0
  %208 = vmatmul.mubr.f32.gmra.mrb[0].mxu0 %v74
  %v209 = vpop.f32.mrb[0].mxu0
  %v210 = vadd.f32 %v43, %v209
  %v211 = vpop.f32.mrb[0].mxu0
  %212 = vmatprep.mubr.f32.mxu0 0.0
  %213 = vmatmul.mubr.f32.gmra.mrb[0].mxu0 %v77
  %v214 = vpop.f32.mrb[0].mxu0
  %v215 = vadd.f32 %v43, %v214
  %v216 = vpop.f32.mrb[0].mxu0
  %217 = vmatprep.mubr.f32.mxu0 0.0
  %218 = vmatmul.mubr.f32.gmra.mrb[0].mxu0 %v80
  %v219 = vpop.f32.mrb[0].mxu0
  %v220 = vadd.f32 %v43, %v219
  %v221 = vpop.f32.mrb[0].mxu0
  %222 = vmatprep.mubr.f32.mxu0 0.0
  %223 = vmatmul.mubr.f32.gmra.mrb[0].mxu0 %v83
  %v224 = vpop.f32.mrb[0].mxu0
  %v225 = vadd.f32 %v43, %v224
  %v226 = vpop.f32.mrb[0].mxu0
  %227 = vmatprep.mubr.f32.mxu0 0.0
  %228 = vmatmul.mubr.f32.gmra.mrb[0].mxu0 %v86
  %v229 = vpop.f32.mrb[0].mxu0
  %v230 = vadd.f32 %v43, %v229
  %v231 = vpop.f32.mrb[0].mxu0
  %232 = vmatprep.mubr.f32.mxu0 0.0
  %233 = vmatmul.mubr.f32.gmra.mrb[0].mxu0 %v89
  %v234 = vpop.f32.mrb[0].mxu0
  %v235 = vadd.f32 %v43, %v234
  %v236 = vpop.f32.mrb[0].mxu0
  %237 = vmatprep.mubr.f32.mxu0 0.0
  %238 = vmatmul.mubr.f32.gmra.mrb[0].mxu0 %v92
  %v239 = vpop.f32.mrb[0].mxu0
  %v240 = vadd.f32 %v43, %v239
  %v241 = vpop.f32.mrb[0].mxu0
  %242 = vdwg.mxu0
  %v243 = vmax.f32 %v165, 0.0
  %v244 = vmax.f32 %v170, 0.0
  %v245 = vmax.f32 %v175, 0.0
  %v246 = vmax.f32 %v180, 0.0
  %v247 = vmax.f32 %v185, 0.0
  %v248 = vmax.f32 %v190, 0.0
  %v249 = vmax.f32 %v195, 0.0
  %v250 = vmax.f32 %v200, 0.0
  %v251 = vmax.f32 %v205, 0.0
  %v252 = vmax.f32 %v210, 0.0
  %v253 = vmax.f32 %v215, 0.0
  %v254 = vmax.f32 %v220, 0.0
  %v255 = vmax.f32 %v225, 0.0
  %v256 = vmax.f32 %v230, 0.0
  %v257 = vmax.f32 %v235, 0.0
  %v258 = vmax.f32 %v240, 0.0
  %v259 = vld [vmem:[%s3] sm:$0xff]
  %v260 = vld [vmem:[%s3 + $0x8] sm:$0xff]
  %v261 = vld [vmem:[%s3 + $0x10] sm:$0xff]
  %v262 = vld [vmem:[%s3 + $0x18] sm:$0xff]
  %v263 = vld [vmem:[%s3 + $0x20] sm:$0xff]
  %v264 = vld [vmem:[%s3 + $0x28] sm:$0xff]
  %v265 = vld [vmem:[%s3 + $0x30] sm:$0xff]
  %v266 = vld [vmem:[%s3 + $0x38] sm:$0xff]
  %v267 = vld [vmem:[%s3 + $0x40] sm:$0xff]
  %v268 = vld [vmem:[%s3 + $0x48] sm:$0xff]
  %v269 = vld [vmem:[%s3 + $0x50] sm:$0xff]
  %v270 = vld [vmem:[%s3 + $0x58] sm:$0xff]
  %v271 = vld [vmem:[%s3 + $0x60] sm:$0xff]
  %v272 = vld [vmem:[%s3 + $0x68] sm:$0xff]
  %v273 = vld [vmem:[%s3 + $0x70] sm:$0xff]
  %v274 = vld [vmem:[%s3 + $0x78] sm:$0xff]
  %v275 = vld [vmem:[%s4] sm:$0x1]
  %v277 = vlaneseq
  %v278 = vshrl.u32 %v277, 7
  %v279 = vsub.s32 0, %v278
  %v280 = vrot.slane %v275, %v279
  %282 = vmatprep.subr.mxu0 0.0
  %283 = vmatpush1.msra.mxu0 %v259
  %284 = vmatprep.subr.mxu0 0.0
  %285 = vmatpush1.msra.mxu0 %v260
  %286 = vmatprep.subr.mxu0 0.0
  %287 = vmatpush1.msra.mxu0 %v261
  %288 = vmatprep.subr.mxu0 0.0
  %289 = vmatpush1.msra.mxu0 %v262
  %290 = vmatprep.subr.mxu0 0.0
  %291 = vmatpush1.msra.mxu0 %v263
  %292 = vmatprep.subr.mxu0 0.0
  %293 = vmatpush1.msra.mxu0 %v264
  %294 = vmatprep.subr.mxu0 0.0
  %295 = vmatpush1.msra.mxu0 %v265
  %296 = vmatprep.subr.mxu0 0.0
  %297 = vmatpush1.msra.mxu0 %v266
  %298 = vmatprep.subr.mxu0 0.0
  %299 = vmatpush1.msra.mxu0 %v267
  %300 = vmatprep.subr.mxu0 0.0
  %301 = vmatpush1.msra.mxu0 %v268
  %302 = vmatprep.subr.mxu0 0.0
  %303 = vmatpush1.msra.mxu0 %v269
  %304 = vmatprep.subr.mxu0 0.0
  %305 = vmatpush1.msra.mxu0 %v270
  %306 = vmatprep.subr.mxu0 0.0
  %307 = vmatpush1.msra.mxu0 %v271
  %308 = vmatprep.subr.mxu0 0.0
  %309 = vmatpush1.msra.mxu0 %v272
  %310 = vmatprep.subr.mxu0 0.0
  %311 = vmatpush1.msra.mxu0 %v273
  %312 = vmatprep.subr.mxu0 0.0
  %313 = vmatpush1.msra.mxu0 %v274
  %314 = vmatprep.subr.mxu0 0.0
  %315 = vmatpush1.msra.mxu0 0.0
  %316 = vmatprep.subr.mxu0 0.0
  %317 = vmatpush1.msra.mxu0 0.0
  %318 = vmatprep.subr.mxu0 0.0
  %319 = vmatpush1.msra.mxu0 0.0
  %320 = vmatprep.subr.mxu0 0.0
  %321 = vmatpush1.msra.mxu0 0.0
  %322 = vmatprep.subr.mxu0 0.0
  %323 = vmatpush1.msra.mxu0 0.0
  %324 = vmatprep.subr.mxu0 0.0
  %325 = vmatpush1.msra.mxu0 0.0
  %326 = vmatprep.subr.mxu0 0.0
  %327 = vmatpush1.msra.mxu0 0.0
  %328 = vmatprep.subr.mxu0 0.0
  %329 = vmatpush1.msra.mxu0 0.0
  %330 = vmatprep.subr.mxu0 0.0
  %331 = vmatpush1.msra.mxu0 0.0
  %332 = vmatprep.subr.mxu0 0.0
  %333 = vmatpush1.msra.mxu0 0.0
  %334 = vmatprep.subr.mxu0 0.0
  %335 = vmatpush1.msra.mxu0 0.0
  %336 = vmatprep.subr.mxu0 0.0
  %337 = vmatpush1.msra.mxu0 0.0
  %338 = vmatprep.subr.mxu0 0.0
  %339 = vmatpush1.msra.mxu0 0.0
  %340 = vmatprep.subr.mxu0 0.0
  %341 = vmatpush1.msra.mxu0 0.0
  %342 = vmatprep.subr.mxu0 0.0
  %343 = vmatpush1.msra.mxu0 0.0
  %344 = vmatprep.subr.mxu0 0.0
  %345 = vmatpush1.msra.mxu0 0.0
  %346 = vmatprep.mubr.f32.mxu0 0.0
  %347 = vmatmul.mubr.f32.gmra.mrb[0].mxu0 %v243
  %v348 = vpop.f32.mrb[0].mxu0
  %v349 = vadd.f32 %v280, %v348
  %v350 = vpop.f32.mrb[0].mxu0
  %351 = vmatprep.mubr.f32.mxu0 0.0
  %352 = vmatmul.mubr.f32.gmra.mrb[0].mxu0 %v244
  %v353 = vpop.f32.mrb[0].mxu0
  %v354 = vadd.f32 %v280, %v353
  %v355 = vpop.f32.mrb[0].mxu0
  %356 = vmatprep.mubr.f32.mxu0 0.0
  %357 = vmatmul.mubr.f32.gmra.mrb[0].mxu0 %v245
  %v358 = vpop.f32.mrb[0].mxu0
  %v359 = vadd.f32 %v280, %v358
  %v360 = vpop.f32.mrb[0].mxu0
  %361 = vmatprep.mubr.f32.mxu0 0.0
  %362 = vmatmul.mubr.f32.gmra.mrb[0].mxu0 %v246
  %v363 = vpop.f32.mrb[0].mxu0
  %v364 = vadd.f32 %v280, %v363
  %v365 = vpop.f32.mrb[0].mxu0
  %366 = vmatprep.mubr.f32.mxu0 0.0
  %367 = vmatmul.mubr.f32.gmra.mrb[0].mxu0 %v247
  %v368 = vpop.f32.mrb[0].mxu0
  %v369 = vadd.f32 %v280, %v368
  %v370 = vpop.f32.mrb[0].mxu0
  %371 = vmatprep.mubr.f32.mxu0 0.0
  %372 = vmatmul.mubr.f32.gmra.mrb[0].mxu0 %v248
  %v373 = vpop.f32.mrb[0].mxu0
  %v374 = vadd.f32 %v280, %v373
  %v375 = vpop.f32.mrb[0].mxu0
  %376 = vmatprep.mubr.f32.mxu0 0.0
  %377 = vmatmul.mubr.f32.gmra.mrb[0].mxu0 %v249
  %v378 = vpop.f32.mrb[0].mxu0
  %v379 = vadd.f32 %v280, %v378
  %v380 = vpop.f32.mrb[0].mxu0
  %381 = vmatprep.mubr.f32.mxu0 0.0
  %382 = vmatmul.mubr.f32.gmra.mrb[0].mxu0 %v250
  %v383 = vpop.f32.mrb[0].mxu0
  %v384 = vadd.f32 %v280, %v383
  %v385 = vpop.f32.mrb[0].mxu0
  %386 = vmatprep.mubr.f32.mxu0 0.0
  %387 = vmatmul.mubr.f32.gmra.mrb[0].mxu0 %v251
  %v388 = vpop.f32.mrb[0].mxu0
  %v389 = vadd.f32 %v280, %v388
  %v390 = vpop.f32.mrb[0].mxu0
  %391 = vmatprep.mubr.f32.mxu0 0.0
  %392 = vmatmul.mubr.f32.gmra.mrb[0].mxu0 %v252
  %v393 = vpop.f32.mrb[0].mxu0
  %v394 = vadd.f32 %v280, %v393
  %v395 = vpop.f32.mrb[0].mxu0
  %396 = vmatprep.mubr.f32.mxu0 0.0
  %397 = vmatmul.mubr.f32.gmra.mrb[0].mxu0 %v253
  %v398 = vpop.f32.mrb[0].mxu0
  %v399 = vadd.f32 %v280, %v398
  %v400 = vpop.f32.mrb[0].mxu0
  %401 = vmatprep.mubr.f32.mxu0 0.0
  %402 = vmatmul.mubr.f32.gmra.mrb[0].mxu0 %v254
  %v403 = vpop.f32.mrb[0].mxu0
  %v404 = vadd.f32 %v280, %v403
  %v405 = vpop.f32.mrb[0].mxu0
  %406 = vmatprep.mubr.f32.mxu0 0.0
  %407 = vmatmul.mubr.f32.gmra.mrb[0].mxu0 %v255
  %v408 = vpop.f32.mrb[0].mxu0
  %v409 = vadd.f32 %v280, %v408
  %v410 = vpop.f32.mrb[0].mxu0
  %411 = vmatprep.mubr.f32.mxu0 0.0
  %412 = vmatmul.mubr.f32.gmra.mrb[0].mxu0 %v256
  %v413 = vpop.f32.mrb[0].mxu0
  %v414 = vadd.f32 %v280, %v413
  %v415 = vpop.f32.mrb[0].mxu0
  %416 = vmatprep.mubr.f32.mxu0 0.0
  %417 = vmatmul.mubr.f32.gmra.mrb[0].mxu0 %v257
  %v418 = vpop.f32.mrb[0].mxu0
  %v419 = vadd.f32 %v280, %v418
  %v420 = vpop.f32.mrb[0].mxu0
  %421 = vmatprep.mubr.f32.mxu0 0.0
  %422 = vmatmul.mubr.f32.gmra.mrb[0].mxu0 %v258
  %v423 = vpop.f32.mrb[0].mxu0
  %v424 = vadd.f32 %v280, %v423
  %v425 = vpop.f32.mrb[0].mxu0
  %426 = vdwg.mxu0
  %427 = vst [vmem:[%s5] sm:$0xff] %v349
  %428 = vst [vmem:[%s5 + $0x8] sm:$0xff] %v354
  %429 = vst [vmem:[%s5 + $0x10] sm:$0xff] %v359
  %430 = vst [vmem:[%s5 + $0x18] sm:$0xff] %v364
  %431 = vst [vmem:[%s5 + $0x20] sm:$0xff] %v369
  %432 = vst [vmem:[%s5 + $0x28] sm:$0xff] %v374
  %433 = vst [vmem:[%s5 + $0x30] sm:$0xff] %v379
  %434 = vst [vmem:[%s5 + $0x38] sm:$0xff] %v384
  %435 = vst [vmem:[%s5 + $0x40] sm:$0xff] %v389
  %436 = vst [vmem:[%s5 + $0x48] sm:$0xff] %v394
  %437 = vst [vmem:[%s5 + $0x50] sm:$0xff] %v399
  %438 = vst [vmem:[%s5 + $0x58] sm:$0xff] %v404
  %439 = vst [vmem:[%s5 + $0x60] sm:$0xff] %v409
  %440 = vst [vmem:[%s5 + $0x68] sm:$0xff] %v414
  %441 = vst [vmem:[%s5 + $0x70] sm:$0xff] %v419
  %442 = vst [vmem:[%s5 + $0x78] sm:$0xff] %v424
  // Predicated region
  $region22: #{_lambda_.6} parent=0 // pred_check
    _
  $region23: #{_lambda_.6} parent=0 // pred_check_branch
    %444 = sbr.rel (0) target = $region25
  $region24: #{_lambda_.6} parent=0 // pred_region
    _
  $region25: #{_lambda_.6} parent=0 // pred_fallthru
    _
  // Predicated region
  $region26: #{_lambda_.6} parent=0 // pred_check
    _
  $region27: #{_lambda_.6} parent=0 // pred_check_branch
    %446 = sbr.rel (0) target = $region29
  $region28: #{_lambda_.6} parent=0 // pred_region
    _
  $region29: #{_lambda_.6} parent=0 // pred_fallthru
    _

// kernel: _lambda_.7
$region0: #{_lambda_.7}
  #allocation0 [shape = 'u32[]', space=smem, size = 0x4, offset = 0x4, fixed_abs, tag = 'smem constant byte address 0x4 - core index']
  #allocation1 [shape = 'u32[144,128]{1,0:T(1,128)}', space=vmem, size = 0x12000, scoped, tag = 'internal scratch']
  %s0 = inlined_call_operand.vmem [shape: f32[8,4,128], index: 0, kind: input, shape index: {}]
  %s1 = inlined_call_operand.vmem [shape: f32[2,8,128,128], index: 1, kind: input, shape index: {}]
  %s2 = inlined_call_operand.vmem [shape: f32[8,2,128], index: 2, kind: output, shape index: {0}]
  %s3 = inlined_call_operand.vmem [shape: f32[8,2,128], index: 3, kind: output, shape index: {1}]
  %4 = xla_tuple %s2, %s3
  %s5 = sld [smem:[#allocation0]]
  $region26: #{_lambda_.7} parent=0
    _
  %s7 = ssub.s32 1, %s5
  %s8 = scalar_select 0, %s7, %s5
  // Predicated region
  $region2: #{_lambda_.7} parent=0 // pred_check
    _
  $region3: #{_lambda_.7} parent=0 // pred_check_branch
    %10 = sbr.rel (0) target = $region5
  $region4: #{_lambda_.7} parent=0 // pred_region
    _
  $region5: #{_lambda_.7} parent=0 // pred_fallthru
    _
  // Predicated region
  $region6: #{_lambda_.7} parent=0 // pred_check
    _
  $region7: #{_lambda_.7} parent=0 // pred_check_branch
    %12 = sbr.rel (0) target = $region9
  $region8: #{_lambda_.7} parent=0 // pred_region
    _
  $region9: #{_lambda_.7} parent=0 // pred_fallthru
    _
  %v13 = vld [vmem:[%s0] sm:$0xf]
  %v14 = vld [vmem:[%s0 + $0x4] sm:$0xf]
  %v15 = vld [vmem:[%s0 + $0x8] sm:$0xf]
  %v16 = vld [vmem:[%s0 + $0xc] sm:$0xf]
  %v17 = vld [vmem:[%s0 + $0x10] sm:$0xf]
  %v18 = vld [vmem:[%s0 + $0x14] sm:$0xf]
  %v19 = vld [vmem:[%s0 + $0x18] sm:$0xf]
  %v20 = vld [vmem:[%s0 + $0x1c] sm:$0xf]
  %v21 = vld [vmem:[%s1] sm:$0xff]
  %v22 = vld [vmem:[%s1 + $0x8] sm:$0xff]
  %v23 = vld [vmem:[%s1 + $0x10] sm:$0xff]
  %v24 = vld [vmem:[%s1 + $0x18] sm:$0xff]
  %v25 = vld [vmem:[%s1 + $0x20] sm:$0xff]
  %v26 = vld [vmem:[%s1 + $0x28] sm:$0xff]
  %v27 = vld [vmem:[%s1 + $0x30] sm:$0xff]
  %v28 = vld [vmem:[%s1 + $0x38] sm:$0xff]
  %v29 = vld [vmem:[%s1 + $0x40] sm:$0xff]
  %v30 = vld [vmem:[%s1 + $0x48] sm:$0xff]
  %v31 = vld [vmem:[%s1 + $0x50] sm:$0xff]
  %v32 = vld [vmem:[%s1 + $0x58] sm:$0xff]
  %v33 = vld [vmem:[%s1 + $0x60] sm:$0xff]
  %v34 = vld [vmem:[%s1 + $0x68] sm:$0xff]
  %v35 = vld [vmem:[%s1 + $0x70] sm:$0xff]
  %v36 = vld [vmem:[%s1 + $0x78] sm:$0xff]
  %v37 = vld [vmem:[%s1 + $0x80] sm:$0xff]
  %v38 = vld [vmem:[%s1 + $0x88] sm:$0xff]
  %v39 = vld [vmem:[%s1 + $0x90] sm:$0xff]
  %v40 = vld [vmem:[%s1 + $0x98] sm:$0xff]
  %v41 = vld [vmem:[%s1 + $0xa0] sm:$0xff]
  %v42 = vld [vmem:[%s1 + $0xa8] sm:$0xff]
  %v43 = vld [vmem:[%s1 + $0xb0] sm:$0xff]
  %v44 = vld [vmem:[%s1 + $0xb8] sm:$0xff]
  %v45 = vld [vmem:[%s1 + $0xc0] sm:$0xff]
  %v46 = vld [vmem:[%s1 + $0xc8] sm:$0xff]
  %v47 = vld [vmem:[%s1 + $0xd0] sm:$0xff]
  %v48 = vld [vmem:[%s1 + $0xd8] sm:$0xff]
  %v49 = vld [vmem:[%s1 + $0xe0] sm:$0xff]
  %v50 = vld [vmem:[%s1 + $0xe8] sm:$0xff]
  %v51 = vld [vmem:[%s1 + $0xf0] sm:$0xff]
  %v52 = vld [vmem:[%s1 + $0xf8] sm:$0xff]
  %v53 = vld [vmem:[%s1 + $0x100] sm:$0xff]
  %v54 = vld [vmem:[%s1 + $0x108] sm:$0xff]
  %v55 = vld [vmem:[%s1 + $0x110] sm:$0xff]
  %v56 = vld [vmem:[%s1 + $0x118] sm:$0xff]
  %v57 = vld [vmem:[%s1 + $0x120] sm:$0xff]
  %v58 = vld [vmem:[%s1 + $0x128] sm:$0xff]
  %v59 = vld [vmem:[%s1 + $0x130] sm:$0xff]
  %v60 = vld [vmem:[%s1 + $0x138] sm:$0xff]
  %v61 = vld [vmem:[%s1 + $0x140] sm:$0xff]
  %v62 = vld [vmem:[%s1 + $0x148] sm:$0xff]
  %v63 = vld [vmem:[%s1 + $0x150] sm:$0xff]
  %v64 = vld [vmem:[%s1 + $0x158] sm:$0xff]
  %v65 = vld [vmem:[%s1 + $0x160] sm:$0xff]
  %v66 = vld [vmem:[%s1 + $0x168] sm:$0xff]
  %v67 = vld [vmem:[%s1 + $0x170] sm:$0xff]
  %v68 = vld [vmem:[%s1 + $0x178] sm:$0xff]
  %v69 = vld [vmem:[%s1 + $0x180] sm:$0xff]
  %v70 = vld [vmem:[%s1 + $0x188] sm:$0xff]
  %v71 = vld [vmem:[%s1 + $0x190] sm:$0xff]
  %v72 = vld [vmem:[%s1 + $0x198] sm:$0xff]
  %v73 = vld [vmem:[%s1 + $0x1a0] sm:$0xff]
  %v74 = vld [vmem:[%s1 + $0x1a8] sm:$0xff]
  %v75 = vld [vmem:[%s1 + $0x1b0] sm:$0xff]
  %v76 = vld [vmem:[%s1 + $0x1b8] sm:$0xff]
  %v77 = vld [vmem:[%s1 + $0x1c0] sm:$0xff]
  %v78 = vld [vmem:[%s1 + $0x1c8] sm:$0xff]
  %v79 = vld [vmem:[%s1 + $0x1d0] sm:$0xff]
  %v80 = vld [vmem:[%s1 + $0x1d8] sm:$0xff]
  %v81 = vld [vmem:[%s1 + $0x1e0] sm:$0xff]
  %v82 = vld [vmem:[%s1 + $0x1e8] sm:$0xff]
  %v83 = vld [vmem:[%s1 + $0x1f0] sm:$0xff]
  %v84 = vld [vmem:[%s1 + $0x1f8] sm:$0xff]
  %v85 = vld [vmem:[%s1 + $0x200] sm:$0xff]
  %v86 = vld [vmem:[%s1 + $0x208] sm:$0xff]
  %v87 = vld [vmem:[%s1 + $0x210] sm:$0xff]
  %v88 = vld [vmem:[%s1 + $0x218] sm:$0xff]
  %v89 = vld [vmem:[%s1 + $0x220] sm:$0xff]
  %v90 = vld [vmem:[%s1 + $0x228] sm:$0xff]
  %v91 = vld [vmem:[%s1 + $0x230] sm:$0xff]
  %v92 = vld [vmem:[%s1 + $0x238] sm:$0xff]
  %v93 = vld [vmem:[%s1 + $0x240] sm:$0xff]
  %v94 = vld [vmem:[%s1 + $0x248] sm:$0xff]
  %v95 = vld [vmem:[%s1 + $0x250] sm:$0xff]
  %v96 = vld [vmem:[%s1 + $0x258] sm:$0xff]
  %v97 = vld [vmem:[%s1 + $0x260] sm:$0xff]
  %v98 = vld [vmem:[%s1 + $0x268] sm:$0xff]
  %v99 = vld [vmem:[%s1 + $0x270] sm:$0xff]
  %v100 = vld [vmem:[%s1 + $0x278] sm:$0xff]
  %v101 = vld [vmem:[%s1 + $0x280] sm:$0xff]
  %v102 = vld [vmem:[%s1 + $0x288] sm:$0xff]
  %v103 = vld [vmem:[%s1 + $0x290] sm:$0xff]
  %v104 = vld [vmem:[%s1 + $0x298] sm:$0xff]
  %v105 = vld [vmem:[%s1 + $0x2a0] sm:$0xff]
  %v106 = vld [vmem:[%s1 + $0x2a8] sm:$0xff]
  %v107 = vld [vmem:[%s1 + $0x2b0] sm:$0xff]
  %v108 = vld [vmem:[%s1 + $0x2b8] sm:$0xff]
  %v109 = vld [vmem:[%s1 + $0x2c0] sm:$0xff]
  %v110 = vld [vmem:[%s1 + $0x2c8] sm:$0xff]
  %v111 = vld [vmem:[%s1 + $0x2d0] sm:$0xff]
  %v112 = vld [vmem:[%s1 + $0x2d8] sm:$0xff]
  %v113 = vld [vmem:[%s1 + $0x2e0] sm:$0xff]
  %v114 = vld [vmem:[%s1 + $0x2e8] sm:$0xff]
  %v115 = vld [vmem:[%s1 + $0x2f0] sm:$0xff]
  %v116 = vld [vmem:[%s1 + $0x2f8] sm:$0xff]
  %v117 = vld [vmem:[%s1 + $0x300] sm:$0xff]
  %v118 = vld [vmem:[%s1 + $0x308] sm:$0xff]
  %v119 = vld [vmem:[%s1 + $0x310] sm:$0xff]
  %v120 = vld [vmem:[%s1 + $0x318] sm:$0xff]
  %v121 = vld [vmem:[%s1 + $0x320] sm:$0xff]
  %v122 = vld [vmem:[%s1 + $0x328] sm:$0xff]
  %v123 = vld [vmem:[%s1 + $0x330] sm:$0xff]
  %v124 = vld [vmem:[%s1 + $0x338] sm:$0xff]
  %v125 = vld [vmem:[%s1 + $0x340] sm:$0xff]
  %v126 = vld [vmem:[%s1 + $0x348] sm:$0xff]
  %v127 = vld [vmem:[%s1 + $0x350] sm:$0xff]
  %v128 = vld [vmem:[%s1 + $0x358] sm:$0xff]
  %v129 = vld [vmem:[%s1 + $0x360] sm:$0xff]
  %v130 = vld [vmem:[%s1 + $0x368] sm:$0xff]
  %v131 = vld [vmem:[%s1 + $0x370] sm:$0xff]
  %v132 = vld [vmem:[%s1 + $0x378] sm:$0xff]
  %v133 = vld [vmem:[%s1 + $0x380] sm:$0xff]
  %v134 = vld [vmem:[%s1 + $0x388] sm:$0xff]
  %v135 = vld [vmem:[%s1 + $0x390] sm:$0xff]
  %v136 = vld [vmem:[%s1 + $0x398] sm:$0xff]
  %v137 = vld [vmem:[%s1 + $0x3a0] sm:$0xff]
  %v138 = vld [vmem:[%s1 + $0x3a8] sm:$0xff]
  %v139 = vld [vmem:[%s1 + $0x3b0] sm:$0xff]
  %v140 = vld [vmem:[%s1 + $0x3b8] sm:$0xff]
  %v141 = vld [vmem:[%s1 + $0x3c0] sm:$0xff]
  %v142 = vld [vmem:[%s1 + $0x3c8] sm:$0xff]
  %v143 = vld [vmem:[%s1 + $0x3d0] sm:$0xff]
  %v144 = vld [vmem:[%s1 + $0x3d8] sm:$0xff]
  %v145 = vld [vmem:[%s1 + $0x3e0] sm:$0xff]
  %v146 = vld [vmem:[%s1 + $0x3e8] sm:$0xff]
  %v147 = vld [vmem:[%s1 + $0x3f0] sm:$0xff]
  %v148 = vld [vmem:[%s1 + $0x3f8] sm:$0xff]
  %149 = vmatprep.subr.mxu0 0.0
  %150 = vmatpush1.msra.mxu0 %v21
  %151 = vmatprep.subr.mxu0 0.0
  %152 = vmatpush1.msra.mxu0 %v22
  %153 = vmatprep.subr.mxu0 0.0
  %154 = vmatpush1.msra.mxu0 %v23
  %155 = vmatprep.subr.mxu0 0.0
  %156 = vmatpush1.msra.mxu0 %v24
  %157 = vmatprep.subr.mxu0 0.0
  %158 = vmatpush1.msra.mxu0 %v25
  %159 = vmatprep.subr.mxu0 0.0
  %160 = vmatpush1.msra.mxu0 %v26
  %161 = vmatprep.subr.mxu0 0.0
  %162 = vmatpush1.msra.mxu0 %v27
  %163 = vmatprep.subr.mxu0 0.0
  %164 = vmatpush1.msra.mxu0 %v28
  %165 = vmatprep.subr.mxu0 0.0
  %166 = vmatpush1.msra.mxu0 %v29
  %167 = vmatprep.subr.mxu0 0.0
  %168 = vmatpush1.msra.mxu0 %v30
  %169 = vmatprep.subr.mxu0 0.0
  %170 = vmatpush1.msra.mxu0 %v31
  %171 = vmatprep.subr.mxu0 0.0
  %172 = vmatpush1.msra.mxu0 %v32
  %173 = vmatprep.subr.mxu0 0.0
  %174 = vmatpush1.msra.mxu0 %v33
  %175 = vmatprep.subr.mxu0 0.0
  %176 = vmatpush1.msra.mxu0 %v34
  %177 = vmatprep.subr.mxu0 0.0
  %178 = vmatpush1.msra.mxu0 %v35
  %179 = vmatprep.subr.mxu0 0.0
  %180 = vmatpush1.msra.mxu0 %v36
  %181 = vmatprep.subr.mxu0 0.0
  %182 = vmatpush1.msra.mxu0 0.0
  %183 = vmatprep.subr.mxu0 0.0
  %184 = vmatpush1.msra.mxu0 0.0
  %185 = vmatprep.subr.mxu0 0.0
  %186 = vmatpush1.msra.mxu0 0.0
  %187 = vmatprep.subr.mxu0 0.0
  %188 = vmatpush1.msra.mxu0 0.0
  %189 = vmatprep.subr.mxu0 0.0
  %190 = vmatpush1.msra.mxu0 0.0
  %191 = vmatprep.subr.mxu0 0.0
  %192 = vmatpush1.msra.mxu0 0.0
  %193 = vmatprep.subr.mxu0 0.0
  %194 = vmatpush1.msra.mxu0 0.0
  %195 = vmatprep.subr.mxu0 0.0
  %196 = vmatpush1.msra.mxu0 0.0
  %197 = vmatprep.subr.mxu0 0.0
  %198 = vmatpush1.msra.mxu0 0.0
  %199 = vmatprep.subr.mxu0 0.0
  %200 = vmatpush1.msra.mxu0 0.0
  %201 = vmatprep.subr.mxu0 0.0
  %202 = vmatpush1.msra.mxu0 0.0
  %203 = vmatprep.subr.mxu0 0.0
  %204 = vmatpush1.msra.mxu0 0.0
  %205 = vmatprep.subr.mxu0 0.0
  %206 = vmatpush1.msra.mxu0 0.0
  %207 = vmatprep.subr.mxu0 0.0
  %208 = vmatpush1.msra.mxu0 0.0
  %209 = vmatprep.subr.mxu0 0.0
  %210 = vmatpush1.msra.mxu0 0.0
  %211 = vmatprep.subr.mxu0 0.0
  %212 = vmatpush1.msra.mxu0 0.0
  %213 = vmatprep.mubr.f32.mxu0 0.0
  %214 = vmatmul.mubr.f32.gmra.mrb[0].mxu0 %v13
  %v215 = vpop.f32.mrb[0].mxu0
  %v216 = vadd.f32 0.0, %v215
  %v217 = vpop.f32.mrb[0].mxu0
  %218 = vdwg.mxu0
  %219 = vmatprep.subr.mxu0 0.0
  %220 = vmatpush1.msra.mxu0 %v37
  %221 = vmatprep.subr.mxu0 0.0
  %222 = vmatpush1.msra.mxu0 %v38
  %223 = vmatprep.subr.mxu0 0.0
  %224 = vmatpush1.msra.mxu0 %v39
  %225 = vmatprep.subr.mxu0 0.0
  %226 = vmatpush1.msra.mxu0 %v40
  %227 = vmatprep.subr.mxu0 0.0
  %228 = vmatpush1.msra.mxu0 %v41
  %229 = vmatprep.subr.mxu0 0.0
  %230 = vmatpush1.msra.mxu0 %v42
  %231 = vmatprep.subr.mxu0 0.0
  %232 = vmatpush1.msra.mxu0 %v43
  %233 = vmatprep.subr.mxu0 0.0
  %234 = vmatpush1.msra.mxu0 %v44
  %235 = vmatprep.subr.mxu0 0.0
  %236 = vmatpush1.msra.mxu0 %v45
  %237 = vmatprep.subr.mxu0 0.0
  %238 = vmatpush1.msra.mxu0 %v46
  %239 = vmatprep.subr.mxu0 0.0
  %240 = vmatpush1.msra.mxu0 %v47
  %241 = vmatprep.subr.mxu0 0.0
  %242 = vmatpush1.msra.mxu0 %v48
  %243 = vmatprep.subr.mxu0 0.0
  %244 = vmatpush1.msra.mxu0 %v49
  %245 = vmatprep.subr.mxu0 0.0
  %246 = vmatpush1.msra.mxu0 %v50
  %247 = vmatprep.subr.mxu0 0.0
  %248 = vmatpush1.msra.mxu0 %v51
  %249 = vmatprep.subr.mxu0 0.0
  %250 = vmatpush1.msra.mxu0 %v52
  %251 = vmatprep.subr.mxu0 0.0
  %252 = vmatpush1.msra.mxu0 0.0
  %253 = vmatprep.subr.mxu0 0.0
  %254 = vmatpush1.msra.mxu0 0.0
  %255 = vmatprep.subr.mxu0 0.0
  %256 = vmatpush1.msra.mxu0 0.0
  %257 = vmatprep.subr.mxu0 0.0
  %258 = vmatpush1.msra.mxu0 0.0
  %259 = vmatprep.subr.mxu0 0.0
  %260 = vmatpush1.msra.mxu0 0.0
  %261 = vmatprep.subr.mxu0 0.0
  %262 = vmatpush1.msra.mxu0 0.0
  %263 = vmatprep.subr.mxu0 0.0
  %264 = vmatpush1.msra.mxu0 0.0
  %265 = vmatprep.subr.mxu0 0.0
  %266 = vmatpush1.msra.mxu0 0.0
  %267 = vmatprep.subr.mxu0 0.0
  %268 = vmatpush1.msra.mxu0 0.0
  %269 = vmatprep.subr.mxu0 0.0
  %270 = vmatpush1.msra.mxu0 0.0
  %271 = vmatprep.subr.mxu0 0.0
  %272 = vmatpush1.msra.mxu0 0.0
  %273 = vmatprep.subr.mxu0 0.0
  %274 = vmatpush1.msra.mxu0 0.0
  %275 = vmatprep.subr.mxu0 0.0
  %276 = vmatpush1.msra.mxu0 0.0
  %277 = vmatprep.subr.mxu0 0.0
  %278 = vmatpush1.msra.mxu0 0.0
  %279 = vmatprep.subr.mxu0 0.0
  %280 = vmatpush1.msra.mxu0 0.0
  %281 = vmatprep.subr.mxu0 0.0
  %282 = vmatpush1.msra.mxu0 0.0
  %283 = vmatprep.mubr.f32.mxu0 0.0
  %284 = vmatmul.mubr.f32.gmra.mrb[0].mxu0 %v14
  %v285 = vpop.f32.mrb[0].mxu0
  %v286 = vadd.f32 0.0, %v285
  %v287 = vpop.f32.mrb[0].mxu0
  %288 = vdwg.mxu0
  %289 = vmatprep.subr.mxu0 0.0
  %290 = vmatpush1.msra.mxu0 %v53
  %291 = vmatprep.subr.mxu0 0.0
  %292 = vmatpush1.msra.mxu0 %v54
  %293 = vmatprep.subr.mxu0 0.0
  %294 = vmatpush1.msra.mxu0 %v55
  %295 = vmatprep.subr.mxu0 0.0
  %296 = vmatpush1.msra.mxu0 %v56
  %297 = vmatprep.subr.mxu0 0.0
  %298 = vmatpush1.msra.mxu0 %v57
  %299 = vmatprep.subr.mxu0 0.0
  %300 = vmatpush1.msra.mxu0 %v58
  %301 = vmatprep.subr.mxu0 0.0
  %302 = vmatpush1.msra.mxu0 %v59
  %303 = vmatprep.subr.mxu0 0.0
  %304 = vmatpush1.msra.mxu0 %v60
  %305 = vmatprep.subr.mxu0 0.0
  %306 = vmatpush1.msra.mxu0 %v61
  %307 = vmatprep.subr.mxu0 0.0
  %308 = vmatpush1.msra.mxu0 %v62
  %309 = vmatprep.subr.mxu0 0.0
  %310 = vmatpush1.msra.mxu0 %v63
  %311 = vmatprep.subr.mxu0 0.0
  %312 = vmatpush1.msra.mxu0 %v64
  %313 = vmatprep.subr.mxu0 0.0
  %314 = vmatpush1.msra.mxu0 %v65
  %315 = vmatprep.subr.mxu0 0.0
  %316 = vmatpush1.msra.mxu0 %v66
  %317 = vmatprep.subr.mxu0 0.0
  %318 = vmatpush1.msra.mxu0 %v67
  %319 = vmatprep.subr.mxu0 0.0
  %320 = vmatpush1.msra.mxu0 %v68
  %321 = vmatprep.subr.mxu0 0.0
  %322 = vmatpush1.msra.mxu0 0.0
  %323 = vmatprep.subr.mxu0 0.0
  %324 = vmatpush1.msra.mxu0 0.0
  %325 = vmatprep.subr.mxu0 0.0
  %326 = vmatpush1.msra.mxu0 0.0
  %327 = vmatprep.subr.mxu0 0.0
  %328 = vmatpush1.msra.mxu0 0.0
  %329 = vmatprep.subr.mxu0 0.0
  %330 = vmatpush1.msra.mxu0 0.0
  %331 = vmatprep.subr.mxu0 0.0
  %332 = vmatpush1.msra.mxu0 0.0
  %333 = vmatprep.subr.mxu0 0.0
  %334 = vmatpush1.msra.mxu0 0.0
  %335 = vmatprep.subr.mxu0 0.0
  %336 = vmatpush1.msra.mxu0 0.0
  %337 = vmatprep.subr.mxu0 0.0
  %338 = vmatpush1.msra.mxu0 0.0
  %339 = vmatprep.subr.mxu0 0.0
  %340 = vmatpush1.msra.mxu0 0.0
  %341 = vmatprep.subr.mxu0 0.0
  %342 = vmatpush1.msra.mxu0 0.0
  %343 = vmatprep.subr.mxu0 0.0
  %344 = vmatpush1.msra.mxu0 0.0
  %345 = vmatprep.subr.mxu0 0.0
  %346 = vmatpush1.msra.mxu0 0.0
  %347 = vmatprep.subr.mxu0 0.0
  %348 = vmatpush1.msra.mxu0 0.0
  %349 = vmatprep.subr.mxu0 0.0
  %350 = vmatpush1.msra.mxu0 0.0
  %351 = vmatprep.subr.mxu0 0.0
  %352 = vmatpush1.msra.mxu0 0.0
  %353 = vmatprep.mubr.f32.mxu0 0.0
  %354 = vmatmul.mubr.f32.gmra.mrb[0].mxu0 %v15
  %v355 = vpop.f32.mrb[0].mxu0
  %v356 = vadd.f32 0.0, %v355
  %v357 = vpop.f32.mrb[0].mxu0
  %358 = vdwg.mxu0
  %359 = vmatprep.subr.mxu0 0.0
  %360 = vmatpush1.msra.mxu0 %v69
  %361 = vmatprep.subr.mxu0 0.0
  %362 = vmatpush1.msra.mxu0 %v70
  %363 = vmatprep.subr.mxu0 0.0
  %364 = vmatpush1.msra.mxu0 %v71
  %365 = vmatprep.subr.mxu0 0.0
  %366 = vmatpush1.msra.mxu0 %v72
  %367 = vmatprep.subr.mxu0 0.0
  %368 = vmatpush1.msra.mxu0 %v73
  %369 = vmatprep.subr.mxu0 0.0
  %370 = vmatpush1.msra.mxu0 %v74
  %371 = vmatprep.subr.mxu0 0.0
  %372 = vmatpush1.msra.mxu0 %v75
  %373 = vmatprep.subr.mxu0 0.0
  %374 = vmatpush1.msra.mxu0 %v76
  %375 = vmatprep.subr.mxu0 0.0
  %376 = vmatpush1.msra.mxu0 %v77
  %377 = vmatprep.subr.mxu0 0.0
  %378 = vmatpush1.msra.mxu0 %v78
  %379 = vmatprep.subr.mxu0 0.0
  %380 = vmatpush1.msra.mxu0 %v79
  %381 = vmatprep.subr.mxu0 0.0
  %382 = vmatpush1.msra.mxu0 %v80
  %383 = vmatprep.subr.mxu0 0.0
  %384 = vmatpush1.msra.mxu0 %v81
  %385 = vmatprep.subr.mxu0 0.0
  %386 = vmatpush1.msra.mxu0 %v82
  %387 = vmatprep.subr.mxu0 0.0
  %388 = vmatpush1.msra.mxu0 %v83
  %389 = vmatprep.subr.mxu0 0.0
  %390 = vmatpush1.msra.mxu0 %v84
  %391 = vmatprep.subr.mxu0 0.0
  %392 = vmatpush1.msra.mxu0 0.0
  %393 = vmatprep.subr.mxu0 0.0
  %394 = vmatpush1.msra.mxu0 0.0
  %395 = vmatprep.subr.mxu0 0.0
  %396 = vmatpush1.msra.mxu0 0.0
  %397 = vmatprep.subr.mxu0 0.0
  %398 = vmatpush1.msra.mxu0 0.0
  %399 = vmatprep.subr.mxu0 0.0
  %400 = vmatpush1.msra.mxu0 0.0
  %401 = vmatprep.subr.mxu0 0.0
  %402 = vmatpush1.msra.mxu0 0.0
  %403 = vmatprep.subr.mxu0 0.0
  %404 = vmatpush1.msra.mxu0 0.0
  %405 = vmatprep.subr.mxu0 0.0
  %406 = vmatpush1.msra.mxu0 0.0
  %407 = vmatprep.subr.mxu0 0.0
  %408 = vmatpush1.msra.mxu0 0.0
  %409 = vmatprep.subr.mxu0 0.0
  %410 = vmatpush1.msra.mxu0 0.0
  %411 = vmatprep.subr.mxu0 0.0
  %412 = vmatpush1.msra.mxu0 0.0
  %413 = vmatprep.subr.mxu0 0.0
  %414 = vmatpush1.msra.mxu0 0.0
  %415 = vmatprep.subr.mxu0 0.0
  %416 = vmatpush1.msra.mxu0 0.0
  %417 = vmatprep.subr.mxu0 0.0
  %418 = vmatpush1.msra.mxu0 0.0
  %419 = vmatprep.subr.mxu0 0.0
  %420 = vmatpush1.msra.mxu0 0.0
  %421 = vmatprep.subr.mxu0 0.0
  %422 = vmatpush1.msra.mxu0 0.0
  %423 = vmatprep.mubr.f32.mxu0 0.0
  %424 = vmatmul.mubr.f32.gmra.mrb[0].mxu0 %v16
  %v425 = vpop.f32.mrb[0].mxu0
  %v426 = vadd.f32 0.0, %v425
  %v427 = vpop.f32.mrb[0].mxu0
  %428 = vdwg.mxu0
  %429 = vmatprep.subr.mxu0 0.0
  %430 = vmatpush1.msra.mxu0 %v85
  %431 = vmatprep.subr.mxu0 0.0
  %432 = vmatpush1.msra.mxu0 %v86
  %433 = vmatprep.subr.mxu0 0.0
  %434 = vmatpush1.msra.mxu0 %v87
  %435 = vmatprep.subr.mxu0 0.0
  %436 = vmatpush1.msra.mxu0 %v88
  %437 = vmatprep.subr.mxu0 0.0
  %438 = vmatpush1.msra.mxu0 %v89
  %439 = vmatprep.subr.mxu0 0.0
  %440 = vmatpush1.msra.mxu0 %v90
  %441 = vmatprep.subr.mxu0 0.0
  %442 = vmatpush1.msra.mxu0 %v91
  %443 = vmatprep.subr.mxu0 0.0
  %444 = vmatpush1.msra.mxu0 %v92
  %445 = vmatprep.subr.mxu0 0.0
  %446 = vmatpush1.msra.mxu0 %v93
  %447 = vmatprep.subr.mxu0 0.0
  %448 = vmatpush1.msra.mxu0 %v94
  %449 = vmatprep.subr.mxu0 0.0
  %450 = vmatpush1.msra.mxu0 %v95
  %451 = vmatprep.subr.mxu0 0.0
  %452 = vmatpush1.msra.mxu0 %v96
  %453 = vmatprep.subr.mxu0 0.0
  %454 = vmatpush1.msra.mxu0 %v97
  %455 = vmatprep.subr.mxu0 0.0
  %456 = vmatpush1.msra.mxu0 %v98
  %457 = vmatprep.subr.mxu0 0.0
  %458 = vmatpush1.msra.mxu0 %v99
  %459 = vmatprep.subr.mxu0 0.0
  %460 = vmatpush1.msra.mxu0 %v100
  %461 = vmatprep.subr.mxu0 0.0
  %462 = vmatpush1.msra.mxu0 0.0
  %463 = vmatprep.subr.mxu0 0.0
  %464 = vmatpush1.msra.mxu0 0.0
  %465 = vmatprep.subr.mxu0 0.0
  %466 = vmatpush1.msra.mxu0 0.0
  %467 = vmatprep.subr.mxu0 0.0
  %468 = vmatpush1.msra.mxu0 0.0
  %469 = vmatprep.subr.mxu0 0.0
  %470 = vmatpush1.msra.mxu0 0.0
  %471 = vmatprep.subr.mxu0 0.0
  %472 = vmatpush1.msra.mxu0 0.0
  %473 = vmatprep.subr.mxu0 0.0
  %474 = vmatpush1.msra.mxu0 0.0
  %475 = vmatprep.subr.mxu0 0.0
  %476 = vmatpush1.msra.mxu0 0.0
  %477 = vmatprep.subr.mxu0 0.0
  %478 = vmatpush1.msra.mxu0 0.0
  %479 = vmatprep.subr.mxu0 0.0
  %480 = vmatpush1.msra.mxu0 0.0
  %481 = vmatprep.subr.mxu0 0.0
  %482 = vmatpush1.msra.mxu0 0.0
  %483 = vmatprep.subr.mxu0 0.0
  %484 = vmatpush1.msra.mxu0 0.0
  %485 = vmatprep.subr.mxu0 0.0
  %486 = vmatpush1.msra.mxu0 0.0
  %487 = vmatprep.subr.mxu0 0.0
  %488 = vmatpush1.msra.mxu0 0.0
  %489 = vmatprep.subr.mxu0 0.0
  %490 = vmatpush1.msra.mxu0 0.0
  %491 = vmatprep.subr.mxu0 0.0
  %492 = vmatpush1.msra.mxu0 0.0
  %493 = vmatprep.mubr.f32.mxu0 0.0
  %494 = vmatmul.mubr.f32.gmra.mrb[0].mxu0 %v17
  %v495 = vpop.f32.mrb[0].mxu0
  %v496 = vadd.f32 0.0, %v495
  %v497 = vpop.f32.mrb[0].mxu0
  %498 = vdwg.mxu0
  %499 = vmatprep.subr.mxu0 0.0
  %500 = vmatpush1.msra.mxu0 %v101
  %501 = vmatprep.subr.mxu0 0.0
  %502 = vmatpush1.msra.mxu0 %v102
  %503 = vmatprep.subr.mxu0 0.0
  %504 = vmatpush1.msra.mxu0 %v103
  %505 = vmatprep.subr.mxu0 0.0
  %506 = vmatpush1.msra.mxu0 %v104
  %507 = vmatprep.subr.mxu0 0.0
  %508 = vmatpush1.msra.mxu0 %v105
  %509 = vmatprep.subr.mxu0 0.0
  %510 = vmatpush1.msra.mxu0 %v106
  %511 = vmatprep.subr.mxu0 0.0
  %512 = vmatpush1.msra.mxu0 %v107
  %513 = vmatprep.subr.mxu0 0.0
  %514 = vmatpush1.msra.mxu0 %v108
  %515 = vmatprep.subr.mxu0 0.0
  %516 = vmatpush1.msra.mxu0 %v109
  %517 = vmatprep.subr.mxu0 0.0
  %518 = vmatpush1.msra.mxu0 %v110
  %519 = vmatprep.subr.mxu0 0.0
  %520 = vmatpush1.msra.mxu0 %v111
  %521 = vmatprep.subr.mxu0 0.0
  %522 = vmatpush1.msra.mxu0 %v112
  %523 = vmatprep.subr.mxu0 0.0
  %524 = vmatpush1.msra.mxu0 %v113
  %525 = vmatprep.subr.mxu0 0.0
  %526 = vmatpush1.msra.mxu0 %v114
  %527 = vmatprep.subr.mxu0 0.0
  %528 = vmatpush1.msra.mxu0 %v115
  %529 = vmatprep.subr.mxu0 0.0
  %530 = vmatpush1.msra.mxu0 %v116
  %531 = vmatprep.subr.mxu0 0.0
  %532 = vmatpush1.msra.mxu0 0.0
  %533 = vmatprep.subr.mxu0 0.0
  %534 = vmatpush1.msra.mxu0 0.0
  %535 = vmatprep.subr.mxu0 0.0
  %536 = vmatpush1.msra.mxu0 0.0
  %537 = vmatprep.subr.mxu0 0.0
  %538 = vmatpush1.msra.mxu0 0.0
  %539 = vmatprep.subr.mxu0 0.0
  %540 = vmatpush1.msra.mxu0 0.0
  %541 = vmatprep.subr.mxu0 0.0
  %542 = vmatpush1.msra.mxu0 0.0
  %543 = vmatprep.subr.mxu0 0.0
  %544 = vmatpush1.msra.mxu0 0.0
  %545 = vmatprep.subr.mxu0 0.0
  %546 = vmatpush1.msra.mxu0 0.0
  %547 = vmatprep.subr.mxu0 0.0
  %548 = vmatpush1.msra.mxu0 0.0
  %549 = vmatprep.subr.mxu0 0.0
  %550 = vmatpush1.msra.mxu0 0.0
  %551 = vmatprep.subr.mxu0 0.0
  %552 = vmatpush1.msra.mxu0 0.0
  %553 = vmatprep.subr.mxu0 0.0
  %554 = vmatpush1.msra.mxu0 0.0
  %555 = vmatprep.subr.mxu0 0.0
  %556 = vmatpush1.msra.mxu0 0.0
  %557 = vmatprep.subr.mxu0 0.0
  %558 = vmatpush1.msra.mxu0 0.0
  %559 = vmatprep.subr.mxu0 0.0
  %560 = vmatpush1.msra.mxu0 0.0
  %561 = vmatprep.subr.mxu0 0.0
  %562 = vmatpush1.msra.mxu0 0.0
  %563 = vmatprep.mubr.f32.mxu0 0.0
  %564 = vmatmul.mubr.f32.gmra.mrb[0].mxu0 %v18
  %v565 = vpop.f32.mrb[0].mxu0
  %v566 = vadd.f32 0.0, %v565
  %v567 = vpop.f32.mrb[0].mxu0
  %568 = vdwg.mxu0
  %569 = vmatprep.subr.mxu0 0.0
  %570 = vmatpush1.msra.mxu0 %v117
  %571 = vmatprep.subr.mxu0 0.0
  %572 = vmatpush1.msra.mxu0 %v118
  %573 = vmatprep.subr.mxu0 0.0
  %574 = vmatpush1.msra.mxu0 %v119
  %575 = vmatprep.subr.mxu0 0.0
  %576 = vmatpush1.msra.mxu0 %v120
  %577 = vmatprep.subr.mxu0 0.0
  %578 = vmatpush1.msra.mxu0 %v121
  %579 = vmatprep.subr.mxu0 0.0
  %580 = vmatpush1.msra.mxu0 %v122
  %581 = vmatprep.subr.mxu0 0.0
  %582 = vmatpush1.msra.mxu0 %v123
  %583 = vmatprep.subr.mxu0 0.0
  %584 = vmatpush1.msra.mxu0 %v124
  %585 = vmatprep.subr.mxu0 0.0
  %586 = vmatpush1.msra.mxu0 %v125
  %587 = vmatprep.subr.mxu0 0.0
  %588 = vmatpush1.msra.mxu0 %v126
  %589 = vmatprep.subr.mxu0 0.0
  %590 = vmatpush1.msra.mxu0 %v127
  %591 = vmatprep.subr.mxu0 0.0
  %592 = vmatpush1.msra.mxu0 %v128
  %593 = vmatprep.subr.mxu0 0.0
  %594 = vmatpush1.msra.mxu0 %v129
  %595 = vmatprep.subr.mxu0 0.0
  %596 = vmatpush1.msra.mxu0 %v130
  %597 = vmatprep.subr.mxu0 0.0
  %598 = vmatpush1.msra.mxu0 %v131
  %599 = vmatprep.subr.mxu0 0.0
  %600 = vmatpush1.msra.mxu0 %v132
  %601 = vmatprep.subr.mxu0 0.0
  %602 = vmatpush1.msra.mxu0 0.0
  %603 = vmatprep.subr.mxu0 0.0
  %604 = vmatpush1.msra.mxu0 0.0
  %605 = vmatprep.subr.mxu0 0.0
  %606 = vmatpush1.msra.mxu0 0.0
  %607 = vmatprep.subr.mxu0 0.0
  %608 = vmatpush1.msra.mxu0 0.0
  %609 = vmatprep.subr.mxu0 0.0
  %610 = vmatpush1.msra.mxu0 0.0
  %611 = vmatprep.subr.mxu0 0.0
  %612 = vmatpush1.msra.mxu0 0.0
  %613 = vmatprep.subr.mxu0 0.0
  %614 = vmatpush1.msra.mxu0 0.0
  %615 = vmatprep.subr.mxu0 0.0
  %616 = vmatpush1.msra.mxu0 0.0
  %617 = vmatprep.subr.mxu0 0.0
  %618 = vmatpush1.msra.mxu0 0.0
  %619 = vmatprep.subr.mxu0 0.0
  %620 = vmatpush1.msra.mxu0 0.0
  %621 = vmatprep.subr.mxu0 0.0
  %622 = vmatpush1.msra.mxu0 0.0
  %623 = vmatprep.subr.mxu0 0.0
  %624 = vmatpush1.msra.mxu0 0.0
  %625 = vmatprep.subr.mxu0 0.0
  %626 = vmatpush1.msra.mxu0 0.0
  %627 = vmatprep.subr.mxu0 0.0
  %628 = vmatpush1.msra.mxu0 0.0
  %629 = vmatprep.subr.mxu0 0.0
  %630 = vmatpush1.msra.mxu0 0.0
  %631 = vmatprep.subr.mxu0 0.0
  %632 = vmatpush1.msra.mxu0 0.0
  %633 = vmatprep.mubr.f32.mxu0 0.0
  %634 = vmatmul.mubr.f32.gmra.mrb[0].mxu0 %v19
  %v635 = vpop.f32.mrb[0].mxu0
  %v636 = vadd.f32 0.0, %v635
  %v637 = vpop.f32.mrb[0].mxu0
  %638 = vdwg.mxu0
  %639 = vmatprep.subr.mxu0 0.0
  %640 = vmatpush1.msra.mxu0 %v133
  %641 = vmatprep.subr.mxu0 0.0
  %642 = vmatpush1.msra.mxu0 %v134
  %643 = vmatprep.subr.mxu0 0.0
  %644 = vmatpush1.msra.mxu0 %v135
  %645 = vmatprep.subr.mxu0 0.0
  %646 = vmatpush1.msra.mxu0 %v136
  %647 = vmatprep.subr.mxu0 0.0
  %648 = vmatpush1.msra.mxu0 %v137
  %649 = vmatprep.subr.mxu0 0.0
  %650 = vmatpush1.msra.mxu0 %v138
  %651 = vmatprep.subr.mxu0 0.0
  %652 = vmatpush1.msra.mxu0 %v139
  %653 = vmatprep.subr.mxu0 0.0
  %654 = vmatpush1.msra.mxu0 %v140
  %655 = vmatprep.subr.mxu0 0.0
  %656 = vmatpush1.msra.mxu0 %v141
  %657 = vmatprep.subr.mxu0 0.0
  %658 = vmatpush1.msra.mxu0 %v142
  %659 = vmatprep.subr.mxu0 0.0
  %660 = vmatpush1.msra.mxu0 %v143
  %661 = vmatprep.subr.mxu0 0.0
  %662 = vmatpush1.msra.mxu0 %v144
  %663 = vmatprep.subr.mxu0 0.0
  %664 = vmatpush1.msra.mxu0 %v145
  %665 = vmatprep.subr.mxu0 0.0
  %666 = vmatpush1.msra.mxu0 %v146
  %667 = vmatprep.subr.mxu0 0.0
  %668 = vmatpush1.msra.mxu0 %v147
  %669 = vmatprep.subr.mxu0 0.0
  %670 = vmatpush1.msra.mxu0 %v148
  %671 = vmatprep.subr.mxu0 0.0
  %672 = vmatpush1.msra.mxu0 0.0
  %673 = vmatprep.subr.mxu0 0.0
  %674 = vmatpush1.msra.mxu0 0.0
  %675 = vmatprep.subr.mxu0 0.0
  %676 = vmatpush1.msra.mxu0 0.0
  %677 = vmatprep.subr.mxu0 0.0
  %678 = vmatpush1.msra.mxu0 0.0
  %679 = vmatprep.subr.mxu0 0.0
  %680 = vmatpush1.msra.mxu0 0.0
  %681 = vmatprep.subr.mxu0 0.0
  %682 = vmatpush1.msra.mxu0 0.0
  %683 = vmatprep.subr.mxu0 0.0
  %684 = vmatpush1.msra.mxu0 0.0
  %685 = vmatprep.subr.mxu0 0.0
  %686 = vmatpush1.msra.mxu0 0.0
  %687 = vmatprep.subr.mxu0 0.0
  %688 = vmatpush1.msra.mxu0 0.0
  %689 = vmatprep.subr.mxu0 0.0
  %690 = vmatpush1.msra.mxu0 0.0
  %691 = vmatprep.subr.mxu0 0.0
  %692 = vmatpush1.msra.mxu0 0.0
  %693 = vmatprep.subr.mxu0 0.0
  %694 = vmatpush1.msra.mxu0 0.0
  %695 = vmatprep.subr.mxu0 0.0
  %696 = vmatpush1.msra.mxu0 0.0
  %697 = vmatprep.subr.mxu0 0.0
  %698 = vmatpush1.msra.mxu0 0.0
  %699 = vmatprep.subr.mxu0 0.0
  %700 = vmatpush1.msra.mxu0 0.0
  %701 = vmatprep.subr.mxu0 0.0
  %702 = vmatpush1.msra.mxu0 0.0
  %703 = vmatprep.mubr.f32.mxu0 0.0
  %704 = vmatmul.mubr.f32.gmra.mrb[0].mxu0 %v20
  %v705 = vpop.f32.mrb[0].mxu0
  %v706 = vadd.f32 0.0, %v705
  %v707 = vpop.f32.mrb[0].mxu0
  %708 = vdwg.mxu0
  %s709 = scalar_lea.vmem %s1, 1024
  %v710 = vld [vmem:[%s709] sm:$0xff]
  %v711 = vld [vmem:[%s709 + $0x8] sm:$0xff]
  %v712 = vld [vmem:[%s709 + $0x10] sm:$0xff]
  %v713 = vld [vmem:[%s709 + $0x18] sm:$0xff]
  %v714 = vld [vmem:[%s709 + $0x20] sm:$0xff]
  %v715 = vld [vmem:[%s709 + $0x28] sm:$0xff]
  %v716 = vld [vmem:[%s709 + $0x30] sm:$0xff]
  %v717 = vld [vmem:[%s709 + $0x38] sm:$0xff]
  %v718 = vld [vmem:[%s709 + $0x40] sm:$0xff]
  %v719 = vld [vmem:[%s709 + $0x48] sm:$0xff]
  %v720 = vld [vmem:[%s709 + $0x50] sm:$0xff]
  %v721 = vld [vmem:[%s709 + $0x58] sm:$0xff]
  %v722 = vld [vmem:[%s709 + $0x60] sm:$0xff]
  %v723 = vld [vmem:[%s709 + $0x68] sm:$0xff]
  %v724 = vld [vmem:[%s709 + $0x70] sm:$0xff]
  %v725 = vld [vmem:[%s709 + $0x78] sm:$0xff]
  %v726 = vld [vmem:[%s709 + $0x80] sm:$0xff]
  %v727 = vld [vmem:[%s709 + $0x88] sm:$0xff]
  %v728 = vld [vmem:[%s709 + $0x90] sm:$0xff]
  %v729 = vld [vmem:[%s709 + $0x98] sm:$0xff]
  %v730 = vld [vmem:[%s709 + $0xa0] sm:$0xff]
  %v731 = vld [vmem:[%s709 + $0xa8] sm:$0xff]
  %v732 = vld [vmem:[%s709 + $0xb0] sm:$0xff]
  %v733 = vld [vmem:[%s709 + $0xb8] sm:$0xff]
  %v734 = vld [vmem:[%s709 + $0xc0] sm:$0xff]
  %v735 = vld [vmem:[%s709 + $0xc8] sm:$0xff]
  %v736 = vld [vmem:[%s709 + $0xd0] sm:$0xff]
  %v737 = vld [vmem:[%s709 + $0xd8] sm:$0xff]
  %v738 = vld [vmem:[%s709 + $0xe0] sm:$0xff]
  %v739 = vld [vmem:[%s709 + $0xe8] sm:$0xff]
  %v740 = vld [vmem:[%s709 + $0xf0] sm:$0xff]
  %v741 = vld [vmem:[%s709 + $0xf8] sm:$0xff]
  %v742 = vld [vmem:[%s709 + $0x100] sm:$0xff]
  %v743 = vld [vmem:[%s709 + $0x108] sm:$0xff]
  %v744 = vld [vmem:[%s709 + $0x110] sm:$0xff]
  %v745 = vld [vmem:[%s709 + $0x118] sm:$0xff]
  %v746 = vld [vmem:[%s709 + $0x120] sm:$0xff]
  %v747 = vld [vmem:[%s709 + $0x128] sm:$0xff]
  %v748 = vld [vmem:[%s709 + $0x130] sm:$0xff]
  %v749 = vld [vmem:[%s709 + $0x138] sm:$0xff]
  %v750 = vld [vmem:[%s709 + $0x140] sm:$0xff]
  %v751 = vld [vmem:[%s709 + $0x148] sm:$0xff]
  %v752 = vld [vmem:[%s709 + $0x150] sm:$0xff]
  %v753 = vld [vmem:[%s709 + $0x158] sm:$0xff]
  %v754 = vld [vmem:[%s709 + $0x160] sm:$0xff]
  %v755 = vld [vmem:[%s709 + $0x168] sm:$0xff]
  %v756 = vld [vmem:[%s709 + $0x170] sm:$0xff]
  %v757 = vld [vmem:[%s709 + $0x178] sm:$0xff]
  %v758 = vld [vmem:[%s709 + $0x180] sm:$0xff]
  %v759 = vld [vmem:[%s709 + $0x188] sm:$0xff]
  %v760 = vld [vmem:[%s709 + $0x190] sm:$0xff]
  %v761 = vld [vmem:[%s709 + $0x198] sm:$0xff]
  %v762 = vld [vmem:[%s709 + $0x1a0] sm:$0xff]
  %v763 = vld [vmem:[%s709 + $0x1a8] sm:$0xff]
  %v764 = vld [vmem:[%s709 + $0x1b0] sm:$0xff]
  %v765 = vld [vmem:[%s709 + $0x1b8] sm:$0xff]
  %v766 = vld [vmem:[%s709 + $0x1c0] sm:$0xff]
  %v767 = vld [vmem:[%s709 + $0x1c8] sm:$0xff]
  %v768 = vld [vmem:[%s709 + $0x1d0] sm:$0xff]
  %v769 = vld [vmem:[%s709 + $0x1d8] sm:$0xff]
  %v770 = vld [vmem:[%s709 + $0x1e0] sm:$0xff]
  %v771 = vld [vmem:[%s709 + $0x1e8] sm:$0xff]
  %v772 = vld [vmem:[%s709 + $0x1f0] sm:$0xff]
  %v773 = vld [vmem:[%s709 + $0x1f8] sm:$0xff]
  %v774 = vld [vmem:[%s709 + $0x200] sm:$0xff]
  %v775 = vld [vmem:[%s709 + $0x208] sm:$0xff]
  %v776 = vld [vmem:[%s709 + $0x210] sm:$0xff]
  %v777 = vld [vmem:[%s709 + $0x218] sm:$0xff]
  %v778 = vld [vmem:[%s709 + $0x220] sm:$0xff]
  %v779 = vld [vmem:[%s709 + $0x228] sm:$0xff]
  %v780 = vld [vmem:[%s709 + $0x230] sm:$0xff]
  %v781 = vld [vmem:[%s709 + $0x238] sm:$0xff]
  %v782 = vld [vmem:[%s709 + $0x240] sm:$0xff]
  %v783 = vld [vmem:[%s709 + $0x248] sm:$0xff]
  %v784 = vld [vmem:[%s709 + $0x250] sm:$0xff]
  %v785 = vld [vmem:[%s709 + $0x258] sm:$0xff]
  %v786 = vld [vmem:[%s709 + $0x260] sm:$0xff]
  %v787 = vld [vmem:[%s709 + $0x268] sm:$0xff]
  %v788 = vld [vmem:[%s709 + $0x270] sm:$0xff]
  %v789 = vld [vmem:[%s709 + $0x278] sm:$0xff]
  %v790 = vld [vmem:[%s709 + $0x280] sm:$0xff]
  %v791 = vld [vmem:[%s709 + $0x288] sm:$0xff]
  %v792 = vld [vmem:[%s709 + $0x290] sm:$0xff]
  %v793 = vld [vmem:[%s709 + $0x298] sm:$0xff]
  %v794 = vld [vmem:[%s709 + $0x2a0] sm:$0xff]
  %v795 = vld [vmem:[%s709 + $0x2a8] sm:$0xff]
  %v796 = vld [vmem:[%s709 + $0x2b0] sm:$0xff]
  %v797 = vld [vmem:[%s709 + $0x2b8] sm:$0xff]
  %v798 = vld [vmem:[%s709 + $0x2c0] sm:$0xff]
  %v799 = vld [vmem:[%s709 + $0x2c8] sm:$0xff]
  %v800 = vld [vmem:[%s709 + $0x2d0] sm:$0xff]
  %v801 = vld [vmem:[%s709 + $0x2d8] sm:$0xff]
  %v802 = vld [vmem:[%s709 + $0x2e0] sm:$0xff]
  %v803 = vld [vmem:[%s709 + $0x2e8] sm:$0xff]
  %v804 = vld [vmem:[%s709 + $0x2f0] sm:$0xff]
  %v805 = vld [vmem:[%s709 + $0x2f8] sm:$0xff]
  %v806 = vld [vmem:[%s709 + $0x300] sm:$0xff]
  %v807 = vld [vmem:[%s709 + $0x308] sm:$0xff]
  %v808 = vld [vmem:[%s709 + $0x310] sm:$0xff]
  %v809 = vld [vmem:[%s709 + $0x318] sm:$0xff]
  %v810 = vld [vmem:[%s709 + $0x320] sm:$0xff]
  %v811 = vld [vmem:[%s709 + $0x328] sm:$0xff]
  %v812 = vld [vmem:[%s709 + $0x330] sm:$0xff]
  %v813 = vld [vmem:[%s709 + $0x338] sm:$0xff]
  %v814 = vld [vmem:[%s709 + $0x340] sm:$0xff]
  %v815 = vld [vmem:[%s709 + $0x348] sm:$0xff]
  %v816 = vld [vmem:[%s709 + $0x350] sm:$0xff]
  %v817 = vld [vmem:[%s709 + $0x358] sm:$0xff]
  %v818 = vld [vmem:[%s709 + $0x360] sm:$0xff]
  %v819 = vld [vmem:[%s709 + $0x368] sm:$0xff]
  %v820 = vld [vmem:[%s709 + $0x370] sm:$0xff]
  %v821 = vld [vmem:[%s709 + $0x378] sm:$0xff]
  %v822 = vld [vmem:[%s709 + $0x380] sm:$0xff]
  %v823 = vld [vmem:[%s709 + $0x388] sm:$0xff]
  %v824 = vld [vmem:[%s709 + $0x390] sm:$0xff]
  %v825 = vld [vmem:[%s709 + $0x398] sm:$0xff]
  %v826 = vld [vmem:[%s709 + $0x3a0] sm:$0xff]
  %v827 = vld [vmem:[%s709 + $0x3a8] sm:$0xff]
  %v828 = vld [vmem:[%s709 + $0x3b0] sm:$0xff]
  %v829 = vld [vmem:[%s709 + $0x3b8] sm:$0xff]
  %v830 = vld [vmem:[%s709 + $0x3c0] sm:$0xff]
  %v831 = vld [vmem:[%s709 + $0x3c8] sm:$0xff]
  %v832 = vld [vmem:[%s709 + $0x3d0] sm:$0xff]
  %v833 = vld [vmem:[%s709 + $0x3d8] sm:$0xff]
  %v834 = vld [vmem:[%s709 + $0x3e0] sm:$0xff]
  %v835 = vld [vmem:[%s709 + $0x3e8] sm:$0xff]
  %v836 = vld [vmem:[%s709 + $0x3f0] sm:$0xff]
  %v837 = vld [vmem:[%s709 + $0x3f8] sm:$0xff]
  %838 = vmatprep.subr.mxu0 0.0
  %839 = vmatpush1.msra.mxu0 %v710
  %840 = vmatprep.subr.mxu0 0.0
  %841 = vmatpush1.msra.mxu0 %v711
  %842 = vmatprep.subr.mxu0 0.0
  %843 = vmatpush1.msra.mxu0 %v712
  %844 = vmatprep.subr.mxu0 0.0
  %845 = vmatpush1.msra.mxu0 %v713
  %846 = vmatprep.subr.mxu0 0.0
  %847 = vmatpush1.msra.mxu0 %v714
  %848 = vmatprep.subr.mxu0 0.0
  %849 = vmatpush1.msra.mxu0 %v715
  %850 = vmatprep.subr.mxu0 0.0
  %851 = vmatpush1.msra.mxu0 %v716
  %852 = vmatprep.subr.mxu0 0.0
  %853 = vmatpush1.msra.mxu0 %v717
  %854 = vmatprep.subr.mxu0 0.0
  %855 = vmatpush1.msra.mxu0 %v718
  %856 = vmatprep.subr.mxu0 0.0
  %857 = vmatpush1.msra.mxu0 %v719
  %858 = vmatprep.subr.mxu0 0.0
  %859 = vmatpush1.msra.mxu0 %v720
  %860 = vmatprep.subr.mxu0 0.0
  %861 = vmatpush1.msra.mxu0 %v721
  %862 = vmatprep.subr.mxu0 0.0
  %863 = vmatpush1.msra.mxu0 %v722
  %864 = vmatprep.subr.mxu0 0.0
  %865 = vmatpush1.msra.mxu0 %v723
  %866 = vmatprep.subr.mxu0 0.0
  %867 = vmatpush1.msra.mxu0 %v724
  %868 = vmatprep.subr.mxu0 0.0
  %869 = vmatpush1.msra.mxu0 %v725
  %870 = vmatprep.subr.mxu0 0.0
  %871 = vmatpush1.msra.mxu0 0.0
  %872 = vmatprep.subr.mxu0 0.0
  %873 = vmatpush1.msra.mxu0 0.0
  %874 = vmatprep.subr.mxu0 0.0
  %875 = vmatpush1.msra.mxu0 0.0
  %876 = vmatprep.subr.mxu0 0.0
  %877 = vmatpush1.msra.mxu0 0.0
  %878 = vmatprep.subr.mxu0 0.0
  %879 = vmatpush1.msra.mxu0 0.0
  %880 = vmatprep.subr.mxu0 0.0
  %881 = vmatpush1.msra.mxu0 0.0
  %882 = vmatprep.subr.mxu0 0.0
  %883 = vmatpush1.msra.mxu0 0.0
  %884 = vmatprep.subr.mxu0 0.0
  %885 = vmatpush1.msra.mxu0 0.0
  %886 = vmatprep.subr.mxu0 0.0
  %887 = vmatpush1.msra.mxu0 0.0
  %888 = vmatprep.subr.mxu0 0.0
  %889 = vmatpush1.msra.mxu0 0.0
  %890 = vmatprep.subr.mxu0 0.0
  %891 = vmatpush1.msra.mxu0 0.0
  %892 = vmatprep.subr.mxu0 0.0
  %893 = vmatpush1.msra.mxu0 0.0
  %894 = vmatprep.subr.mxu0 0.0
  %895 = vmatpush1.msra.mxu0 0.0
  %896 = vmatprep.subr.mxu0 0.0
  %897 = vmatpush1.msra.mxu0 0.0
  %898 = vmatprep.subr.mxu0 0.0
  %899 = vmatpush1.msra.mxu0 0.0
  %900 = vmatprep.subr.mxu0 0.0
  %901 = vmatpush1.msra.mxu0 0.0
  %902 = vmatprep.mubr.f32.mxu0 0.0
  %903 = vmatmul.mubr.f32.gmra.mrb[0].mxu0 %v13
  %v904 = vpop.f32.mrb[0].mxu0
  %v905 = vadd.f32 0.0, %v904
  %v906 = vpop.f32.mrb[0].mxu0
  %907 = vdwg.mxu0
  %908 = vmatprep.subr.mxu0 0.0
  %909 = vmatpush1.msra.mxu0 %v726
  %910 = vmatprep.subr.mxu0 0.0
  %911 = vmatpush1.msra.mxu0 %v727
  %912 = vmatprep.subr.mxu0 0.0
  %913 = vmatpush1.msra.mxu0 %v728
  %914 = vmatprep.subr.mxu0 0.0
  %915 = vmatpush1.msra.mxu0 %v729
  %916 = vmatprep.subr.mxu0 0.0
  %917 = vmatpush1.msra.mxu0 %v730
  %918 = vmatprep.subr.mxu0 0.0
  %919 = vmatpush1.msra.mxu0 %v731
  %920 = vmatprep.subr.mxu0 0.0
  %921 = vmatpush1.msra.mxu0 %v732
  %922 = vmatprep.subr.mxu0 0.0
  %923 = vmatpush1.msra.mxu0 %v733
  %924 = vmatprep.subr.mxu0 0.0
  %925 = vmatpush1.msra.mxu0 %v734
  %926 = vmatprep.subr.mxu0 0.0
  %927 = vmatpush1.msra.mxu0 %v735
  %928 = vmatprep.subr.mxu0 0.0
  %929 = vmatpush1.msra.mxu0 %v736
  %930 = vmatprep.subr.mxu0 0.0
  %931 = vmatpush1.msra.mxu0 %v737
  %932 = vmatprep.subr.mxu0 0.0
  %933 = vmatpush1.msra.mxu0 %v738
  %934 = vmatprep.subr.mxu0 0.0
  %935 = vmatpush1.msra.mxu0 %v739
  %936 = vmatprep.subr.mxu0 0.0
  %937 = vmatpush1.msra.mxu0 %v740
  %938 = vmatprep.subr.mxu0 0.0
  %939 = vmatpush1.msra.mxu0 %v741
  %940 = vmatprep.subr.mxu0 0.0
  %941 = vmatpush1.msra.mxu0 0.0
  %942 = vmatprep.subr.mxu0 0.0
  %943 = vmatpush1.msra.mxu0 0.0
  %944 = vmatprep.subr.mxu0 0.0
  %945 = vmatpush1.msra.mxu0 0.0
  %946 = vmatprep.subr.mxu0 0.0
  %947 = vmatpush1.msra.mxu0 0.0
  %948 = vmatprep.subr.mxu0 0.0
  %949 = vmatpush1.msra.mxu0 0.0
  %950 = vmatprep.subr.mxu0 0.0
  %951 = vmatpush1.msra.mxu0 0.0
  %952 = vmatprep.subr.mxu0 0.0
  %953 = vmatpush1.msra.mxu0 0.0
  %954 = vmatprep.subr.mxu0 0.0
  %955 = vmatpush1.msra.mxu0 0.0
  %956 = vmatprep.subr.mxu0 0.0
  %957 = vmatpush1.msra.mxu0 0.0
  %958 = vmatprep.subr.mxu0 0.0
  %959 = vmatpush1.msra.mxu0 0.0
  %960 = vmatprep.subr.mxu0 0.0
  %961 = vmatpush1.msra.mxu0 0.0
  %962 = vmatprep.subr.mxu0 0.0
  %963 = vmatpush1.msra.mxu0 0.0
  %964 = vmatprep.subr.mxu0 0.0
  %965 = vmatpush1.msra.mxu0 0.0
  %966 = vmatprep.subr.mxu0 0.0
  %967 = vmatpush1.msra.mxu0 0.0
  %968 = vmatprep.subr.mxu0 0.0
  %969 = vmatpush1.msra.mxu0 0.0
  %970 = vmatprep.subr.mxu0 0.0
  %971 = vmatpush1.msra.mxu0 0.0
  %972 = vmatprep.mubr.f32.mxu0 0.0
  %973 = vmatmul.mubr.f32.gmra.mrb[0].mxu0 %v14
  %v974 = vpop.f32.mrb[0].mxu0
  %v975 = vadd.f32 0.0, %v974
  %v976 = vpop.f32.mrb[0].mxu0
  %977 = vdwg.mxu0
  %978 = vmatprep.subr.mxu0 0.0
  %979 = vmatpush1.msra.mxu0 %v742
  %980 = vmatprep.subr.mxu0 0.0
  %981 = vmatpush1.msra.mxu0 %v743
  %982 = vmatprep.subr.mxu0 0.0
  %983 = vmatpush1.msra.mxu0 %v744
  %984 = vmatprep.subr.mxu0 0.0
  %985 = vmatpush1.msra.mxu0 %v745
  %986 = vmatprep.subr.mxu0 0.0
  %987 = vmatpush1.msra.mxu0 %v746
  %988 = vmatprep.subr.mxu0 0.0
  %989 = vmatpush1.msra.mxu0 %v747
  %990 = vmatprep.subr.mxu0 0.0
  %991 = vmatpush1.msra.mxu0 %v748
  %992 = vmatprep.subr.mxu0 0.0
  %993 = vmatpush1.msra.mxu0 %v749
  %994 = vmatprep.subr.mxu0 0.0
  %995 = vmatpush1.msra.mxu0 %v750
  %996 = vmatprep.subr.mxu0 0.0
  %997 = vmatpush1.msra.mxu0 %v751
  %998 = vmatprep.subr.mxu0 0.0
  %999 = vmatpush1.msra.mxu0 %v752
  %1000 = vmatprep.subr.mxu0 0.0
  %1001 = vmatpush1.msra.mxu0 %v753
  %1002 = vmatprep.subr.mxu0 0.0
  %1003 = vmatpush1.msra.mxu0 %v754
  %1004 = vmatprep.subr.mxu0 0.0
  %1005 = vmatpush1.msra.mxu0 %v755
  %1006 = vmatprep.subr.mxu0 0.0
  %1007 = vmatpush1.msra.mxu0 %v756
  %1008 = vmatprep.subr.mxu0 0.0
  %1009 = vmatpush1.msra.mxu0 %v757
  %1010 = vmatprep.subr.mxu0 0.0
  %1011 = vmatpush1.msra.mxu0 0.0
  %1012 = vmatprep.subr.mxu0 0.0
  %1013 = vmatpush1.msra.mxu0 0.0
  %1014 = vmatprep.subr.mxu0 0.0
  %1015 = vmatpush1.msra.mxu0 0.0
  %1016 = vmatprep.subr.mxu0 0.0
  %1017 = vmatpush1.msra.mxu0 0.0
  %1018 = vmatprep.subr.mxu0 0.0
  %1019 = vmatpush1.msra.mxu0 0.0
  %1020 = vmatprep.subr.mxu0 0.0
  %1021 = vmatpush1.msra.mxu0 0.0
  %1022 = vmatprep.subr.mxu0 0.0
  %1023 = vmatpush1.msra.mxu0 0.0
  %1024 = vmatprep.subr.mxu0 0.0
  %1025 = vmatpush1.msra.mxu0 0.0
  %1026 = vmatprep.subr.mxu0 0.0
  %1027 = vmatpush1.msra.mxu0 0.0
  %1028 = vmatprep.subr.mxu0 0.0
  %1029 = vmatpush1.msra.mxu0 0.0
  %1030 = vmatprep.subr.mxu0 0.0
  %1031 = vmatpush1.msra.mxu0 0.0
  %1032 = vmatprep.subr.mxu0 0.0
  %1033 = vmatpush1.msra.mxu0 0.0
  %1034 = vmatprep.subr.mxu0 0.0
  %1035 = vmatpush1.msra.mxu0 0.0
  %1036 = vmatprep.subr.mxu0 0.0
  %1037 = vmatpush1.msra.mxu0 0.0
  %1038 = vmatprep.subr.mxu0 0.0
  %1039 = vmatpush1.msra.mxu0 0.0
  %1040 = vmatprep.subr.mxu0 0.0
  %1041 = vmatpush1.msra.mxu0 0.0
  %1042 = vmatprep.mubr.f32.mxu0 0.0
  %1043 = vmatmul.mubr.f32.gmra.mrb[0].mxu0 %v15
  %v1044 = vpop.f32.mrb[0].mxu0
  %v1045 = vadd.f32 0.0, %v1044
  %v1046 = vpop.f32.mrb[0].mxu0
  %1047 = vdwg.mxu0
  %1048 = vmatprep.subr.mxu0 0.0
  %1049 = vmatpush1.msra.mxu0 %v758
  %1050 = vmatprep.subr.mxu0 0.0
  %1051 = vmatpush1.msra.mxu0 %v759
  %1052 = vmatprep.subr.mxu0 0.0
  %1053 = vmatpush1.msra.mxu0 %v760
  %1054 = vmatprep.subr.mxu0 0.0
  %1055 = vmatpush1.msra.mxu0 %v761
  %1056 = vmatprep.subr.mxu0 0.0
  %1057 = vmatpush1.msra.mxu0 %v762
  %1058 = vmatprep.subr.mxu0 0.0
  %1059 = vmatpush1.msra.mxu0 %v763
  %1060 = vmatprep.subr.mxu0 0.0
  %1061 = vmatpush1.msra.mxu0 %v764
  %1062 = vmatprep.subr.mxu0 0.0
  %1063 = vmatpush1.msra.mxu0 %v765
  %1064 = vmatprep.subr.mxu0 0.0
  %1065 = vmatpush1.msra.mxu0 %v766
  %1066 = vmatprep.subr.mxu0 0.0
  %1067 = vmatpush1.msra.mxu0 %v767
  %1068 = vmatprep.subr.mxu0 0.0
  %1069 = vmatpush1.msra.mxu0 %v768
  %1070 = vmatprep.subr.mxu0 0.0
  %1071 = vmatpush1.msra.mxu0 %v769
  %1072 = vmatprep.subr.mxu0 0.0
  %1073 = vmatpush1.msra.mxu0 %v770
  %1074 = vmatprep.subr.mxu0 0.0
  %1075 = vmatpush1.msra.mxu0 %v771
  %1076 = vmatprep.subr.mxu0 0.0
  %1077 = vmatpush1.msra.mxu0 %v772
  %1078 = vmatprep.subr.mxu0 0.0
  %1079 = vmatpush1.msra.mxu0 %v773
  %1080 = vmatprep.subr.mxu0 0.0
  %1081 = vmatpush1.msra.mxu0 0.0
  %1082 = vmatprep.subr.mxu0 0.0
  %1083 = vmatpush1.msra.mxu0 0.0
  %1084 = vmatprep.subr.mxu0 0.0
  %1085 = vmatpush1.msra.mxu0 0.0
  %1086 = vmatprep.subr.mxu0 0.0
  %1087 = vmatpush1.msra.mxu0 0.0
  %1088 = vmatprep.subr.mxu0 0.0
  %1089 = vmatpush1.msra.mxu0 0.0
  %1090 = vmatprep.subr.mxu0 0.0
  %1091 = vmatpush1.msra.mxu0 0.0
  %1092 = vmatprep.subr.mxu0 0.0
  %1093 = vmatpush1.msra.mxu0 0.0
  %1094 = vmatprep.subr.mxu0 0.0
  %1095 = vmatpush1.msra.mxu0 0.0
  %1096 = vmatprep.subr.mxu0 0.0
  %1097 = vmatpush1.msra.mxu0 0.0
  %1098 = vmatprep.subr.mxu0 0.0
  %1099 = vmatpush1.msra.mxu0 0.0
  %1100 = vmatprep.subr.mxu0 0.0
  %1101 = vmatpush1.msra.mxu0 0.0
  %1102 = vmatprep.subr.mxu0 0.0
  %1103 = vmatpush1.msra.mxu0 0.0
  %1104 = vmatprep.subr.mxu0 0.0
  %1105 = vmatpush1.msra.mxu0 0.0
  %1106 = vmatprep.subr.mxu0 0.0
  %1107 = vmatpush1.msra.mxu0 0.0
  %1108 = vmatprep.subr.mxu0 0.0
  %1109 = vmatpush1.msra.mxu0 0.0
  %1110 = vmatprep.subr.mxu0 0.0
  %1111 = vmatpush1.msra.mxu0 0.0
  %1112 = vmatprep.mubr.f32.mxu0 0.0
  %1113 = vmatmul.mubr.f32.gmra.mrb[0].mxu0 %v16
  %v1114 = vpop.f32.mrb[0].mxu0
  %v1115 = vadd.f32 0.0, %v1114
  %v1116 = vpop.f32.mrb[0].mxu0
  %1117 = vdwg.mxu0
  %1118 = vmatprep.subr.mxu0 0.0
  %1119 = vmatpush1.msra.mxu0 %v774
  %1120 = vmatprep.subr.mxu0 0.0
  %1121 = vmatpush1.msra.mxu0 %v775
  %1122 = vmatprep.subr.mxu0 0.0
  %1123 = vmatpush1.msra.mxu0 %v776
  %1124 = vmatprep.subr.mxu0 0.0
  %1125 = vmatpush1.msra.mxu0 %v777
  %1126 = vmatprep.subr.mxu0 0.0
  %1127 = vmatpush1.msra.mxu0 %v778
  %1128 = vmatprep.subr.mxu0 0.0
  %1129 = vmatpush1.msra.mxu0 %v779
  %1130 = vmatprep.subr.mxu0 0.0
  %1131 = vmatpush1.msra.mxu0 %v780
  %1132 = vmatprep.subr.mxu0 0.0
  %1133 = vmatpush1.msra.mxu0 %v781
  %1134 = vmatprep.subr.mxu0 0.0
  %1135 = vmatpush1.msra.mxu0 %v782
  %1136 = vmatprep.subr.mxu0 0.0
  %1137 = vmatpush1.msra.mxu0 %v783
  %1138 = vmatprep.subr.mxu0 0.0
  %1139 = vmatpush1.msra.mxu0 %v784
  %1140 = vmatprep.subr.mxu0 0.0
  %1141 = vmatpush1.msra.mxu0 %v785
  %1142 = vmatprep.subr.mxu0 0.0
  %1143 = vmatpush1.msra.mxu0 %v786
  %1144 = vmatprep.subr.mxu0 0.0
  %1145 = vmatpush1.msra.mxu0 %v787
  %1146 = vmatprep.subr.mxu0 0.0
  %1147 = vmatpush1.msra.mxu0 %v788
  %1148 = vmatprep.subr.mxu0 0.0
  %1149 = vmatpush1.msra.mxu0 %v789
  %1150 = vmatprep.subr.mxu0 0.0
  %1151 = vmatpush1.msra.mxu0 0.0
  %1152 = vmatprep.subr.mxu0 0.0
  %1153 = vmatpush1.msra.mxu0 0.0
  %1154 = vmatprep.subr.mxu0 0.0
  %1155 = vmatpush1.msra.mxu0 0.0
  %1156 = vmatprep.subr.mxu0 0.0
  %1157 = vmatpush1.msra.mxu0 0.0
  %1158 = vmatprep.subr.mxu0 0.0
  %1159 = vmatpush1.msra.mxu0 0.0
  %1160 = vmatprep.subr.mxu0 0.0
  %1161 = vmatpush1.msra.mxu0 0.0
  %1162 = vmatprep.subr.mxu0 0.0
  %1163 = vmatpush1.msra.mxu0 0.0
  %1164 = vmatprep.subr.mxu0 0.0
  %1165 = vmatpush1.msra.mxu0 0.0
  %1166 = vmatprep.subr.mxu0 0.0
  %1167 = vmatpush1.msra.mxu0 0.0
  %1168 = vmatprep.subr.mxu0 0.0
  %1169 = vmatpush1.msra.mxu0 0.0
  %1170 = vmatprep.subr.mxu0 0.0
  %1171 = vmatpush1.msra.mxu0 0.0
  %1172 = vmatprep.subr.mxu0 0.0
  %1173 = vmatpush1.msra.mxu0 0.0
  %1174 = vmatprep.subr.mxu0 0.0
  %1175 = vmatpush1.msra.mxu0 0.0
  %1176 = vmatprep.subr.mxu0 0.0
  %1177 = vmatpush1.msra.mxu0 0.0
  %1178 = vmatprep.subr.mxu0 0.0
  %1179 = vmatpush1.msra.mxu0 0.0
  %1180 = vmatprep.subr.mxu0 0.0
  %1181 = vmatpush1.msra.mxu0 0.0
  %1182 = vmatprep.mubr.f32.mxu0 0.0
  %1183 = vmatmul.mubr.f32.gmra.mrb[0].mxu0 %v17
  %v1184 = vpop.f32.mrb[0].mxu0
  %v1185 = vadd.f32 0.0, %v1184
  %v1186 = vpop.f32.mrb[0].mxu0
  %1187 = vdwg.mxu0
  %1188 = vmatprep.subr.mxu0 0.0
  %1189 = vmatpush1.msra.mxu0 %v790
  %1190 = vmatprep.subr.mxu0 0.0
  %1191 = vmatpush1.msra.mxu0 %v791
  %1192 = vmatprep.subr.mxu0 0.0
  %1193 = vmatpush1.msra.mxu0 %v792
  %1194 = vmatprep.subr.mxu0 0.0
  %1195 = vmatpush1.msra.mxu0 %v793
  %1196 = vmatprep.subr.mxu0 0.0
  %1197 = vmatpush1.msra.mxu0 %v794
  %1198 = vmatprep.subr.mxu0 0.0
  %1199 = vmatpush1.msra.mxu0 %v795
  %1200 = vmatprep.subr.mxu0 0.0
  %1201 = vmatpush1.msra.mxu0 %v796
  %1202 = vmatprep.subr.mxu0 0.0
  %1203 = vmatpush1.msra.mxu0 %v797
  %1204 = vmatprep.subr.mxu0 0.0
  %1205 = vmatpush1.msra.mxu0 %v798
  %1206 = vmatprep.subr.mxu0 0.0
  %1207 = vmatpush1.msra.mxu0 %v799
  %1208 = vmatprep.subr.mxu0 0.0
  %1209 = vmatpush1.msra.mxu0 %v800
  %1210 = vmatprep.subr.mxu0 0.0
  %1211 = vmatpush1.msra.mxu0 %v801
  %1212 = vmatprep.subr.mxu0 0.0
  %1213 = vmatpush1.msra.mxu0 %v802
  %1214 = vmatprep.subr.mxu0 0.0
  %1215 = vmatpush1.msra.mxu0 %v803
  %1216 = vmatprep.subr.mxu0 0.0
  %1217 = vmatpush1.msra.mxu0 %v804
  %1218 = vmatprep.subr.mxu0 0.0
  %1219 = vmatpush1.msra.mxu0 %v805
  %1220 = vmatprep.subr.mxu0 0.0
  %1221 = vmatpush1.msra.mxu0 0.0
  %1222 = vmatprep.subr.mxu0 0.0
  %1223 = vmatpush1.msra.mxu0 0.0
  %1224 = vmatprep.subr.mxu0 0.0
  %1225 = vmatpush1.msra.mxu0 0.0
  %1226 = vmatprep.subr.mxu0 0.0
  %1227 = vmatpush1.msra.mxu0 0.0
  %1228 = vmatprep.subr.mxu0 0.0
  %1229 = vmatpush1.msra.mxu0 0.0
  %1230 = vmatprep.subr.mxu0 0.0
  %1231 = vmatpush1.msra.mxu0 0.0
  %1232 = vmatprep.subr.mxu0 0.0
  %1233 = vmatpush1.msra.mxu0 0.0
  %1234 = vmatprep.subr.mxu0 0.0
  %1235 = vmatpush1.msra.mxu0 0.0
  %1236 = vmatprep.subr.mxu0 0.0
  %1237 = vmatpush1.msra.mxu0 0.0
  %1238 = vmatprep.subr.mxu0 0.0
  %1239 = vmatpush1.msra.mxu0 0.0
  %1240 = vmatprep.subr.mxu0 0.0
  %1241 = vmatpush1.msra.mxu0 0.0
  %1242 = vmatprep.subr.mxu0 0.0
  %1243 = vmatpush1.msra.mxu0 0.0
  %1244 = vmatprep.subr.mxu0 0.0
  %1245 = vmatpush1.msra.mxu0 0.0
  %1246 = vmatprep.subr.mxu0 0.0
  %1247 = vmatpush1.msra.mxu0 0.0
  %1248 = vmatprep.subr.mxu0 0.0
  %1249 = vmatpush1.msra.mxu0 0.0
  %1250 = vmatprep.subr.mxu0 0.0
  %1251 = vmatpush1.msra.mxu0 0.0
  %1252 = vmatprep.mubr.f32.mxu0 0.0
  %1253 = vmatmul.mubr.f32.gmra.mrb[0].mxu0 %v18
  %v1254 = vpop.f32.mrb[0].mxu0
  %v1255 = vadd.f32 0.0, %v1254
  %v1256 = vpop.f32.mrb[0].mxu0
  %1257 = vdwg.mxu0
  %1258 = vmatprep.subr.mxu0 0.0
  %1259 = vmatpush1.msra.mxu0 %v806
  %1260 = vmatprep.subr.mxu0 0.0
  %1261 = vmatpush1.msra.mxu0 %v807
  %1262 = vmatprep.subr.mxu0 0.0
  %1263 = vmatpush1.msra.mxu0 %v808
  %1264 = vmatprep.subr.mxu0 0.0
  %1265 = vmatpush1.msra.mxu0 %v809
  %1266 = vmatprep.subr.mxu0 0.0
  %1267 = vmatpush1.msra.mxu0 %v810
  %1268 = vmatprep.subr.mxu0 0.0
  %1269 = vmatpush1.msra.mxu0 %v811
  %1270 = vmatprep.subr.mxu0 0.0
  %1271 = vmatpush1.msra.mxu0 %v812
  %1272 = vmatprep.subr.mxu0 0.0
  %1273 = vmatpush1.msra.mxu0 %v813
  %1274 = vmatprep.subr.mxu0 0.0
  %1275 = vmatpush1.msra.mxu0 %v814
  %1276 = vmatprep.subr.mxu0 0.0
  %1277 = vmatpush1.msra.mxu0 %v815
  %1278 = vmatprep.subr.mxu0 0.0
  %1279 = vmatpush1.msra.mxu0 %v816
  %1280 = vmatprep.subr.mxu0 0.0
  %1281 = vmatpush1.msra.mxu0 %v817
  %1282 = vmatprep.subr.mxu0 0.0
  %1283 = vmatpush1.msra.mxu0 %v818
  %1284 = vmatprep.subr.mxu0 0.0
  %1285 = vmatpush1.msra.mxu0 %v819
  %1286 = vmatprep.subr.mxu0 0.0
  %1287 = vmatpush1.msra.mxu0 %v820
  %1288 = vmatprep.subr.mxu0 0.0
  %1289 = vmatpush1.msra.mxu0 %v821
  %1290 = vmatprep.subr.mxu0 0.0
  %1291 = vmatpush1.msra.mxu0 0.0
  %1292 = vmatprep.subr.mxu0 0.0
  %1293 = vmatpush1.msra.mxu0 0.0
  %1294 = vmatprep.subr.mxu0 0.0
  %1295 = vmatpush1.msra.mxu0 0.0
  %1296 = vmatprep.subr.mxu0 0.0
  %1297 = vmatpush1.msra.mxu0 0.0
  %1298 = vmatprep.subr.mxu0 0.0
  %1299 = vmatpush1.msra.mxu0 0.0
  %1300 = vmatprep.subr.mxu0 0.0
  %1301 = vmatpush1.msra.mxu0 0.0
  %1302 = vmatprep.subr.mxu0 0.0
  %1303 = vmatpush1.msra.mxu0 0.0
  %1304 = vmatprep.subr.mxu0 0.0
  %1305 = vmatpush1.msra.mxu0 0.0
  %1306 = vmatprep.subr.mxu0 0.0
  %1307 = vmatpush1.msra.mxu0 0.0
  %1308 = vmatprep.subr.mxu0 0.0
  %1309 = vmatpush1.msra.mxu0 0.0
  %1310 = vmatprep.subr.mxu0 0.0
  %1311 = vmatpush1.msra.mxu0 0.0
  %1312 = vmatprep.subr.mxu0 0.0
  %1313 = vmatpush1.msra.mxu0 0.0
  %1314 = vmatprep.subr.mxu0 0.0
  %1315 = vmatpush1.msra.mxu0 0.0
  %1316 = vmatprep.subr.mxu0 0.0
  %1317 = vmatpush1.msra.mxu0 0.0
  %1318 = vmatprep.subr.mxu0 0.0
  %1319 = vmatpush1.msra.mxu0 0.0
  %1320 = vmatprep.subr.mxu0 0.0
  %1321 = vmatpush1.msra.mxu0 0.0
  %1322 = vmatprep.mubr.f32.mxu0 0.0
  %1323 = vmatmul.mubr.f32.gmra.mrb[0].mxu0 %v19
  %v1324 = vpop.f32.mrb[0].mxu0
  %v1325 = vadd.f32 0.0, %v1324
  %v1326 = vpop.f32.mrb[0].mxu0
  %1327 = vdwg.mxu0
  %1328 = vmatprep.subr.mxu0 0.0
  %1329 = vmatpush1.msra.mxu0 %v822
  %1330 = vmatprep.subr.mxu0 0.0
  %1331 = vmatpush1.msra.mxu0 %v823
  %1332 = vmatprep.subr.mxu0 0.0
  %1333 = vmatpush1.msra.mxu0 %v824
  %1334 = vmatprep.subr.mxu0 0.0
  %1335 = vmatpush1.msra.mxu0 %v825
  %1336 = vmatprep.subr.mxu0 0.0
  %1337 = vmatpush1.msra.mxu0 %v826
  %1338 = vmatprep.subr.mxu0 0.0
  %1339 = vmatpush1.msra.mxu0 %v827
  %1340 = vmatprep.subr.mxu0 0.0
  %1341 = vmatpush1.msra.mxu0 %v828
  %1342 = vmatprep.subr.mxu0 0.0
  %1343 = vmatpush1.msra.mxu0 %v829
  %1344 = vmatprep.subr.mxu0 0.0
  %1345 = vmatpush1.msra.mxu0 %v830
  %1346 = vmatprep.subr.mxu0 0.0
  %1347 = vmatpush1.msra.mxu0 %v831
  %1348 = vmatprep.subr.mxu0 0.0
  %1349 = vmatpush1.msra.mxu0 %v832
  %1350 = vmatprep.subr.mxu0 0.0
  %1351 = vmatpush1.msra.mxu0 %v833
  %1352 = vmatprep.subr.mxu0 0.0
  %1353 = vmatpush1.msra.mxu0 %v834
  %1354 = vmatprep.subr.mxu0 0.0
  %1355 = vmatpush1.msra.mxu0 %v835
  %1356 = vmatprep.subr.mxu0 0.0
  %1357 = vmatpush1.msra.mxu0 %v836
  %1358 = vmatprep.subr.mxu0 0.0
  %1359 = vmatpush1.msra.mxu0 %v837
  %1360 = vmatprep.subr.mxu0 0.0
  %1361 = vmatpush1.msra.mxu0 0.0
  %1362 = vmatprep.subr.mxu0 0.0
  %1363 = vmatpush1.msra.mxu0 0.0
  %1364 = vmatprep.subr.mxu0 0.0
  %1365 = vmatpush1.msra.mxu0 0.0
  %1366 = vmatprep.subr.mxu0 0.0
  %1367 = vmatpush1.msra.mxu0 0.0
  %1368 = vmatprep.subr.mxu0 0.0
  %1369 = vmatpush1.msra.mxu0 0.0
  %1370 = vmatprep.subr.mxu0 0.0
  %1371 = vmatpush1.msra.mxu0 0.0
  %1372 = vmatprep.subr.mxu0 0.0
  %1373 = vmatpush1.msra.mxu0 0.0
  %1374 = vmatprep.subr.mxu0 0.0
  %1375 = vmatpush1.msra.mxu0 0.0
  %1376 = vmatprep.subr.mxu0 0.0
  %1377 = vmatpush1.msra.mxu0 0.0
  %1378 = vmatprep.subr.mxu0 0.0
  %1379 = vmatpush1.msra.mxu0 0.0
  %1380 = vmatprep.subr.mxu0 0.0
  %1381 = vmatpush1.msra.mxu0 0.0
  %1382 = vmatprep.subr.mxu0 0.0
  %1383 = vmatpush1.msra.mxu0 0.0
  %1384 = vmatprep.subr.mxu0 0.0
  %1385 = vmatpush1.msra.mxu0 0.0
  %1386 = vmatprep.subr.mxu0 0.0
  %1387 = vmatpush1.msra.mxu0 0.0
  %1388 = vmatprep.subr.mxu0 0.0
  %1389 = vmatpush1.msra.mxu0 0.0
  %1390 = vmatprep.subr.mxu0 0.0
  %1391 = vmatpush1.msra.mxu0 0.0
  %1392 = vmatprep.mubr.f32.mxu0 0.0
  %1393 = vmatmul.mubr.f32.gmra.mrb[0].mxu0 %v20
  %v1394 = vpop.f32.mrb[0].mxu0
  %v1395 = vadd.f32 0.0, %v1394
  %v1396 = vpop.f32.mrb[0].mxu0
  %1397 = vdwg.mxu0
  %v1406 = vrot.slane %v905, 2
  %v1407 = vrot.slane %v975, 2
  %v1408 = vrot.slane %v1045, 2
  %v1409 = vrot.slane %v1115, 2
  %v1410 = vrot.slane %v1185, 2
  %v1411 = vrot.slane %v1255, 2
  %v1412 = vrot.slane %v1325, 2
  %v1413 = vrot.slane %v1395, 2
  %v1422 = vsub.f32 %v216, %v1406
  %v1423 = vsub.f32 %v286, %v1407
  %v1424 = vsub.f32 %v356, %v1408
  %v1425 = vsub.f32 %v426, %v1409
  %v1426 = vsub.f32 %v496, %v1410
  %v1427 = vsub.f32 %v566, %v1411
  %v1428 = vsub.f32 %v636, %v1412
  %v1429 = vsub.f32 %v706, %v1413
  %1430 = vst [vmem:[%s2] sm:$0x3] %v1422
  %1431 = vst [vmem:[%s2 + $0x2] sm:$0x3] %v1423
  %1432 = vst [vmem:[%s2 + $0x4] sm:$0x3] %v1424
  %1433 = vst [vmem:[%s2 + $0x6] sm:$0x3] %v1425
  %1434 = vst [vmem:[%s2 + $0x8] sm:$0x3] %v1426
  %1435 = vst [vmem:[%s2 + $0xa] sm:$0x3] %v1427
  %1436 = vst [vmem:[%s2 + $0xc] sm:$0x3] %v1428
  %1437 = vst [vmem:[%s2 + $0xe] sm:$0x3] %v1429
  %v1446 = vrot.slane %v216, 2
  %v1447 = vrot.slane %v286, 2
  %v1448 = vrot.slane %v356, 2
  %v1449 = vrot.slane %v426, 2
  %v1450 = vrot.slane %v496, 2
  %v1451 = vrot.slane %v566, 2
  %v1452 = vrot.slane %v636, 2
  %v1453 = vrot.slane %v706, 2
  %v1462 = vadd.f32 %v905, %v1446
  %v1463 = vadd.f32 %v975, %v1447
  %v1464 = vadd.f32 %v1045, %v1448
  %v1465 = vadd.f32 %v1115, %v1449
  %v1466 = vadd.f32 %v1185, %v1450
  %v1467 = vadd.f32 %v1255, %v1451
  %v1468 = vadd.f32 %v1325, %v1452
  %v1469 = vadd.f32 %v1395, %v1453
  %1470 = vst [vmem:[%s3] sm:$0x3] %v1462
  %1471 = vst [vmem:[%s3 + $0x2] sm:$0x3] %v1463
  %1472 = vst [vmem:[%s3 + $0x4] sm:$0x3] %v1464
  %1473 = vst [vmem:[%s3 + $0x6] sm:$0x3] %v1465
  %1474 = vst [vmem:[%s3 + $0x8] sm:$0x3] %v1466
  %1475 = vst [vmem:[%s3 + $0xa] sm:$0x3] %v1467
  %1476 = vst [vmem:[%s3 + $0xc] sm:$0x3] %v1468
  %1477 = vst [vmem:[%s3 + $0xe] sm:$0x3] %v1469
  // Predicated region
  $region10: #{_lambda_.7} parent=0 // pred_check
    _
  $region11: #{_lambda_.7} parent=0 // pred_check_branch
    %1479 = sbr.rel (0) target = $region13
  $region12: #{_lambda_.7} parent=0 // pred_region
    _
  $region13: #{_lambda_.7} parent=0 // pred_fallthru
    _
  // Predicated region
  $region14: #{_lambda_.7} parent=0 // pred_check
    _
  $region15: #{_lambda_.7} parent=0 // pred_check_branch
    %1481 = sbr.rel (0) target = $region17
  $region16: #{_lambda_.7} parent=0 // pred_region
    _
  $region17: #{_lambda_.7} parent=0 // pred_fallthru
    _
  // Predicated region
  $region18: #{_lambda_.7} parent=0 // pred_check
    _
  $region19: #{_lambda_.7} parent=0 // pred_check_branch
    %1483 = sbr.rel (0) target = $region21
  $region20: #{_lambda_.7} parent=0 // pred_region
    _
  $region21: #{_lambda_.7} parent=0 // pred_fallthru
    _
  // Predicated region
  $region22: #{_lambda_.7} parent=0 // pred_check
    _
  $region23: #{_lambda_.7} parent=0 // pred_check_branch
    %1485 = sbr.rel (0) target = $region25
  $region24: #{_lambda_.7} parent=0 // pred_region
    _
  $region25: #{_lambda_.7} parent=0 // pred_fallthru
    _

// kernel: reverse.4
$region0: #{reverse.4}
  #allocation0 [shape = 's32[1]{0}', space=sflag, size = 0x4, scoped, tag = 'scoped memory for reverse.4']
  %s0 = inlined_call_operand.vmem [shape: f32[2,32,18,8], index: 0, kind: input, shape index: {}]
  %s1 = inlined_call_operand.vmem [shape: f32[2,32,18,8], index: 1, kind: output, shape index: {}]
  %s2 = scalar_lea.vmem %s0, 168
  %v3 = vld [vmem:[%s2] sm:$0xff]
  %4 = vst [vmem:[%s1] sm:$0xff] %v3
  %s5 = scalar_lea.vmem %s0, 360
  %v6 = vld [vmem:[%s5] sm:$0xff]
  %s7 = scalar_lea.vmem %s1, 192
  %8 = vst [vmem:[%s7] sm:$0xff] %v6
  %s9 = scalar_lea.vmem %s0, 144
  %v10 = vld [vmem:[%s9] sm:$0xff]
  %s11 = scalar_lea.vmem %s1, 24
  %12 = vst [vmem:[%s11] sm:$0xff] %v10
  %s13 = scalar_lea.vmem %s0, 336
  %v14 = vld [vmem:[%s13] sm:$0xff]
  %s15 = scalar_lea.vmem %s1, 216
  %16 = vst [vmem:[%s15] sm:$0xff] %v14
  %s17 = scalar_lea.vmem %s0, 120
  %v18 = vld [vmem:[%s17] sm:$0xff]
  %s19 = scalar_lea.vmem %s1, 48
  %20 = vst [vmem:[%s19] sm:$0xff] %v18
  %s21 = scalar_lea.vmem %s0, 312
  %v22 = vld [vmem:[%s21] sm:$0xff]
  %s23 = scalar_lea.vmem %s1, 240
  %24 = vst [vmem:[%s23] sm:$0xff] %v22
  %s25 = scalar_lea.vmem %s0, 96
  %v26 = vld [vmem:[%s25] sm:$0xff]
  %s27 = scalar_lea.vmem %s1, 72
  %28 = vst [vmem:[%s27] sm:$0xff] %v26
  %s29 = scalar_lea.vmem %s0, 288
  %v30 = vld [vmem:[%s29] sm:$0xff]
  %s31 = scalar_lea.vmem %s1, 264
  %32 = vst [vmem:[%s31] sm:$0xff] %v30
  %s33 = scalar_lea.vmem %s0, 72
  %v34 = vld [vmem:[%s33] sm:$0xff]
  %s35 = scalar_lea.vmem %s1, 96
  %36 = vst [vmem:[%s35] sm:$0xff] %v34
  %s37 = scalar_lea.vmem %s0, 264
  %v38 = vld [vmem:[%s37] sm:$0xff]
  %s39 = scalar_lea.vmem %s1, 288
  %40 = vst [vmem:[%s39] sm:$0xff] %v38
  %s41 = scalar_lea.vmem %s0, 48
  %v42 = vld [vmem:[%s41] sm:$0xff]
  %s43 = scalar_lea.vmem %s1, 120
  %44 = vst [vmem:[%s43] sm:$0xff] %v42
  %s45 = scalar_lea.vmem %s0, 240
  %v46 = vld [vmem:[%s45] sm:$0xff]
  %s47 = scalar_lea.vmem %s1, 312
  %48 = vst [vmem:[%s47] sm:$0xff] %v46
  %s49 = scalar_lea.vmem %s0, 24
  %v50 = vld [vmem:[%s49] sm:$0xff]
  %s51 = scalar_lea.vmem %s1, 144
  %52 = vst [vmem:[%s51] sm:$0xff] %v50
  %s53 = scalar_lea.vmem %s0, 216
  %v54 = vld [vmem:[%s53] sm:$0xff]
  %s55 = scalar_lea.vmem %s1, 336
  %56 = vst [vmem:[%s55] sm:$0xff] %v54
  %v57 = vld [vmem:[%s0] sm:$0xff]
  %s58 = scalar_lea.vmem %s1, 168
  %59 = vst [vmem:[%s58] sm:$0xff] %v57
  %s60 = scalar_lea.vmem %s0, 192
  %v61 = vld [vmem:[%s60] sm:$0xff]
  %s62 = scalar_lea.vmem %s1, 360
  %63 = vst [vmem:[%s62] sm:$0xff] %v61
  %s64 = scalar_lea.vmem %s0, 176
  %v65 = vld [vmem:[%s64] sm:$0xff]
  %s66 = scalar_lea.vmem %s1, 8
  %67 = vst [vmem:[%s66] sm:$0xff] %v65
  %s68 = scalar_lea.vmem %s0, 368
  %v69 = vld [vmem:[%s68] sm:$0xff]
  %s70 = scalar_lea.vmem %s1, 200
  %71 = vst [vmem:[%s70] sm:$0xff] %v69
  %s72 = scalar_lea.vmem %s0, 152
  %v73 = vld [vmem:[%s72] sm:$0xff]
  %s74 = scalar_lea.vmem %s1, 32
  %75 = vst [vmem:[%s74] sm:$0xff] %v73
  %s76 = scalar_lea.vmem %s0, 344
  %v77 = vld [vmem:[%s76] sm:$0xff]
  %s78 = scalar_lea.vmem %s1, 224
  %79 = vst [vmem:[%s78] sm:$0xff] %v77
  %s80 = scalar_lea.vmem %s0, 128
  %v81 = vld [vmem:[%s80] sm:$0xff]
  %s82 = scalar_lea.vmem %s1, 56
  %83 = vst [vmem:[%s82] sm:$0xff] %v81
  %s84 = scalar_lea.vmem %s0, 320
  %v85 = vld [vmem:[%s84] sm:$0xff]
  %s86 = scalar_lea.vmem %s1, 248
  %87 = vst [vmem:[%s86] sm:$0xff] %v85
  %s88 = scalar_lea.vmem %s0, 104
  %v89 = vld [vmem:[%s88] sm:$0xff]
  %s90 = scalar_lea.vmem %s1, 80
  %91 = vst [vmem:[%s90] sm:$0xff] %v89
  %s92 = scalar_lea.vmem %s0, 296
  %v93 = vld [vmem:[%s92] sm:$0xff]
  %s94 = scalar_lea.vmem %s1, 272
  %95 = vst [vmem:[%s94] sm:$0xff] %v93
  %s96 = scalar_lea.vmem %s0, 80
  %v97 = vld [vmem:[%s96] sm:$0xff]
  %s98 = scalar_lea.vmem %s1, 104
  %99 = vst [vmem:[%s98] sm:$0xff] %v97
  %s100 = scalar_lea.vmem %s0, 272
  %v101 = vld [vmem:[%s100] sm:$0xff]
  %s102 = scalar_lea.vmem %s1, 296
  %103 = vst [vmem:[%s102] sm:$0xff] %v101
  %s104 = scalar_lea.vmem %s0, 56
  %v105 = vld [vmem:[%s104] sm:$0xff]
  %s106 = scalar_lea.vmem %s1, 128
  %107 = vst [vmem:[%s106] sm:$0xff] %v105
  %s108 = scalar_lea.vmem %s0, 248
  %v109 = vld [vmem:[%s108] sm:$0xff]
  %s110 = scalar_lea.vmem %s1, 320
  %111 = vst [vmem:[%s110] sm:$0xff] %v109
  %s112 = scalar_lea.vmem %s0, 32
  %v113 = vld [vmem:[%s112] sm:$0xff]
  %s114 = scalar_lea.vmem %s1, 152
  %115 = vst [vmem:[%s114] sm:$0xff] %v113
  %s116 = scalar_lea.vmem %s0, 224
  %v117 = vld [vmem:[%s116] sm:$0xff]
  %s118 = scalar_lea.vmem %s1, 344
  %119 = vst [vmem:[%s118] sm:$0xff] %v117
  %s120 = scalar_lea.vmem %s0, 8
  %v121 = vld [vmem:[%s120] sm:$0xff]
  %s122 = scalar_lea.vmem %s1, 176
  %123 = vst [vmem:[%s122] sm:$0xff] %v121
  %s124 = scalar_lea.vmem %s0, 200
  %v125 = vld [vmem:[%s124] sm:$0xff]
  %s126 = scalar_lea.vmem %s1, 368
  %127 = vst [vmem:[%s126] sm:$0xff] %v125
  %s128 = scalar_lea.vmem %s0, 184
  %v129 = vld [vmem:[%s128] sm:$0xff]
  %s130 = scalar_lea.vmem %s1, 16
  %131 = vst [vmem:[%s130] sm:$0xff] %v129
  %s132 = scalar_lea.vmem %s0, 376
  %v133 = vld [vmem:[%s132] sm:$0xff]
  %s134 = scalar_lea.vmem %s1, 208
  %135 = vst [vmem:[%s134] sm:$0xff] %v133
  %s136 = scalar_lea.vmem %s0, 160
  %v137 = vld [vmem:[%s136] sm:$0xff]
  %s138 = scalar_lea.vmem %s1, 40
  %139 = vst [vmem:[%s138] sm:$0xff] %v137
  %s140 = scalar_lea.vmem %s0, 352
  %v141 = vld [vmem:[%s140] sm:$0xff]
  %s142 = scalar_lea.vmem %s1, 232
  %143 = vst [vmem:[%s142] sm:$0xff] %v141
  %s144 = scalar_lea.vmem %s0, 136
  %v145 = vld [vmem:[%s144] sm:$0xff]
  %s146 = scalar_lea.vmem %s1, 64
  %147 = vst [vmem:[%s146] sm:$0xff] %v145
  %s148 = scalar_lea.vmem %s0, 328
  %v149 = vld [vmem:[%s148] sm:$0xff]
  %s150 = scalar_lea.vmem %s1, 256
  %151 = vst [vmem:[%s150] sm:$0xff] %v149
  %s152 = scalar_lea.vmem %s0, 112
  %v153 = vld [vmem:[%s152] sm:$0xff]
  %s154 = scalar_lea.vmem %s1, 88
  %155 = vst [vmem:[%s154] sm:$0xff] %v153
  %s156 = scalar_lea.vmem %s0, 304
  %v157 = vld [vmem:[%s156] sm:$0xff]
  %s158 = scalar_lea.vmem %s1, 280
  %159 = vst [vmem:[%s158] sm:$0xff] %v157
  %s160 = scalar_lea.vmem %s0, 88
  %v161 = vld [vmem:[%s160] sm:$0xff]
  %s162 = scalar_lea.vmem %s1, 112
  %163 = vst [vmem:[%s162] sm:$0xff] %v161
  %s164 = scalar_lea.vmem %s0, 280
  %v165 = vld [vmem:[%s164] sm:$0xff]
  %s166 = scalar_lea.vmem %s1, 304
  %167 = vst [vmem:[%s166] sm:$0xff] %v165
  %s168 = scalar_lea.vmem %s0, 64
  %v169 = vld [vmem:[%s168] sm:$0xff]
  %s170 = scalar_lea.vmem %s1, 136
  %171 = vst [vmem:[%s170] sm:$0xff] %v169
  %s172 = scalar_lea.vmem %s0, 256
  %v173 = vld [vmem:[%s172] sm:$0xff]
  %s174 = scalar_lea.vmem %s1, 328
  %175 = vst [vmem:[%s174] sm:$0xff] %v173
  %s176 = scalar_lea.vmem %s0, 40
  %v177 = vld [vmem:[%s176] sm:$0xff]
  %s178 = scalar_lea.vmem %s1, 160
  %179 = vst [vmem:[%s178] sm:$0xff] %v177
  %s180 = scalar_lea.vmem %s0, 232
  %v181 = vld [vmem:[%s180] sm:$0xff]
  %s182 = scalar_lea.vmem %s1, 352
  %183 = vst [vmem:[%s182] sm:$0xff] %v181
  %s184 = scalar_lea.vmem %s0, 16
  %v185 = vld [vmem:[%s184] sm:$0xff]
  %s186 = scalar_lea.vmem %s1, 184
  %187 = vst [vmem:[%s186] sm:$0xff] %v185
  %s188 = scalar_lea.vmem %s0, 208
  %v189 = vld [vmem:[%s188] sm:$0xff]
  %s190 = scalar_lea.vmem %s1, 376
  %191 = vst [vmem:[%s190] sm:$0xff] %v189

// kernel: _lambda_.8
$region0: #{_lambda_.8}
  #allocation0 [shape = 'u32[]', space=smem, size = 0x4, offset = 0x4, fixed_abs, tag = 'smem constant byte address 0x4 - core index']
  #allocation1 [shape = 'u32[144,128]{1,0:T(1,128)}', space=vmem, size = 0x12000, scoped, tag = 'internal scratch']
  %s0 = inlined_call_operand.vmem [shape: f32[162,128], index: 0, kind: input, shape index: {}]
  %s1 = inlined_call_operand.vmem [shape: f32[128,128], index: 1, kind: input, shape index: {}]
  %s2 = inlined_call_operand.vmem [shape: f32[1,128], index: 2, kind: input, shape index: {}]
  %s3 = inlined_call_operand.vmem [shape: f32[162,128], index: 3, kind: input, shape index: {}]
  %s4 = inlined_call_operand.vmem [shape: f32[162,128], index: 4, kind: output, shape index: {}]
  %s5 = sld [smem:[#allocation0]]
  $region26: #{_lambda_.8} parent=0
    _
  %s7 = ssub.s32 1, %s5
  %s8 = scalar_select 0, %s7, %s5
  // Predicated region
  $region2: #{_lambda_.8} parent=0 // pred_check
    _
  $region3: #{_lambda_.8} parent=0 // pred_check_branch
    %10 = sbr.rel (0) target = $region5
  $region4: #{_lambda_.8} parent=0 // pred_region
    _
  $region5: #{_lambda_.8} parent=0 // pred_fallthru
    _
  // Predicated region
  $region6: #{_lambda_.8} parent=0 // pred_check
    _
  $region7: #{_lambda_.8} parent=0 // pred_check_branch
    %12 = sbr.rel (0) target = $region9
  $region8: #{_lambda_.8} parent=0 // pred_region
    _
  $region9: #{_lambda_.8} parent=0 // pred_fallthru
    _
  // Predicated region
  $region10: #{_lambda_.8} parent=0 // pred_check
    _
  $region11: #{_lambda_.8} parent=0 // pred_check_branch
    %14 = sbr.rel (0) target = $region13
  $region12: #{_lambda_.8} parent=0 // pred_region
    _
  $region13: #{_lambda_.8} parent=0 // pred_fallthru
    _
  // Predicated region
  $region14: #{_lambda_.8} parent=0 // pred_check
    _
  $region15: #{_lambda_.8} parent=0 // pred_check_branch
    %16 = sbr.rel (0) target = $region17
  $region16: #{_lambda_.8} parent=0 // pred_region
    _
  $region17: #{_lambda_.8} parent=0 // pred_fallthru
    _
  %v17 = vld [vmem:[%s0] sm:$0xff]
  %v18 = vld [vmem:[%s0 + $0x8] sm:$0xff]
  %v19 = vld [vmem:[%s0 + $0x10] sm:$0xff]
  %v20 = vld [vmem:[%s0 + $0x18] sm:$0xff]
  %v21 = vld [vmem:[%s0 + $0x20] sm:$0xff]
  %v22 = vld [vmem:[%s0 + $0x28] sm:$0xff]
  %v23 = vld [vmem:[%s0 + $0x30] sm:$0xff]
  %v24 = vld [vmem:[%s0 + $0x38] sm:$0xff]
  %v25 = vld [vmem:[%s0 + $0x40] sm:$0xff]
  %v26 = vld [vmem:[%s0 + $0x48] sm:$0xff]
  %v27 = vld [vmem:[%s0 + $0x50] sm:$0xff]
  %v28 = vld [vmem:[%s0 + $0x58] sm:$0xff]
  %v29 = vld [vmem:[%s0 + $0x60] sm:$0xff]
  %v30 = vld [vmem:[%s0 + $0x68] sm:$0xff]
  %v31 = vld [vmem:[%s0 + $0x70] sm:$0xff]
  %v32 = vld [vmem:[%s0 + $0x78] sm:$0xff]
  %v33 = vld [vmem:[%s0 + $0x80] sm:$0xff]
  %v34 = vld [vmem:[%s0 + $0x88] sm:$0xff]
  %v35 = vld [vmem:[%s0 + $0x90] sm:$0xff]
  %v36 = vld [vmem:[%s0 + $0x98] sm:$0xff]
  %v37 = vld [vmem:[%s0 + $0xa0] sm:$0x3]
  %v38 = vld [vmem:[%s1] sm:$0xff]
  %v39 = vld [vmem:[%s1 + $0x8] sm:$0xff]
  %v40 = vld [vmem:[%s1 + $0x10] sm:$0xff]
  %v41 = vld [vmem:[%s1 + $0x18] sm:$0xff]
  %v42 = vld [vmem:[%s1 + $0x20] sm:$0xff]
  %v43 = vld [vmem:[%s1 + $0x28] sm:$0xff]
  %v44 = vld [vmem:[%s1 + $0x30] sm:$0xff]
  %v45 = vld [vmem:[%s1 + $0x38] sm:$0xff]
  %v46 = vld [vmem:[%s1 + $0x40] sm:$0xff]
  %v47 = vld [vmem:[%s1 + $0x48] sm:$0xff]
  %v48 = vld [vmem:[%s1 + $0x50] sm:$0xff]
  %v49 = vld [vmem:[%s1 + $0x58] sm:$0xff]
  %v50 = vld [vmem:[%s1 + $0x60] sm:$0xff]
  %v51 = vld [vmem:[%s1 + $0x68] sm:$0xff]
  %v52 = vld [vmem:[%s1 + $0x70] sm:$0xff]
  %v53 = vld [vmem:[%s1 + $0x78] sm:$0xff]
  %v54 = vld [vmem:[%s2] sm:$0x1]
  %v56 = vlaneseq
  %v57 = vshrl.u32 %v56, 7
  %v58 = vsub.s32 0, %v57
  %v59 = vrot.slane %v54, %v58
  %61 = vmatprep.subr.mxu0 0.0
  %62 = vmatpush1.msra.mxu0 %v38
  %63 = vmatprep.subr.mxu0 0.0
  %64 = vmatpush1.msra.mxu0 %v39
  %65 = vmatprep.subr.mxu0 0.0
  %66 = vmatpush1.msra.mxu0 %v40
  %67 = vmatprep.subr.mxu0 0.0
  %68 = vmatpush1.msra.mxu0 %v41
  %69 = vmatprep.subr.mxu0 0.0
  %70 = vmatpush1.msra.mxu0 %v42
  %71 = vmatprep.subr.mxu0 0.0
  %72 = vmatpush1.msra.mxu0 %v43
  %73 = vmatprep.subr.mxu0 0.0
  %74 = vmatpush1.msra.mxu0 %v44
  %75 = vmatprep.subr.mxu0 0.0
  %76 = vmatpush1.msra.mxu0 %v45
  %77 = vmatprep.subr.mxu0 0.0
  %78 = vmatpush1.msra.mxu0 %v46
  %79 = vmatprep.subr.mxu0 0.0
  %80 = vmatpush1.msra.mxu0 %v47
  %81 = vmatprep.subr.mxu0 0.0
  %82 = vmatpush1.msra.mxu0 %v48
  %83 = vmatprep.subr.mxu0 0.0
  %84 = vmatpush1.msra.mxu0 %v49
  %85 = vmatprep.subr.mxu0 0.0
  %86 = vmatpush1.msra.mxu0 %v50
  %87 = vmatprep.subr.mxu0 0.0
  %88 = vmatpush1.msra.mxu0 %v51
  %89 = vmatprep.subr.mxu0 0.0
  %90 = vmatpush1.msra.mxu0 %v52
  %91 = vmatprep.subr.mxu0 0.0
  %92 = vmatpush1.msra.mxu0 %v53
  %93 = vmatprep.subr.mxu0 0.0
  %94 = vmatpush1.msra.mxu0 0.0
  %95 = vmatprep.subr.mxu0 0.0
  %96 = vmatpush1.msra.mxu0 0.0
  %97 = vmatprep.subr.mxu0 0.0
  %98 = vmatpush1.msra.mxu0 0.0
  %99 = vmatprep.subr.mxu0 0.0
  %100 = vmatpush1.msra.mxu0 0.0
  %101 = vmatprep.subr.mxu0 0.0
  %102 = vmatpush1.msra.mxu0 0.0
  %103 = vmatprep.subr.mxu0 0.0
  %104 = vmatpush1.msra.mxu0 0.0
  %105 = vmatprep.subr.mxu0 0.0
  %106 = vmatpush1.msra.mxu0 0.0
  %107 = vmatprep.subr.mxu0 0.0
  %108 = vmatpush1.msra.mxu0 0.0
  %109 = vmatprep.subr.mxu0 0.0
  %110 = vmatpush1.msra.mxu0 0.0
  %111 = vmatprep.subr.mxu0 0.0
  %112 = vmatpush1.msra.mxu0 0.0
  %113 = vmatprep.subr.mxu0 0.0
  %114 = vmatpush1.msra.mxu0 0.0
  %115 = vmatprep.subr.mxu0 0.0
  %116 = vmatpush1.msra.mxu0 0.0
  %117 = vmatprep.subr.mxu0 0.0
  %118 = vmatpush1.msra.mxu0 0.0
  %119 = vmatprep.subr.mxu0 0.0
  %120 = vmatpush1.msra.mxu0 0.0
  %121 = vmatprep.subr.mxu0 0.0
  %122 = vmatpush1.msra.mxu0 0.0
  %123 = vmatprep.subr.mxu0 0.0
  %124 = vmatpush1.msra.mxu0 0.0
  %125 = vmatprep.mubr.f32.mxu0 0.0
  %126 = vmatmul.mubr.f32.gmra.mrb[0].mxu0 %v17
  %v127 = vpop.f32.mrb[0].mxu0
  %v128 = vadd.f32 %v59, %v127
  %v129 = vpop.f32.mrb[0].mxu0
  %130 = vmatprep.mubr.f32.mxu0 0.0
  %131 = vmatmul.mubr.f32.gmra.mrb[0].mxu0 %v18
  %v132 = vpop.f32.mrb[0].mxu0
  %v133 = vadd.f32 %v59, %v132
  %v134 = vpop.f32.mrb[0].mxu0
  %135 = vmatprep.mubr.f32.mxu0 0.0
  %136 = vmatmul.mubr.f32.gmra.mrb[0].mxu0 %v19
  %v137 = vpop.f32.mrb[0].mxu0
  %v138 = vadd.f32 %v59, %v137
  %v139 = vpop.f32.mrb[0].mxu0
  %140 = vmatprep.mubr.f32.mxu0 0.0
  %141 = vmatmul.mubr.f32.gmra.mrb[0].mxu0 %v20
  %v142 = vpop.f32.mrb[0].mxu0
  %v143 = vadd.f32 %v59, %v142
  %v144 = vpop.f32.mrb[0].mxu0
  %145 = vmatprep.mubr.f32.mxu0 0.0
  %146 = vmatmul.mubr.f32.gmra.mrb[0].mxu0 %v21
  %v147 = vpop.f32.mrb[0].mxu0
  %v148 = vadd.f32 %v59, %v147
  %v149 = vpop.f32.mrb[0].mxu0
  %150 = vmatprep.mubr.f32.mxu0 0.0
  %151 = vmatmul.mubr.f32.gmra.mrb[0].mxu0 %v22
  %v152 = vpop.f32.mrb[0].mxu0
  %v153 = vadd.f32 %v59, %v152
  %v154 = vpop.f32.mrb[0].mxu0
  %155 = vmatprep.mubr.f32.mxu0 0.0
  %156 = vmatmul.mubr.f32.gmra.mrb[0].mxu0 %v23
  %v157 = vpop.f32.mrb[0].mxu0
  %v158 = vadd.f32 %v59, %v157
  %v159 = vpop.f32.mrb[0].mxu0
  %160 = vmatprep.mubr.f32.mxu0 0.0
  %161 = vmatmul.mubr.f32.gmra.mrb[0].mxu0 %v24
  %v162 = vpop.f32.mrb[0].mxu0
  %v163 = vadd.f32 %v59, %v162
  %v164 = vpop.f32.mrb[0].mxu0
  %165 = vmatprep.mubr.f32.mxu0 0.0
  %166 = vmatmul.mubr.f32.gmra.mrb[0].mxu0 %v25
  %v167 = vpop.f32.mrb[0].mxu0
  %v168 = vadd.f32 %v59, %v167
  %v169 = vpop.f32.mrb[0].mxu0
  %170 = vmatprep.mubr.f32.mxu0 0.0
  %171 = vmatmul.mubr.f32.gmra.mrb[0].mxu0 %v26
  %v172 = vpop.f32.mrb[0].mxu0
  %v173 = vadd.f32 %v59, %v172
  %v174 = vpop.f32.mrb[0].mxu0
  %175 = vmatprep.mubr.f32.mxu0 0.0
  %176 = vmatmul.mubr.f32.gmra.mrb[0].mxu0 %v27
  %v177 = vpop.f32.mrb[0].mxu0
  %v178 = vadd.f32 %v59, %v177
  %v179 = vpop.f32.mrb[0].mxu0
  %180 = vmatprep.mubr.f32.mxu0 0.0
  %181 = vmatmul.mubr.f32.gmra.mrb[0].mxu0 %v28
  %v182 = vpop.f32.mrb[0].mxu0
  %v183 = vadd.f32 %v59, %v182
  %v184 = vpop.f32.mrb[0].mxu0
  %185 = vmatprep.mubr.f32.mxu0 0.0
  %186 = vmatmul.mubr.f32.gmra.mrb[0].mxu0 %v29
  %v187 = vpop.f32.mrb[0].mxu0
  %v188 = vadd.f32 %v59, %v187
  %v189 = vpop.f32.mrb[0].mxu0
  %190 = vmatprep.mubr.f32.mxu0 0.0
  %191 = vmatmul.mubr.f32.gmra.mrb[0].mxu0 %v30
  %v192 = vpop.f32.mrb[0].mxu0
  %v193 = vadd.f32 %v59, %v192
  %v194 = vpop.f32.mrb[0].mxu0
  %195 = vmatprep.mubr.f32.mxu0 0.0
  %196 = vmatmul.mubr.f32.gmra.mrb[0].mxu0 %v31
  %v197 = vpop.f32.mrb[0].mxu0
  %v198 = vadd.f32 %v59, %v197
  %v199 = vpop.f32.mrb[0].mxu0
  %200 = vmatprep.mubr.f32.mxu0 0.0
  %201 = vmatmul.mubr.f32.gmra.mrb[0].mxu0 %v32
  %v202 = vpop.f32.mrb[0].mxu0
  %v203 = vadd.f32 %v59, %v202
  %v204 = vpop.f32.mrb[0].mxu0
  %205 = vmatprep.mubr.f32.mxu0 0.0
  %206 = vmatmul.mubr.f32.gmra.mrb[0].mxu0 %v33
  %v207 = vpop.f32.mrb[0].mxu0
  %v208 = vadd.f32 %v59, %v207
  %v209 = vpop.f32.mrb[0].mxu0
  %210 = vmatprep.mubr.f32.mxu0 0.0
  %211 = vmatmul.mubr.f32.gmra.mrb[0].mxu0 %v34
  %v212 = vpop.f32.mrb[0].mxu0
  %v213 = vadd.f32 %v59, %v212
  %v214 = vpop.f32.mrb[0].mxu0
  %215 = vmatprep.mubr.f32.mxu0 0.0
  %216 = vmatmul.mubr.f32.gmra.mrb[0].mxu0 %v35
  %v217 = vpop.f32.mrb[0].mxu0
  %v218 = vadd.f32 %v59, %v217
  %v219 = vpop.f32.mrb[0].mxu0
  %220 = vmatprep.mubr.f32.mxu0 0.0
  %221 = vmatmul.mubr.f32.gmra.mrb[0].mxu0 %v36
  %v222 = vpop.f32.mrb[0].mxu0
  %v223 = vadd.f32 %v59, %v222
  %v224 = vpop.f32.mrb[0].mxu0
  %225 = vmatprep.mubr.f32.mxu0 0.0
  %226 = vmatmul.mubr.f32.gmra.mrb[0].mxu0 %v37
  %v227 = vpop.f32.mrb[0].mxu0
  %v228 = vadd.f32 %v59, %v227
  %v229 = vpop.f32.mrb[0].mxu0
  %230 = vdwg.mxu0
  %v231 = vld [vmem:[%s3] sm:$0xff]
  %v232 = vld [vmem:[%s3 + $0x8] sm:$0xff]
  %v233 = vld [vmem:[%s3 + $0x10] sm:$0xff]
  %v234 = vld [vmem:[%s3 + $0x18] sm:$0xff]
  %v235 = vld [vmem:[%s3 + $0x20] sm:$0xff]
  %v236 = vld [vmem:[%s3 + $0x28] sm:$0xff]
  %v237 = vld [vmem:[%s3 + $0x30] sm:$0xff]
  %v238 = vld [vmem:[%s3 + $0x38] sm:$0xff]
  %v239 = vld [vmem:[%s3 + $0x40] sm:$0xff]
  %v240 = vld [vmem:[%s3 + $0x48] sm:$0xff]
  %v241 = vld [vmem:[%s3 + $0x50] sm:$0xff]
  %v242 = vld [vmem:[%s3 + $0x58] sm:$0xff]
  %v243 = vld [vmem:[%s3 + $0x60] sm:$0xff]
  %v244 = vld [vmem:[%s3 + $0x68] sm:$0xff]
  %v245 = vld [vmem:[%s3 + $0x70] sm:$0xff]
  %v246 = vld [vmem:[%s3 + $0x78] sm:$0xff]
  %v247 = vld [vmem:[%s3 + $0x80] sm:$0xff]
  %v248 = vld [vmem:[%s3 + $0x88] sm:$0xff]
  %v249 = vld [vmem:[%s3 + $0x90] sm:$0xff]
  %v250 = vld [vmem:[%s3 + $0x98] sm:$0xff]
  %v251 = vld [vmem:[%s3 + $0xa0] sm:$0x3]
  %v252 = vadd.f32 %v128, %v231
  %v253 = vadd.f32 %v133, %v232
  %v254 = vadd.f32 %v138, %v233
  %v255 = vadd.f32 %v143, %v234
  %v256 = vadd.f32 %v148, %v235
  %v257 = vadd.f32 %v153, %v236
  %v258 = vadd.f32 %v158, %v237
  %v259 = vadd.f32 %v163, %v238
  %v260 = vadd.f32 %v168, %v239
  %v261 = vadd.f32 %v173, %v240
  %v262 = vadd.f32 %v178, %v241
  %v263 = vadd.f32 %v183, %v242
  %v264 = vadd.f32 %v188, %v243
  %v265 = vadd.f32 %v193, %v244
  %v266 = vadd.f32 %v198, %v245
  %v267 = vadd.f32 %v203, %v246
  %v268 = vadd.f32 %v208, %v247
  %v269 = vadd.f32 %v213, %v248
  %v270 = vadd.f32 %v218, %v249
  %v271 = vadd.f32 %v223, %v250
  %v272 = vadd.f32 %v228, %v251
  %v273 = vmax.f32 %v252, 0.0
  %v274 = vmax.f32 %v253, 0.0
  %v275 = vmax.f32 %v254, 0.0
  %v276 = vmax.f32 %v255, 0.0
  %v277 = vmax.f32 %v256, 0.0
  %v278 = vmax.f32 %v257, 0.0
  %v279 = vmax.f32 %v258, 0.0
  %v280 = vmax.f32 %v259, 0.0
  %v281 = vmax.f32 %v260, 0.0
  %v282 = vmax.f32 %v261, 0.0
  %v283 = vmax.f32 %v262, 0.0
  %v284 = vmax.f32 %v263, 0.0
  %v285 = vmax.f32 %v264, 0.0
  %v286 = vmax.f32 %v265, 0.0
  %v287 = vmax.f32 %v266, 0.0
  %v288 = vmax.f32 %v267, 0.0
  %v289 = vmax.f32 %v268, 0.0
  %v290 = vmax.f32 %v269, 0.0
  %v291 = vmax.f32 %v270, 0.0
  %v292 = vmax.f32 %v271, 0.0
  %v293 = vmax.f32 %v272, 0.0
  %294 = vst [vmem:[%s4] sm:$0xff] %v273
  %295 = vst [vmem:[%s4 + $0x8] sm:$0xff] %v274
  %296 = vst [vmem:[%s4 + $0x10] sm:$0xff] %v275
  %297 = vst [vmem:[%s4 + $0x18] sm:$0xff] %v276
  %298 = vst [vmem:[%s4 + $0x20] sm:$0xff] %v277
  %299 = vst [vmem:[%s4 + $0x28] sm:$0xff] %v278
  %300 = vst [vmem:[%s4 + $0x30] sm:$0xff] %v279
  %301 = vst [vmem:[%s4 + $0x38] sm:$0xff] %v280
  %302 = vst [vmem:[%s4 + $0x40] sm:$0xff] %v281
  %303 = vst [vmem:[%s4 + $0x48] sm:$0xff] %v282
  %304 = vst [vmem:[%s4 + $0x50] sm:$0xff] %v283
  %305 = vst [vmem:[%s4 + $0x58] sm:$0xff] %v284
  %306 = vst [vmem:[%s4 + $0x60] sm:$0xff] %v285
  %307 = vst [vmem:[%s4 + $0x68] sm:$0xff] %v286
  %308 = vst [vmem:[%s4 + $0x70] sm:$0xff] %v287
  %309 = vst [vmem:[%s4 + $0x78] sm:$0xff] %v288
  %310 = vst [vmem:[%s4 + $0x80] sm:$0xff] %v289
  %311 = vst [vmem:[%s4 + $0x88] sm:$0xff] %v290
  %312 = vst [vmem:[%s4 + $0x90] sm:$0xff] %v291
  %313 = vst [vmem:[%s4 + $0x98] sm:$0xff] %v292
  %314 = vst [vmem:[%s4 + $0xa0] sm:$0x3] %v293
  // Predicated region
  $region18: #{_lambda_.8} parent=0 // pred_check
    _
  $region19: #{_lambda_.8} parent=0 // pred_check_branch
    %316 = sbr.rel (0) target = $region21
  $region20: #{_lambda_.8} parent=0 // pred_region
    _
  $region21: #{_lambda_.8} parent=0 // pred_fallthru
    _
  // Predicated region
  $region22: #{_lambda_.8} parent=0 // pred_check
    _
  $region23: #{_lambda_.8} parent=0 // pred_check_branch
    %318 = sbr.rel (0) target = $region25
  $region24: #{_lambda_.8} parent=0 // pred_region
    _
  $region25: #{_lambda_.8} parent=0 // pred_fallthru
    _

// kernel: _lambda_.10
$region0: #{_lambda_.10}
  #allocation0 [shape = 'u32[]', space=smem, size = 0x4, offset = 0x4, fixed_abs, tag = 'smem constant byte address 0x4 - core index']
  #allocation1 [shape = 'u32[144,128]{1,0:T(1,128)}', space=vmem, size = 0x12000, scoped, tag = 'internal scratch']
  %s0 = inlined_call_operand.vmem [shape: f32[162,128], index: 0, kind: input, shape index: {}]
  %s1 = inlined_call_operand.vmem [shape: f32[128,128], index: 1, kind: input, shape index: {}]
  %s2 = inlined_call_operand.vmem [shape: f32[1,128], index: 2, kind: input, shape index: {}]
  %s3 = inlined_call_operand.vmem [shape: f32[162,128], index: 3, kind: input, shape index: {}]
  %s4 = inlined_call_operand.vmem [shape: f32[162,128], index: 4, kind: output, shape index: {}]
  %s5 = sld [smem:[#allocation0]]
  $region26: #{_lambda_.10} parent=0
    _
  %s7 = ssub.s32 1, %s5
  %s8 = scalar_select 0, %s7, %s5
  // Predicated region
  $region2: #{_lambda_.10} parent=0 // pred_check
    _
  $region3: #{_lambda_.10} parent=0 // pred_check_branch
    %10 = sbr.rel (0) target = $region5
  $region4: #{_lambda_.10} parent=0 // pred_region
    _
  $region5: #{_lambda_.10} parent=0 // pred_fallthru
    _
  // Predicated region
  $region6: #{_lambda_.10} parent=0 // pred_check
    _
  $region7: #{_lambda_.10} parent=0 // pred_check_branch
    %12 = sbr.rel (0) target = $region9
  $region8: #{_lambda_.10} parent=0 // pred_region
    _
  $region9: #{_lambda_.10} parent=0 // pred_fallthru
    _
  // Predicated region
  $region10: #{_lambda_.10} parent=0 // pred_check
    _
  $region11: #{_lambda_.10} parent=0 // pred_check_branch
    %14 = sbr.rel (0) target = $region13
  $region12: #{_lambda_.10} parent=0 // pred_region
    _
  $region13: #{_lambda_.10} parent=0 // pred_fallthru
    _
  // Predicated region
  $region14: #{_lambda_.10} parent=0 // pred_check
    _
  $region15: #{_lambda_.10} parent=0 // pred_check_branch
    %16 = sbr.rel (0) target = $region17
  $region16: #{_lambda_.10} parent=0 // pred_region
    _
  $region17: #{_lambda_.10} parent=0 // pred_fallthru
    _
  %v17 = vld [vmem:[%s0] sm:$0xff]
  %v18 = vld [vmem:[%s0 + $0x8] sm:$0xff]
  %v19 = vld [vmem:[%s0 + $0x10] sm:$0xff]
  %v20 = vld [vmem:[%s0 + $0x18] sm:$0xff]
  %v21 = vld [vmem:[%s0 + $0x20] sm:$0xff]
  %v22 = vld [vmem:[%s0 + $0x28] sm:$0xff]
  %v23 = vld [vmem:[%s0 + $0x30] sm:$0xff]
  %v24 = vld [vmem:[%s0 + $0x38] sm:$0xff]
  %v25 = vld [vmem:[%s0 + $0x40] sm:$0xff]
  %v26 = vld [vmem:[%s0 + $0x48] sm:$0xff]
  %v27 = vld [vmem:[%s0 + $0x50] sm:$0xff]
  %v28 = vld [vmem:[%s0 + $0x58] sm:$0xff]
  %v29 = vld [vmem:[%s0 + $0x60] sm:$0xff]
  %v30 = vld [vmem:[%s0 + $0x68] sm:$0xff]
  %v31 = vld [vmem:[%s0 + $0x70] sm:$0xff]
  %v32 = vld [vmem:[%s0 + $0x78] sm:$0xff]
  %v33 = vld [vmem:[%s0 + $0x80] sm:$0xff]
  %v34 = vld [vmem:[%s0 + $0x88] sm:$0xff]
  %v35 = vld [vmem:[%s0 + $0x90] sm:$0xff]
  %v36 = vld [vmem:[%s0 + $0x98] sm:$0xff]
  %v37 = vld [vmem:[%s0 + $0xa0] sm:$0x3]
  %v38 = vld [vmem:[%s1] sm:$0xff]
  %v39 = vld [vmem:[%s1 + $0x8] sm:$0xff]
  %v40 = vld [vmem:[%s1 + $0x10] sm:$0xff]
  %v41 = vld [vmem:[%s1 + $0x18] sm:$0xff]
  %v42 = vld [vmem:[%s1 + $0x20] sm:$0xff]
  %v43 = vld [vmem:[%s1 + $0x28] sm:$0xff]
  %v44 = vld [vmem:[%s1 + $0x30] sm:$0xff]
  %v45 = vld [vmem:[%s1 + $0x38] sm:$0xff]
  %v46 = vld [vmem:[%s1 + $0x40] sm:$0xff]
  %v47 = vld [vmem:[%s1 + $0x48] sm:$0xff]
  %v48 = vld [vmem:[%s1 + $0x50] sm:$0xff]
  %v49 = vld [vmem:[%s1 + $0x58] sm:$0xff]
  %v50 = vld [vmem:[%s1 + $0x60] sm:$0xff]
  %v51 = vld [vmem:[%s1 + $0x68] sm:$0xff]
  %v52 = vld [vmem:[%s1 + $0x70] sm:$0xff]
  %v53 = vld [vmem:[%s1 + $0x78] sm:$0xff]
  %v54 = vld [vmem:[%s2] sm:$0x1]
  %v56 = vlaneseq
  %v57 = vshrl.u32 %v56, 7
  %v58 = vsub.s32 0, %v57
  %v59 = vrot.slane %v54, %v58
  %61 = vmatprep.subr.mxu0 0.0
  %62 = vmatpush1.msra.mxu0 %v38
  %63 = vmatprep.subr.mxu0 0.0
  %64 = vmatpush1.msra.mxu0 %v39
  %65 = vmatprep.subr.mxu0 0.0
  %66 = vmatpush1.msra.mxu0 %v40
  %67 = vmatprep.subr.mxu0 0.0
  %68 = vmatpush1.msra.mxu0 %v41
  %69 = vmatprep.subr.mxu0 0.0
  %70 = vmatpush1.msra.mxu0 %v42
  %71 = vmatprep.subr.mxu0 0.0
  %72 = vmatpush1.msra.mxu0 %v43
  %73 = vmatprep.subr.mxu0 0.0
  %74 = vmatpush1.msra.mxu0 %v44
  %75 = vmatprep.subr.mxu0 0.0
  %76 = vmatpush1.msra.mxu0 %v45
  %77 = vmatprep.subr.mxu0 0.0
  %78 = vmatpush1.msra.mxu0 %v46
  %79 = vmatprep.subr.mxu0 0.0
  %80 = vmatpush1.msra.mxu0 %v47
  %81 = vmatprep.subr.mxu0 0.0
  %82 = vmatpush1.msra.mxu0 %v48
  %83 = vmatprep.subr.mxu0 0.0
  %84 = vmatpush1.msra.mxu0 %v49
  %85 = vmatprep.subr.mxu0 0.0
  %86 = vmatpush1.msra.mxu0 %v50
  %87 = vmatprep.subr.mxu0 0.0
  %88 = vmatpush1.msra.mxu0 %v51
  %89 = vmatprep.subr.mxu0 0.0
  %90 = vmatpush1.msra.mxu0 %v52
  %91 = vmatprep.subr.mxu0 0.0
  %92 = vmatpush1.msra.mxu0 %v53
  %93 = vmatprep.subr.mxu0 0.0
  %94 = vmatpush1.msra.mxu0 0.0
  %95 = vmatprep.subr.mxu0 0.0
  %96 = vmatpush1.msra.mxu0 0.0
  %97 = vmatprep.subr.mxu0 0.0
  %98 = vmatpush1.msra.mxu0 0.0
  %99 = vmatprep.subr.mxu0 0.0
  %100 = vmatpush1.msra.mxu0 0.0
  %101 = vmatprep.subr.mxu0 0.0
  %102 = vmatpush1.msra.mxu0 0.0
  %103 = vmatprep.subr.mxu0 0.0
  %104 = vmatpush1.msra.mxu0 0.0
  %105 = vmatprep.subr.mxu0 0.0
  %106 = vmatpush1.msra.mxu0 0.0
  %107 = vmatprep.subr.mxu0 0.0
  %108 = vmatpush1.msra.mxu0 0.0
  %109 = vmatprep.subr.mxu0 0.0
  %110 = vmatpush1.msra.mxu0 0.0
  %111 = vmatprep.subr.mxu0 0.0
  %112 = vmatpush1.msra.mxu0 0.0
  %113 = vmatprep.subr.mxu0 0.0
  %114 = vmatpush1.msra.mxu0 0.0
  %115 = vmatprep.subr.mxu0 0.0
  %116 = vmatpush1.msra.mxu0 0.0
  %117 = vmatprep.subr.mxu0 0.0
  %118 = vmatpush1.msra.mxu0 0.0
  %119 = vmatprep.subr.mxu0 0.0
  %120 = vmatpush1.msra.mxu0 0.0
  %121 = vmatprep.subr.mxu0 0.0
  %122 = vmatpush1.msra.mxu0 0.0
  %123 = vmatprep.subr.mxu0 0.0
  %124 = vmatpush1.msra.mxu0 0.0
  %125 = vmatprep.mubr.f32.mxu0 0.0
  %126 = vmatmul.mubr.f32.gmra.mrb[0].mxu0 %v17
  %v127 = vpop.f32.mrb[0].mxu0
  %v128 = vadd.f32 %v59, %v127
  %v129 = vpop.f32.mrb[0].mxu0
  %130 = vmatprep.mubr.f32.mxu0 0.0
  %131 = vmatmul.mubr.f32.gmra.mrb[0].mxu0 %v18
  %v132 = vpop.f32.mrb[0].mxu0
  %v133 = vadd.f32 %v59, %v132
  %v134 = vpop.f32.mrb[0].mxu0
  %135 = vmatprep.mubr.f32.mxu0 0.0
  %136 = vmatmul.mubr.f32.gmra.mrb[0].mxu0 %v19
  %v137 = vpop.f32.mrb[0].mxu0
  %v138 = vadd.f32 %v59, %v137
  %v139 = vpop.f32.mrb[0].mxu0
  %140 = vmatprep.mubr.f32.mxu0 0.0
  %141 = vmatmul.mubr.f32.gmra.mrb[0].mxu0 %v20
  %v142 = vpop.f32.mrb[0].mxu0
  %v143 = vadd.f32 %v59, %v142
  %v144 = vpop.f32.mrb[0].mxu0
  %145 = vmatprep.mubr.f32.mxu0 0.0
  %146 = vmatmul.mubr.f32.gmra.mrb[0].mxu0 %v21
  %v147 = vpop.f32.mrb[0].mxu0
  %v148 = vadd.f32 %v59, %v147
  %v149 = vpop.f32.mrb[0].mxu0
  %150 = vmatprep.mubr.f32.mxu0 0.0
  %151 = vmatmul.mubr.f32.gmra.mrb[0].mxu0 %v22
  %v152 = vpop.f32.mrb[0].mxu0
  %v153 = vadd.f32 %v59, %v152
  %v154 = vpop.f32.mrb[0].mxu0
  %155 = vmatprep.mubr.f32.mxu0 0.0
  %156 = vmatmul.mubr.f32.gmra.mrb[0].mxu0 %v23
  %v157 = vpop.f32.mrb[0].mxu0
  %v158 = vadd.f32 %v59, %v157
  %v159 = vpop.f32.mrb[0].mxu0
  %160 = vmatprep.mubr.f32.mxu0 0.0
  %161 = vmatmul.mubr.f32.gmra.mrb[0].mxu0 %v24
  %v162 = vpop.f32.mrb[0].mxu0
  %v163 = vadd.f32 %v59, %v162
  %v164 = vpop.f32.mrb[0].mxu0
  %165 = vmatprep.mubr.f32.mxu0 0.0
  %166 = vmatmul.mubr.f32.gmra.mrb[0].mxu0 %v25
  %v167 = vpop.f32.mrb[0].mxu0
  %v168 = vadd.f32 %v59, %v167
  %v169 = vpop.f32.mrb[0].mxu0
  %170 = vmatprep.mubr.f32.mxu0 0.0
  %171 = vmatmul.mubr.f32.gmra.mrb[0].mxu0 %v26
  %v172 = vpop.f32.mrb[0].mxu0
  %v173 = vadd.f32 %v59, %v172
  %v174 = vpop.f32.mrb[0].mxu0
  %175 = vmatprep.mubr.f32.mxu0 0.0
  %176 = vmatmul.mubr.f32.gmra.mrb[0].mxu0 %v27
  %v177 = vpop.f32.mrb[0].mxu0
  %v178 = vadd.f32 %v59, %v177
  %v179 = vpop.f32.mrb[0].mxu0
  %180 = vmatprep.mubr.f32.mxu0 0.0
  %181 = vmatmul.mubr.f32.gmra.mrb[0].mxu0 %v28
  %v182 = vpop.f32.mrb[0].mxu0
  %v183 = vadd.f32 %v59, %v182
  %v184 = vpop.f32.mrb[0].mxu0
  %185 = vmatprep.mubr.f32.mxu0 0.0
  %186 = vmatmul.mubr.f32.gmra.mrb[0].mxu0 %v29
  %v187 = vpop.f32.mrb[0].mxu0
  %v188 = vadd.f32 %v59, %v187
  %v189 = vpop.f32.mrb[0].mxu0
  %190 = vmatprep.mubr.f32.mxu0 0.0
  %191 = vmatmul.mubr.f32.gmra.mrb[0].mxu0 %v30
  %v192 = vpop.f32.mrb[0].mxu0
  %v193 = vadd.f32 %v59, %v192
  %v194 = vpop.f32.mrb[0].mxu0
  %195 = vmatprep.mubr.f32.mxu0 0.0
  %196 = vmatmul.mubr.f32.gmra.mrb[0].mxu0 %v31
  %v197 = vpop.f32.mrb[0].mxu0
  %v198 = vadd.f32 %v59, %v197
  %v199 = vpop.f32.mrb[0].mxu0
  %200 = vmatprep.mubr.f32.mxu0 0.0
  %201 = vmatmul.mubr.f32.gmra.mrb[0].mxu0 %v32
  %v202 = vpop.f32.mrb[0].mxu0
  %v203 = vadd.f32 %v59, %v202
  %v204 = vpop.f32.mrb[0].mxu0
  %205 = vmatprep.mubr.f32.mxu0 0.0
  %206 = vmatmul.mubr.f32.gmra.mrb[0].mxu0 %v33
  %v207 = vpop.f32.mrb[0].mxu0
  %v208 = vadd.f32 %v59, %v207
  %v209 = vpop.f32.mrb[0].mxu0
  %210 = vmatprep.mubr.f32.mxu0 0.0
  %211 = vmatmul.mubr.f32.gmra.mrb[0].mxu0 %v34
  %v212 = vpop.f32.mrb[0].mxu0
  %v213 = vadd.f32 %v59, %v212
  %v214 = vpop.f32.mrb[0].mxu0
  %215 = vmatprep.mubr.f32.mxu0 0.0
  %216 = vmatmul.mubr.f32.gmra.mrb[0].mxu0 %v35
  %v217 = vpop.f32.mrb[0].mxu0
  %v218 = vadd.f32 %v59, %v217
  %v219 = vpop.f32.mrb[0].mxu0
  %220 = vmatprep.mubr.f32.mxu0 0.0
  %221 = vmatmul.mubr.f32.gmra.mrb[0].mxu0 %v36
  %v222 = vpop.f32.mrb[0].mxu0
  %v223 = vadd.f32 %v59, %v222
  %v224 = vpop.f32.mrb[0].mxu0
  %225 = vmatprep.mubr.f32.mxu0 0.0
  %226 = vmatmul.mubr.f32.gmra.mrb[0].mxu0 %v37
  %v227 = vpop.f32.mrb[0].mxu0
  %v228 = vadd.f32 %v59, %v227
  %v229 = vpop.f32.mrb[0].mxu0
  %230 = vdwg.mxu0
  %v231 = vld [vmem:[%s3] sm:$0xff]
  %v232 = vld [vmem:[%s3 + $0x8] sm:$0xff]
  %v233 = vld [vmem:[%s3 + $0x10] sm:$0xff]
  %v234 = vld [vmem:[%s3 + $0x18] sm:$0xff]
  %v235 = vld [vmem:[%s3 + $0x20] sm:$0xff]
  %v236 = vld [vmem:[%s3 + $0x28] sm:$0xff]
  %v237 = vld [vmem:[%s3 + $0x30] sm:$0xff]
  %v238 = vld [vmem:[%s3 + $0x38] sm:$0xff]
  %v239 = vld [vmem:[%s3 + $0x40] sm:$0xff]
  %v240 = vld [vmem:[%s3 + $0x48] sm:$0xff]
  %v241 = vld [vmem:[%s3 + $0x50] sm:$0xff]
  %v242 = vld [vmem:[%s3 + $0x58] sm:$0xff]
  %v243 = vld [vmem:[%s3 + $0x60] sm:$0xff]
  %v244 = vld [vmem:[%s3 + $0x68] sm:$0xff]
  %v245 = vld [vmem:[%s3 + $0x70] sm:$0xff]
  %v246 = vld [vmem:[%s3 + $0x78] sm:$0xff]
  %v247 = vld [vmem:[%s3 + $0x80] sm:$0xff]
  %v248 = vld [vmem:[%s3 + $0x88] sm:$0xff]
  %v249 = vld [vmem:[%s3 + $0x90] sm:$0xff]
  %v250 = vld [vmem:[%s3 + $0x98] sm:$0xff]
  %v251 = vld [vmem:[%s3 + $0xa0] sm:$0x3]
  %v252 = vadd.f32 %v128, %v231
  %v253 = vadd.f32 %v133, %v232
  %v254 = vadd.f32 %v138, %v233
  %v255 = vadd.f32 %v143, %v234
  %v256 = vadd.f32 %v148, %v235
  %v257 = vadd.f32 %v153, %v236
  %v258 = vadd.f32 %v158, %v237
  %v259 = vadd.f32 %v163, %v238
  %v260 = vadd.f32 %v168, %v239
  %v261 = vadd.f32 %v173, %v240
  %v262 = vadd.f32 %v178, %v241
  %v263 = vadd.f32 %v183, %v242
  %v264 = vadd.f32 %v188, %v243
  %v265 = vadd.f32 %v193, %v244
  %v266 = vadd.f32 %v198, %v245
  %v267 = vadd.f32 %v203, %v246
  %v268 = vadd.f32 %v208, %v247
  %v269 = vadd.f32 %v213, %v248
  %v270 = vadd.f32 %v218, %v249
  %v271 = vadd.f32 %v223, %v250
  %v272 = vadd.f32 %v228, %v251
  %273 = vst [vmem:[%s4] sm:$0xff] %v252
  %274 = vst [vmem:[%s4 + $0x8] sm:$0xff] %v253
  %275 = vst [vmem:[%s4 + $0x10] sm:$0xff] %v254
  %276 = vst [vmem:[%s4 + $0x18] sm:$0xff] %v255
  %277 = vst [vmem:[%s4 + $0x20] sm:$0xff] %v256
  %278 = vst [vmem:[%s4 + $0x28] sm:$0xff] %v257
  %279 = vst [vmem:[%s4 + $0x30] sm:$0xff] %v258
  %280 = vst [vmem:[%s4 + $0x38] sm:$0xff] %v259
  %281 = vst [vmem:[%s4 + $0x40] sm:$0xff] %v260
  %282 = vst [vmem:[%s4 + $0x48] sm:$0xff] %v261
  %283 = vst [vmem:[%s4 + $0x50] sm:$0xff] %v262
  %284 = vst [vmem:[%s4 + $0x58] sm:$0xff] %v263
  %285 = vst [vmem:[%s4 + $0x60] sm:$0xff] %v264
  %286 = vst [vmem:[%s4 + $0x68] sm:$0xff] %v265
  %287 = vst [vmem:[%s4 + $0x70] sm:$0xff] %v266
  %288 = vst [vmem:[%s4 + $0x78] sm:$0xff] %v267
  %289 = vst [vmem:[%s4 + $0x80] sm:$0xff] %v268
  %290 = vst [vmem:[%s4 + $0x88] sm:$0xff] %v269
  %291 = vst [vmem:[%s4 + $0x90] sm:$0xff] %v270
  %292 = vst [vmem:[%s4 + $0x98] sm:$0xff] %v271
  %293 = vst [vmem:[%s4 + $0xa0] sm:$0x3] %v272
  // Predicated region
  $region18: #{_lambda_.10} parent=0 // pred_check
    _
  $region19: #{_lambda_.10} parent=0 // pred_check_branch
    %295 = sbr.rel (0) target = $region21
  $region20: #{_lambda_.10} parent=0 // pred_region
    _
  $region21: #{_lambda_.10} parent=0 // pred_fallthru
    _
  // Predicated region
  $region22: #{_lambda_.10} parent=0 // pred_check
    _
  $region23: #{_lambda_.10} parent=0 // pred_check_branch
    %297 = sbr.rel (0) target = $region25
  $region24: #{_lambda_.10} parent=0 // pred_region
    _
  $region25: #{_lambda_.10} parent=0 // pred_fallthru
    _

// kernel: _lambda_.11
$region0: #{_lambda_.11}
  #allocation0 [shape = 'u32[]', space=smem, size = 0x4, offset = 0x4, fixed_abs, tag = 'smem constant byte address 0x4 - core index']
  #allocation1 [shape = 'u32[144,128]{1,0:T(1,128)}', space=vmem, size = 0x12000, scoped, tag = 'internal scratch']
  %s0 = inlined_call_operand.vmem [shape: f32[128,128], index: 0, kind: input, shape index: {}]
  %s1 = inlined_call_operand.vmem [shape: f32[128,128], index: 1, kind: input, shape index: {}]
  %s2 = inlined_call_operand.vmem [shape: f32[1,128], index: 2, kind: input, shape index: {}]
  %s3 = inlined_call_operand.vmem [shape: f32[128,4], index: 3, kind: input, shape index: {}]
  %s4 = inlined_call_operand.vmem [shape: f32[1,4], index: 4, kind: input, shape index: {}]
  %s5 = inlined_call_operand.vmem [shape: f32[128,4], index: 5, kind: output, shape index: {}]
  %s6 = sld [smem:[#allocation0]]
  $region30: #{_lambda_.11} parent=0
    _
  %s8 = ssub.s32 1, %s6
  %s9 = scalar_select 0, %s8, %s6
  // Predicated region
  $region2: #{_lambda_.11} parent=0 // pred_check
    _
  $region3: #{_lambda_.11} parent=0 // pred_check_branch
    %11 = sbr.rel (0) target = $region5
  $region4: #{_lambda_.11} parent=0 // pred_region
    _
  $region5: #{_lambda_.11} parent=0 // pred_fallthru
    _
  // Predicated region
  $region6: #{_lambda_.11} parent=0 // pred_check
    _
  $region7: #{_lambda_.11} parent=0 // pred_check_branch
    %13 = sbr.rel (0) target = $region9
  $region8: #{_lambda_.11} parent=0 // pred_region
    _
  $region9: #{_lambda_.11} parent=0 // pred_fallthru
    _
  // Predicated region
  $region10: #{_lambda_.11} parent=0 // pred_check
    _
  $region11: #{_lambda_.11} parent=0 // pred_check_branch
    %15 = sbr.rel (0) target = $region13
  $region12: #{_lambda_.11} parent=0 // pred_region
    _
  $region13: #{_lambda_.11} parent=0 // pred_fallthru
    _
  // Predicated region
  $region14: #{_lambda_.11} parent=0 // pred_check
    _
  $region15: #{_lambda_.11} parent=0 // pred_check_branch
    %17 = sbr.rel (0) target = $region17
  $region16: #{_lambda_.11} parent=0 // pred_region
    _
  $region17: #{_lambda_.11} parent=0 // pred_fallthru
    _
  // Predicated region
  $region18: #{_lambda_.11} parent=0 // pred_check
    _
  $region19: #{_lambda_.11} parent=0 // pred_check_branch
    %19 = sbr.rel (0) target = $region21
  $region20: #{_lambda_.11} parent=0 // pred_region
    _
  $region21: #{_lambda_.11} parent=0 // pred_fallthru
    _
  %v20 = vld [vmem:[%s0] sm:$0xff]
  %v21 = vld [vmem:[%s0 + $0x8] sm:$0xff]
  %v22 = vld [vmem:[%s0 + $0x10] sm:$0xff]
  %v23 = vld [vmem:[%s0 + $0x18] sm:$0xff]
  %v24 = vld [vmem:[%s0 + $0x20] sm:$0xff]
  %v25 = vld [vmem:[%s0 + $0x28] sm:$0xff]
  %v26 = vld [vmem:[%s0 + $0x30] sm:$0xff]
  %v27 = vld [vmem:[%s0 + $0x38] sm:$0xff]
  %v28 = vld [vmem:[%s0 + $0x40] sm:$0xff]
  %v29 = vld [vmem:[%s0 + $0x48] sm:$0xff]
  %v30 = vld [vmem:[%s0 + $0x50] sm:$0xff]
  %v31 = vld [vmem:[%s0 + $0x58] sm:$0xff]
  %v32 = vld [vmem:[%s0 + $0x60] sm:$0xff]
  %v33 = vld [vmem:[%s0 + $0x68] sm:$0xff]
  %v34 = vld [vmem:[%s0 + $0x70] sm:$0xff]
  %v35 = vld [vmem:[%s0 + $0x78] sm:$0xff]
  %v36 = vld [vmem:[%s1] sm:$0xff]
  %v37 = vld [vmem:[%s1 + $0x8] sm:$0xff]
  %v38 = vld [vmem:[%s1 + $0x10] sm:$0xff]
  %v39 = vld [vmem:[%s1 + $0x18] sm:$0xff]
  %v40 = vld [vmem:[%s1 + $0x20] sm:$0xff]
  %v41 = vld [vmem:[%s1 + $0x28] sm:$0xff]
  %v42 = vld [vmem:[%s1 + $0x30] sm:$0xff]
  %v43 = vld [vmem:[%s1 + $0x38] sm:$0xff]
  %v44 = vld [vmem:[%s1 + $0x40] sm:$0xff]
  %v45 = vld [vmem:[%s1 + $0x48] sm:$0xff]
  %v46 = vld [vmem:[%s1 + $0x50] sm:$0xff]
  %v47 = vld [vmem:[%s1 + $0x58] sm:$0xff]
  %v48 = vld [vmem:[%s1 + $0x60] sm:$0xff]
  %v49 = vld [vmem:[%s1 + $0x68] sm:$0xff]
  %v50 = vld [vmem:[%s1 + $0x70] sm:$0xff]
  %v51 = vld [vmem:[%s1 + $0x78] sm:$0xff]
  %v52 = vld [vmem:[%s2] sm:$0x1]
  %v54 = vlaneseq
  %v55 = vshrl.u32 %v54, 7
  %v56 = vsub.s32 0, %v55
  %v57 = vrot.slane %v52, %v56
  %59 = vmatprep.subr.mxu0 0.0
  %60 = vmatpush1.msra.mxu0 %v36
  %61 = vmatprep.subr.mxu0 0.0
  %62 = vmatpush1.msra.mxu0 %v37
  %63 = vmatprep.subr.mxu0 0.0
  %64 = vmatpush1.msra.mxu0 %v38
  %65 = vmatprep.subr.mxu0 0.0
  %66 = vmatpush1.msra.mxu0 %v39
  %67 = vmatprep.subr.mxu0 0.0
  %68 = vmatpush1.msra.mxu0 %v40
  %69 = vmatprep.subr.mxu0 0.0
  %70 = vmatpush1.msra.mxu0 %v41
  %71 = vmatprep.subr.mxu0 0.0
  %72 = vmatpush1.msra.mxu0 %v42
  %73 = vmatprep.subr.mxu0 0.0
  %74 = vmatpush1.msra.mxu0 %v43
  %75 = vmatprep.subr.mxu0 0.0
  %76 = vmatpush1.msra.mxu0 %v44
  %77 = vmatprep.subr.mxu0 0.0
  %78 = vmatpush1.msra.mxu0 %v45
  %79 = vmatprep.subr.mxu0 0.0
  %80 = vmatpush1.msra.mxu0 %v46
  %81 = vmatprep.subr.mxu0 0.0
  %82 = vmatpush1.msra.mxu0 %v47
  %83 = vmatprep.subr.mxu0 0.0
  %84 = vmatpush1.msra.mxu0 %v48
  %85 = vmatprep.subr.mxu0 0.0
  %86 = vmatpush1.msra.mxu0 %v49
  %87 = vmatprep.subr.mxu0 0.0
  %88 = vmatpush1.msra.mxu0 %v50
  %89 = vmatprep.subr.mxu0 0.0
  %90 = vmatpush1.msra.mxu0 %v51
  %91 = vmatprep.subr.mxu0 0.0
  %92 = vmatpush1.msra.mxu0 0.0
  %93 = vmatprep.subr.mxu0 0.0
  %94 = vmatpush1.msra.mxu0 0.0
  %95 = vmatprep.subr.mxu0 0.0
  %96 = vmatpush1.msra.mxu0 0.0
  %97 = vmatprep.subr.mxu0 0.0
  %98 = vmatpush1.msra.mxu0 0.0
  %99 = vmatprep.subr.mxu0 0.0
  %100 = vmatpush1.msra.mxu0 0.0
  %101 = vmatprep.subr.mxu0 0.0
  %102 = vmatpush1.msra.mxu0 0.0
  %103 = vmatprep.subr.mxu0 0.0
  %104 = vmatpush1.msra.mxu0 0.0
  %105 = vmatprep.subr.mxu0 0.0
  %106 = vmatpush1.msra.mxu0 0.0
  %107 = vmatprep.subr.mxu0 0.0
  %108 = vmatpush1.msra.mxu0 0.0
  %109 = vmatprep.subr.mxu0 0.0
  %110 = vmatpush1.msra.mxu0 0.0
  %111 = vmatprep.subr.mxu0 0.0
  %112 = vmatpush1.msra.mxu0 0.0
  %113 = vmatprep.subr.mxu0 0.0
  %114 = vmatpush1.msra.mxu0 0.0
  %115 = vmatprep.subr.mxu0 0.0
  %116 = vmatpush1.msra.mxu0 0.0
  %117 = vmatprep.subr.mxu0 0.0
  %118 = vmatpush1.msra.mxu0 0.0
  %119 = vmatprep.subr.mxu0 0.0
  %120 = vmatpush1.msra.mxu0 0.0
  %121 = vmatprep.subr.mxu0 0.0
  %122 = vmatpush1.msra.mxu0 0.0
  %123 = vmatprep.mubr.f32.mxu0 0.0
  %124 = vmatmul.mubr.f32.gmra.mrb[0].mxu0 %v20
  %v125 = vpop.f32.mrb[0].mxu0
  %v126 = vadd.f32 %v57, %v125
  %v127 = vpop.f32.mrb[0].mxu0
  %128 = vmatprep.mubr.f32.mxu0 0.0
  %129 = vmatmul.mubr.f32.gmra.mrb[0].mxu0 %v21
  %v130 = vpop.f32.mrb[0].mxu0
  %v131 = vadd.f32 %v57, %v130
  %v132 = vpop.f32.mrb[0].mxu0
  %133 = vmatprep.mubr.f32.mxu0 0.0
  %134 = vmatmul.mubr.f32.gmra.mrb[0].mxu0 %v22
  %v135 = vpop.f32.mrb[0].mxu0
  %v136 = vadd.f32 %v57, %v135
  %v137 = vpop.f32.mrb[0].mxu0
  %138 = vmatprep.mubr.f32.mxu0 0.0
  %139 = vmatmul.mubr.f32.gmra.mrb[0].mxu0 %v23
  %v140 = vpop.f32.mrb[0].mxu0
  %v141 = vadd.f32 %v57, %v140
  %v142 = vpop.f32.mrb[0].mxu0
  %143 = vmatprep.mubr.f32.mxu0 0.0
  %144 = vmatmul.mubr.f32.gmra.mrb[0].mxu0 %v24
  %v145 = vpop.f32.mrb[0].mxu0
  %v146 = vadd.f32 %v57, %v145
  %v147 = vpop.f32.mrb[0].mxu0
  %148 = vmatprep.mubr.f32.mxu0 0.0
  %149 = vmatmul.mubr.f32.gmra.mrb[0].mxu0 %v25
  %v150 = vpop.f32.mrb[0].mxu0
  %v151 = vadd.f32 %v57, %v150
  %v152 = vpop.f32.mrb[0].mxu0
  %153 = vmatprep.mubr.f32.mxu0 0.0
  %154 = vmatmul.mubr.f32.gmra.mrb[0].mxu0 %v26
  %v155 = vpop.f32.mrb[0].mxu0
  %v156 = vadd.f32 %v57, %v155
  %v157 = vpop.f32.mrb[0].mxu0
  %158 = vmatprep.mubr.f32.mxu0 0.0
  %159 = vmatmul.mubr.f32.gmra.mrb[0].mxu0 %v27
  %v160 = vpop.f32.mrb[0].mxu0
  %v161 = vadd.f32 %v57, %v160
  %v162 = vpop.f32.mrb[0].mxu0
  %163 = vmatprep.mubr.f32.mxu0 0.0
  %164 = vmatmul.mubr.f32.gmra.mrb[0].mxu0 %v28
  %v165 = vpop.f32.mrb[0].mxu0
  %v166 = vadd.f32 %v57, %v165
  %v167 = vpop.f32.mrb[0].mxu0
  %168 = vmatprep.mubr.f32.mxu0 0.0
  %169 = vmatmul.mubr.f32.gmra.mrb[0].mxu0 %v29
  %v170 = vpop.f32.mrb[0].mxu0
  %v171 = vadd.f32 %v57, %v170
  %v172 = vpop.f32.mrb[0].mxu0
  %173 = vmatprep.mubr.f32.mxu0 0.0
  %174 = vmatmul.mubr.f32.gmra.mrb[0].mxu0 %v30
  %v175 = vpop.f32.mrb[0].mxu0
  %v176 = vadd.f32 %v57, %v175
  %v177 = vpop.f32.mrb[0].mxu0
  %178 = vmatprep.mubr.f32.mxu0 0.0
  %179 = vmatmul.mubr.f32.gmra.mrb[0].mxu0 %v31
  %v180 = vpop.f32.mrb[0].mxu0
  %v181 = vadd.f32 %v57, %v180
  %v182 = vpop.f32.mrb[0].mxu0
  %183 = vmatprep.mubr.f32.mxu0 0.0
  %184 = vmatmul.mubr.f32.gmra.mrb[0].mxu0 %v32
  %v185 = vpop.f32.mrb[0].mxu0
  %v186 = vadd.f32 %v57, %v185
  %v187 = vpop.f32.mrb[0].mxu0
  %188 = vmatprep.mubr.f32.mxu0 0.0
  %189 = vmatmul.mubr.f32.gmra.mrb[0].mxu0 %v33
  %v190 = vpop.f32.mrb[0].mxu0
  %v191 = vadd.f32 %v57, %v190
  %v192 = vpop.f32.mrb[0].mxu0
  %193 = vmatprep.mubr.f32.mxu0 0.0
  %194 = vmatmul.mubr.f32.gmra.mrb[0].mxu0 %v34
  %v195 = vpop.f32.mrb[0].mxu0
  %v196 = vadd.f32 %v57, %v195
  %v197 = vpop.f32.mrb[0].mxu0
  %198 = vmatprep.mubr.f32.mxu0 0.0
  %199 = vmatmul.mubr.f32.gmra.mrb[0].mxu0 %v35
  %v200 = vpop.f32.mrb[0].mxu0
  %v201 = vadd.f32 %v57, %v200
  %v202 = vpop.f32.mrb[0].mxu0
  %203 = vdwg.mxu0
  %v204 = vmax.f32 %v126, 0.0
  %v205 = vmax.f32 %v131, 0.0
  %v206 = vmax.f32 %v136, 0.0
  %v207 = vmax.f32 %v141, 0.0
  %v208 = vmax.f32 %v146, 0.0
  %v209 = vmax.f32 %v151, 0.0
  %v210 = vmax.f32 %v156, 0.0
  %v211 = vmax.f32 %v161, 0.0
  %v212 = vmax.f32 %v166, 0.0
  %v213 = vmax.f32 %v171, 0.0
  %v214 = vmax.f32 %v176, 0.0
  %v215 = vmax.f32 %v181, 0.0
  %v216 = vmax.f32 %v186, 0.0
  %v217 = vmax.f32 %v191, 0.0
  %v218 = vmax.f32 %v196, 0.0
  %v219 = vmax.f32 %v201, 0.0
  %v220 = vld [vmem:[%s3] sm:$0xff]
  %v221 = vld [vmem:[%s3 + $0x8] sm:$0xff]
  %v222 = vld [vmem:[%s3 + $0x10] sm:$0xff]
  %v223 = vld [vmem:[%s3 + $0x18] sm:$0xff]
  %v224 = vld [vmem:[%s3 + $0x20] sm:$0xff]
  %v225 = vld [vmem:[%s3 + $0x28] sm:$0xff]
  %v226 = vld [vmem:[%s3 + $0x30] sm:$0xff]
  %v227 = vld [vmem:[%s3 + $0x38] sm:$0xff]
  %v228 = vld [vmem:[%s3 + $0x40] sm:$0xff]
  %v229 = vld [vmem:[%s3 + $0x48] sm:$0xff]
  %v230 = vld [vmem:[%s3 + $0x50] sm:$0xff]
  %v231 = vld [vmem:[%s3 + $0x58] sm:$0xff]
  %v232 = vld [vmem:[%s3 + $0x60] sm:$0xff]
  %v233 = vld [vmem:[%s3 + $0x68] sm:$0xff]
  %v234 = vld [vmem:[%s3 + $0x70] sm:$0xff]
  %v235 = vld [vmem:[%s3 + $0x78] sm:$0xff]
  %v236 = vld [vmem:[%s4] sm:$0x1]
  %v238 = vlaneseq
  %v239 = vshrl.u32 %v238, 7
  %v240 = vsub.s32 0, %v239
  %v241 = vrot.slane %v236, %v240
  %243 = vmatprep.subr.mxu0 0.0
  %244 = vmatpush1.msra.mxu0 %v220
  %245 = vmatprep.subr.mxu0 0.0
  %246 = vmatpush1.msra.mxu0 %v221
  %247 = vmatprep.subr.mxu0 0.0
  %248 = vmatpush1.msra.mxu0 %v222
  %249 = vmatprep.subr.mxu0 0.0
  %250 = vmatpush1.msra.mxu0 %v223
  %251 = vmatprep.subr.mxu0 0.0
  %252 = vmatpush1.msra.mxu0 %v224
  %253 = vmatprep.subr.mxu0 0.0
  %254 = vmatpush1.msra.mxu0 %v225
  %255 = vmatprep.subr.mxu0 0.0
  %256 = vmatpush1.msra.mxu0 %v226
  %257 = vmatprep.subr.mxu0 0.0
  %258 = vmatpush1.msra.mxu0 %v227
  %259 = vmatprep.subr.mxu0 0.0
  %260 = vmatpush1.msra.mxu0 %v228
  %261 = vmatprep.subr.mxu0 0.0
  %262 = vmatpush1.msra.mxu0 %v229
  %263 = vmatprep.subr.mxu0 0.0
  %264 = vmatpush1.msra.mxu0 %v230
  %265 = vmatprep.subr.mxu0 0.0
  %266 = vmatpush1.msra.mxu0 %v231
  %267 = vmatprep.subr.mxu0 0.0
  %268 = vmatpush1.msra.mxu0 %v232
  %269 = vmatprep.subr.mxu0 0.0
  %270 = vmatpush1.msra.mxu0 %v233
  %271 = vmatprep.subr.mxu0 0.0
  %272 = vmatpush1.msra.mxu0 %v234
  %273 = vmatprep.subr.mxu0 0.0
  %274 = vmatpush1.msra.mxu0 %v235
  %275 = vmatprep.subr.mxu0 0.0
  %276 = vmatpush1.msra.mxu0 0.0
  %277 = vmatprep.subr.mxu0 0.0
  %278 = vmatpush1.msra.mxu0 0.0
  %279 = vmatprep.subr.mxu0 0.0
  %280 = vmatpush1.msra.mxu0 0.0
  %281 = vmatprep.subr.mxu0 0.0
  %282 = vmatpush1.msra.mxu0 0.0
  %283 = vmatprep.subr.mxu0 0.0
  %284 = vmatpush1.msra.mxu0 0.0
  %285 = vmatprep.subr.mxu0 0.0
  %286 = vmatpush1.msra.mxu0 0.0
  %287 = vmatprep.subr.mxu0 0.0
  %288 = vmatpush1.msra.mxu0 0.0
  %289 = vmatprep.subr.mxu0 0.0
  %290 = vmatpush1.msra.mxu0 0.0
  %291 = vmatprep.subr.mxu0 0.0
  %292 = vmatpush1.msra.mxu0 0.0
  %293 = vmatprep.subr.mxu0 0.0
  %294 = vmatpush1.msra.mxu0 0.0
  %295 = vmatprep.subr.mxu0 0.0
  %296 = vmatpush1.msra.mxu0 0.0
  %297 = vmatprep.subr.mxu0 0.0
  %298 = vmatpush1.msra.mxu0 0.0
  %299 = vmatprep.subr.mxu0 0.0
  %300 = vmatpush1.msra.mxu0 0.0
  %301 = vmatprep.subr.mxu0 0.0
  %302 = vmatpush1.msra.mxu0 0.0
  %303 = vmatprep.subr.mxu0 0.0
  %304 = vmatpush1.msra.mxu0 0.0
  %305 = vmatprep.subr.mxu0 0.0
  %306 = vmatpush1.msra.mxu0 0.0
  %307 = vmatprep.mubr.f32.mxu0 0.0
  %308 = vmatmul.mubr.f32.gmra.mrb[0].mxu0 %v204
  %v309 = vpop.f32.mrb[0].mxu0
  %v310 = vadd.f32 %v241, %v309
  %v311 = vpop.f32.mrb[0].mxu0
  %312 = vmatprep.mubr.f32.mxu0 0.0
  %313 = vmatmul.mubr.f32.gmra.mrb[0].mxu0 %v205
  %v314 = vpop.f32.mrb[0].mxu0
  %v315 = vadd.f32 %v241, %v314
  %v316 = vpop.f32.mrb[0].mxu0
  %317 = vmatprep.mubr.f32.mxu0 0.0
  %318 = vmatmul.mubr.f32.gmra.mrb[0].mxu0 %v206
  %v319 = vpop.f32.mrb[0].mxu0
  %v320 = vadd.f32 %v241, %v319
  %v321 = vpop.f32.mrb[0].mxu0
  %322 = vmatprep.mubr.f32.mxu0 0.0
  %323 = vmatmul.mubr.f32.gmra.mrb[0].mxu0 %v207
  %v324 = vpop.f32.mrb[0].mxu0
  %v325 = vadd.f32 %v241, %v324
  %v326 = vpop.f32.mrb[0].mxu0
  %327 = vmatprep.mubr.f32.mxu0 0.0
  %328 = vmatmul.mubr.f32.gmra.mrb[0].mxu0 %v208
  %v329 = vpop.f32.mrb[0].mxu0
  %v330 = vadd.f32 %v241, %v329
  %v331 = vpop.f32.mrb[0].mxu0
  %332 = vmatprep.mubr.f32.mxu0 0.0
  %333 = vmatmul.mubr.f32.gmra.mrb[0].mxu0 %v209
  %v334 = vpop.f32.mrb[0].mxu0
  %v335 = vadd.f32 %v241, %v334
  %v336 = vpop.f32.mrb[0].mxu0
  %337 = vmatprep.mubr.f32.mxu0 0.0
  %338 = vmatmul.mubr.f32.gmra.mrb[0].mxu0 %v210
  %v339 = vpop.f32.mrb[0].mxu0
  %v340 = vadd.f32 %v241, %v339
  %v341 = vpop.f32.mrb[0].mxu0
  %342 = vmatprep.mubr.f32.mxu0 0.0
  %343 = vmatmul.mubr.f32.gmra.mrb[0].mxu0 %v211
  %v344 = vpop.f32.mrb[0].mxu0
  %v345 = vadd.f32 %v241, %v344
  %v346 = vpop.f32.mrb[0].mxu0
  %347 = vmatprep.mubr.f32.mxu0 0.0
  %348 = vmatmul.mubr.f32.gmra.mrb[0].mxu0 %v212
  %v349 = vpop.f32.mrb[0].mxu0
  %v350 = vadd.f32 %v241, %v349
  %v351 = vpop.f32.mrb[0].mxu0
  %352 = vmatprep.mubr.f32.mxu0 0.0
  %353 = vmatmul.mubr.f32.gmra.mrb[0].mxu0 %v213
  %v354 = vpop.f32.mrb[0].mxu0
  %v355 = vadd.f32 %v241, %v354
  %v356 = vpop.f32.mrb[0].mxu0
  %357 = vmatprep.mubr.f32.mxu0 0.0
  %358 = vmatmul.mubr.f32.gmra.mrb[0].mxu0 %v214
  %v359 = vpop.f32.mrb[0].mxu0
  %v360 = vadd.f32 %v241, %v359
  %v361 = vpop.f32.mrb[0].mxu0
  %362 = vmatprep.mubr.f32.mxu0 0.0
  %363 = vmatmul.mubr.f32.gmra.mrb[0].mxu0 %v215
  %v364 = vpop.f32.mrb[0].mxu0
  %v365 = vadd.f32 %v241, %v364
  %v366 = vpop.f32.mrb[0].mxu0
  %367 = vmatprep.mubr.f32.mxu0 0.0
  %368 = vmatmul.mubr.f32.gmra.mrb[0].mxu0 %v216
  %v369 = vpop.f32.mrb[0].mxu0
  %v370 = vadd.f32 %v241, %v369
  %v371 = vpop.f32.mrb[0].mxu0
  %372 = vmatprep.mubr.f32.mxu0 0.0
  %373 = vmatmul.mubr.f32.gmra.mrb[0].mxu0 %v217
  %v374 = vpop.f32.mrb[0].mxu0
  %v375 = vadd.f32 %v241, %v374
  %v376 = vpop.f32.mrb[0].mxu0
  %377 = vmatprep.mubr.f32.mxu0 0.0
  %378 = vmatmul.mubr.f32.gmra.mrb[0].mxu0 %v218
  %v379 = vpop.f32.mrb[0].mxu0
  %v380 = vadd.f32 %v241, %v379
  %v381 = vpop.f32.mrb[0].mxu0
  %382 = vmatprep.mubr.f32.mxu0 0.0
  %383 = vmatmul.mubr.f32.gmra.mrb[0].mxu0 %v219
  %v384 = vpop.f32.mrb[0].mxu0
  %v385 = vadd.f32 %v241, %v384
  %v386 = vpop.f32.mrb[0].mxu0
  %387 = vdwg.mxu0
  %vm388 = vcmask 31744
  %389 = vst.msk [vmem:[%s5] sm:$0xff] %vm388, %v310
  %390 = vst.msk [vmem:[%s5 + $0x8] sm:$0xff] %vm388, %v315
  %391 = vst.msk [vmem:[%s5 + $0x10] sm:$0xff] %vm388, %v320
  %392 = vst.msk [vmem:[%s5 + $0x18] sm:$0xff] %vm388, %v325
  %393 = vst.msk [vmem:[%s5 + $0x20] sm:$0xff] %vm388, %v330
  %394 = vst.msk [vmem:[%s5 + $0x28] sm:$0xff] %vm388, %v335
  %395 = vst.msk [vmem:[%s5 + $0x30] sm:$0xff] %vm388, %v340
  %396 = vst.msk [vmem:[%s5 + $0x38] sm:$0xff] %vm388, %v345
  %397 = vst.msk [vmem:[%s5 + $0x40] sm:$0xff] %vm388, %v350
  %398 = vst.msk [vmem:[%s5 + $0x48] sm:$0xff] %vm388, %v355
  %399 = vst.msk [vmem:[%s5 + $0x50] sm:$0xff] %vm388, %v360
  %400 = vst.msk [vmem:[%s5 + $0x58] sm:$0xff] %vm388, %v365
  %401 = vst.msk [vmem:[%s5 + $0x60] sm:$0xff] %vm388, %v370
  %402 = vst.msk [vmem:[%s5 + $0x68] sm:$0xff] %vm388, %v375
  %403 = vst.msk [vmem:[%s5 + $0x70] sm:$0xff] %vm388, %v380
  %404 = vst.msk [vmem:[%s5 + $0x78] sm:$0xff] %vm388, %v385
  // Predicated region
  $region22: #{_lambda_.11} parent=0 // pred_check
    _
  $region23: #{_lambda_.11} parent=0 // pred_check_branch
    %406 = sbr.rel (0) target = $region25
  $region24: #{_lambda_.11} parent=0 // pred_region
    _
  $region25: #{_lambda_.11} parent=0 // pred_fallthru
    _
  // Predicated region
  $region26: #{_lambda_.11} parent=0 // pred_check
    _
  $region27: #{_lambda_.11} parent=0 // pred_check_branch
    %408 = sbr.rel (0) target = $region29
  $region28: #{_lambda_.11} parent=0 // pred_region
    _
  $region29: #{_lambda_.11} parent=0 // pred_fallthru
    _

</llo_original>
